<compile_context>
chip_gen: v6e
topology: v6e:2x2x1
jax: 0.10.0
libtpu: 0.0.40
codegen_flags: <defaults>
</compile_context>

<pallas_src>
import functools

import jax
import jax.numpy as jnp
from jax.experimental import pallas as pl
from jax.experimental.pallas import tpu as pltpu

BN_EPS = 1e-5
WIDTH = 128  # lane width; every feature dim here (<= 50) fits one vreg width


# ---------------- the Pallas kernel ------------------------------------------


def vae_kernel(x_ref, eps_ref, w_ref, bn_ref, out_ref, *,
               n_enc, n_dec, latent, width):
    B = x_ref.shape[0]
    lane = jax.lax.broadcasted_iota(jnp.int32, (B, width), 1)
    fused_bias_slot = n_enc + n_dec + 3  # last row-pair of bn_slab holds fc21|fc22 bias

    def linear(h, l):  # (B,W)@(W,W) on the MXU, no bias (cancelled by train-mode BN)
        return jnp.dot(h, w_ref[l], preferred_element_type=jnp.float32)

    def bn_train(h, l):  # training-mode BN, fused scale/shift form
        gb = bn_ref[l]                     # (2, W): gamma row, beta row
        gamma = gb[0:1, :]
        beta = gb[1:2, :]
        # one axis-0 (sublane) reduction gives both mean and E[x^2]
        stats = jnp.mean(jnp.concatenate([h, h * h], axis=1), axis=0, keepdims=True)
        mean = stats[:, :width]
        var = jnp.maximum(stats[:, width:] - mean * mean, 0.0)  # clamp vs cancellation
        scale = gamma * jax.lax.rsqrt(var + BN_EPS)
        shift = beta - mean * scale
        return h * scale + shift           # 2 VPU ops per element on the (B,W) tensor

    li = 0  # matmul slot index
    bi = 0  # bn slot index

    h = x_ref[...]
    for _ in range(n_enc):                                       # encoder blocks
        h = bn_train(linear(h, li), bi); li += 1; bi += 1

    f1 = jnp.maximum(bn_train(linear(h, li), bi), 0.0)           # fc1 -> bn1 -> relu
    li += 1; bi += 1

    # fused fc21|fc22 (+bias): lanes [0:L) = mu, [L:2L) = logvar
    fb = bn_ref[fused_bias_slot]
    y = linear(f1, li) + fb[0:1, :]
    li += 1
    out_ref[1] = y                                               # mu|logvar output slab

    # reparameterize with no cross-lane data movement: eps lives in lanes [L:2L),
    # so eps*exp(0.5*logvar) lands in [L:2L); the packed fc3 weight has W3
    # duplicated at rows [L:2L), making (mu | eps*std) @ W3_packed == z @ W3.
    t = eps_ref[...] * jnp.exp(0.5 * y)
    pseudo_z = jnp.where(lane < latent, y, 0.0) + t

    f3 = jnp.maximum(bn_train(linear(pseudo_z, li), bi), 0.0)    # fc3 -> bn3 -> relu
    li += 1; bi += 1
    f4 = jnp.maximum(bn_train(linear(f3, li), bi), 0.0)          # fc4 -> bn4 -> relu
    li += 1; bi += 1

    h = f4
    for _ in range(n_dec):                                       # decoder blocks
        h = bn_train(linear(h, li), bi); li += 1; bi += 1

    out_ref[0] = h                                               # reconstruction slab


# ---------------- natural-shape params (reference layout) --------------------


def make_params(key, D_in, hidden=(50, 12), latent=3, n_enc=6, n_dec=6):
    """PyTorch-layout params (weights stored as (in, out); biases / gamma / beta 1-D)."""
    h0, h1 = hidden
    enc_dims = [(D_in, h0), (h0, h1)] + [(h1, h1)] * (n_enc - 2)
    dec_dims = [(h1, h1)] * (n_dec - 2) + [(h1, h0), (h0, D_in)]
    keys = iter(jax.random.split(key, 256))

    def lin(fi, fo):
        w = jax.random.normal(next(keys), (fi, fo), jnp.float32) * jnp.sqrt(2.0 / fi)
        b = 0.1 * jax.random.normal(next(keys), (fo,), jnp.float32)
        return w, b

    def bn(c):
        g = 1.0 + 0.1 * jax.random.normal(next(keys), (c,), jnp.float32)
        be = 0.1 * jax.random.normal(next(keys), (c,), jnp.float32)
        return g, be

    p = {}
    p["enc"] = [(lin(fi, fo), bn(fo)) for fi, fo in enc_dims]
    p["fc1"], p["bn1"] = lin(h1, latent), bn(latent)
    p["fc21"] = lin(latent, latent)
    p["fc22"] = lin(latent, latent)
    p["fc3"], p["bn3"] = lin(latent, latent), bn(latent)
    p["fc4"], p["bn4"] = lin(latent, h1), bn(h1)
    p["dec"] = [(lin(fi, fo), bn(fo)) for fi, fo in dec_dims]
    return p


# ---------------- packing into the 2 kernel slabs -----------------------------


def pack_params(p, *, latent, n_enc, n_dec, width=WIDTH):
    n_mm = n_enc + n_dec + 4          # enc + fc1 + fused(fc21|fc22) + fc3 + fc4 + dec
    n_bn = n_enc + n_dec + 3          # enc BNs + bn1 + bn3 + bn4 + dec BNs
    assert 2 * latent <= width
    w_slab = jnp.zeros((n_mm, width, width), jnp.float32)
    bn_slab = jnp.zeros((n_bn + 1, 2, width), jnp.float32)  # gamma padded with ZEROS

    def put_w(slab, idx, w):
        fi, fo = w.shape
        assert fi <= width and fo <= width
        return slab.at[idx, :fi, :fo].set(w)

    def put_bn(slab, idx, g, b):
        c = g.shape[0]
        return slab.at[idx, 0, :c].set(g).at[idx, 1, :c].set(b)

    li = 0
    bi = 0
    for (w, _b), (g, be) in p["enc"]:                       # Linear bias dropped (BN cancels)
        w_slab = put_w(w_slab, li, w)
        bn_slab = put_bn(bn_slab, bi, g, be)
        li += 1; bi += 1
    w_slab = put_w(w_slab, li, p["fc1"][0])                 # fc1 (bias dropped)
    bn_slab = put_bn(bn_slab, bi, *p["bn1"])
    li += 1; bi += 1

    # fused fc21|fc22 weight + bias row (no BN follows -> keep bias)
    w21, b21 = p["fc21"]
    w22, b22 = p["fc22"]
    w_slab = (w_slab.at[li, :latent, :latent].set(w21)
                   .at[li, :latent, latent:2 * latent].set(w22))
    bn_slab = (bn_slab.at[n_bn, 0, :latent].set(b21)
                      .at[n_bn, 0, latent:2 * latent].set(b22))
    li += 1

    # fc3: W3 at rows [0:L) (consumes mu) and duplicated at rows [L:2L) (consumes eps*std)
    w3 = p["fc3"][0]
    w_slab = (w_slab.at[li, :latent, :latent].set(w3)
                   .at[li, latent:2 * latent, :latent].set(w3))
    bn_slab = put_bn(bn_slab, bi, *p["bn3"])
    li += 1; bi += 1

    w_slab = put_w(w_slab, li, p["fc4"][0])                 # fc4 (bias dropped)
    bn_slab = put_bn(bn_slab, bi, *p["bn4"])
    li += 1; bi += 1

    for (w, _b), (g, be) in p["dec"]:
        w_slab = put_w(w_slab, li, w)
        bn_slab = put_bn(bn_slab, bi, g, be)
        li += 1; bi += 1

    assert li == n_mm and bi == n_bn
    return w_slab, bn_slab


# ---------------- wrapper ------------------------------------------------------


def vae_forward(x, eps, packed, *, D_in, latent, n_enc, n_dec, width=WIDTH):
    w_slab, bn_slab = packed
    B = x.shape[0]
    x_pad = jnp.zeros((B, width), jnp.float32).at[:, :D_in].set(x)
    # eps placed in lanes [L:2L) to line up with logvar in the fused fc21|fc22 output
    eps_pad = jnp.zeros((B, width), jnp.float32).at[:, latent:2 * latent].set(eps)

    vmem = pl.BlockSpec(memory_space=pltpu.MemorySpace.VMEM)  # whole arrays resident in VMEM
    kernel = functools.partial(vae_kernel, n_enc=n_enc, n_dec=n_dec,
                               latent=latent, width=width)
    out = pl.pallas_call(
        kernel,
        out_shape=jax.ShapeDtypeStruct((2, B, width), jnp.float32),  # lane-dense output slab
        in_specs=[vmem, vmem, vmem, vmem],
        out_specs=vmem,
    )(x_pad, eps_pad, w_slab, bn_slab)

    recon = out[0, :, :D_in]
    mu = out[1, :, :latent]
    logvar = out[1, :, latent:2 * latent]
    return recon, mu, logvar


# ---------------- pure-JAX reference (full math: biases, two-pass variance) ---


def vae_reference(x, eps, p):
    def lin(h, wb):
        w, b = wb
        return h @ w + b

    def bn(h, gb):
        g, b = gb
        m = h.mean(0, keepdims=True)
        v = jnp.square(h - m).mean(0, keepdims=True)
        return (h - m) / jnp.sqrt(v + BN_EPS) * g + b

    h = x
    for wb, gb in p["enc"]:
        h = bn(lin(h, wb), gb)
    f1 = jax.nn.relu(bn(lin(h, p["fc1"]), p["bn1"]))
    mu = lin(f1, p["fc21"])
    logvar = lin(f1, p["fc22"])
    z = eps * jnp.exp(0.5 * logvar) + mu
    f3 = jax.nn.relu(bn(lin(z, p["fc3"]), p["bn3"]))
    f4 = jax.nn.relu(bn(lin(f3, p["fc4"]), p["bn4"]))
    h = f4
    for wb, gb in p["dec"]:
        h = bn(lin(h, wb), gb)
    return h, mu, logvar


if __name__ == "__main__":
    D_in, hidden, latent = 20, (50, 12), 3
    n_enc = n_dec = 6
    batch = 16

    key = jax.random.PRNGKey(0)
    kx, keps, kp = jax.random.split(key, 3)
    x = jax.random.normal(kx, (batch, D_in), jnp.float32)
    eps = jax.random.normal(keps, (batch, latent), jnp.float32)

    params = make_params(kp, D_in, hidden, latent, n_enc, n_dec)
    packed = pack_params(params, latent=latent, n_enc=n_enc, n_dec=n_dec)

    recon, mu, logvar = jax.block_until_ready(
        vae_forward(x, eps, packed, D_in=D_in, latent=latent,
                    n_enc=n_enc, n_dec=n_dec))

    r_recon, r_mu, r_logvar = vae_reference(x, eps, params)
    assert jnp.allclose(recon, r_recon, atol=2e-4, rtol=2e-4), "recon mismatch"
    assert jnp.allclose(mu, r_mu, atol=2e-4, rtol=2e-4), "mu mismatch"
    assert jnp.allclose(logvar, r_logvar, atol=2e-4, rtol=2e-4), "logvar mismatch"

    print("KERNEL_OK")
</pallas_src>

<mosaic_0001>
module attributes {stable_mosaic.version = 11 : i64} {
  func.func @vae_kernel(%arg0: memref<16x128xf32, #tpu.memory_space<vmem>>, %arg1: memref<16x128xf32, #tpu.memory_space<vmem>>, %arg2: memref<16x128x128xf32, #tpu.memory_space<vmem>>, %arg3: memref<16x2x128xf32, #tpu.memory_space<vmem>>, %arg4: memref<2x16x128xf32, #tpu.memory_space<vmem>>) attributes {dimension_semantics = [], scalar_prefetch = 0 : i64, scratch_operands = 0 : i64, tpu.core_type = #tpu.core_type<tc>} {
    %0 = tpu.iota {dimensions = array<i32: 1>} : vector<16x128xi32>
    %c0 = arith.constant 0 : index
    %c0_0 = arith.constant 0 : index
    %1 = vector.load %arg0[%c0, %c0_0] : memref<16x128xf32, #tpu.memory_space<vmem>>, vector<16x128xf32>
    %c0_1 = arith.constant 0 : index
    %c0_2 = arith.constant 0 : index
    %c0_3 = arith.constant 0 : index
    %2 = vector.load %arg2[%c0_1, %c0_2, %c0_3] : memref<16x128x128xf32, #tpu.memory_space<vmem>>, vector<1x128x128xf32>
    %3 = vector.shape_cast %2 : vector<1x128x128xf32> to vector<128x128xf32>
    %cst = arith.constant dense<0.000000e+00> : vector<16x128xf32>
    %4 = tpu.matmul %1, %3, %cst {dimension_numbers = #tpu.dot_dimension_numbers<[1], [0], [0], [1], [0, 0, 1, 1], [], []>} : vector<16x128xf32>, vector<128x128xf32>, vector<16x128xf32> -> vector<16x128xf32>
    %c0_4 = arith.constant 0 : index
    %c0_5 = arith.constant 0 : index
    %c0_6 = arith.constant 0 : index
    %5 = vector.load %arg3[%c0_4, %c0_5, %c0_6] : memref<16x2x128xf32, #tpu.memory_space<vmem>>, vector<1x2x128xf32>
    %6 = vector.shape_cast %5 : vector<1x2x128xf32> to vector<2x128xf32>
    %7 = vector.extract_strided_slice %6 {offsets = [0, 0], sizes = [1, 128], strides = [1, 1]} : vector<2x128xf32> to vector<1x128xf32>
    %8 = vector.extract_strided_slice %6 {offsets = [1, 0], sizes = [1, 128], strides = [1, 1]} : vector<2x128xf32> to vector<1x128xf32>
    %9 = arith.mulf %4, %4 : vector<16x128xf32>
    %10 = tpu.concatenate %4, %9 in 1 : vector<16x128xf32>, vector<16x128xf32> -> vector<16x256xf32>
    %cst_7 = arith.constant dense<0.000000e+00> : vector<256xf32>
    %11 = vector.multi_reduction <add>, %10, %cst_7 [0] : vector<16x256xf32> to vector<256xf32>
    %12 = vector.shape_cast %11 : vector<256xf32> to vector<1x256xf32>
    %cst_8 = arith.constant 1.600000e+01 : f32
    %13 = vector.broadcast %cst_8 : f32 to vector<1x256xf32>
    %14 = arith.divf %12, %13 : vector<1x256xf32>
    %15 = vector.extract_strided_slice %14 {offsets = [0, 0], sizes = [1, 128], strides = [1, 1]} : vector<1x256xf32> to vector<1x128xf32>
    %16 = vector.extract_strided_slice %14 {offsets = [0, 128], sizes = [1, 128], strides = [1, 1]} : vector<1x256xf32> to vector<1x128xf32>
    %17 = arith.mulf %15, %15 : vector<1x128xf32>
    %18 = arith.subf %16, %17 : vector<1x128xf32>
    %cst_9 = arith.constant 0.000000e+00 : f32
    %19 = vector.broadcast %cst_9 : f32 to vector<1x128xf32>
    %20 = arith.maximumf %18, %19 : vector<1x128xf32>
    %cst_10 = arith.constant 9.99999974E-6 : f32
    %21 = vector.broadcast %cst_10 : f32 to vector<1x128xf32>
    %22 = arith.addf %20, %21 : vector<1x128xf32>
    %23 = math.rsqrt %22 : vector<1x128xf32>
    %24 = arith.mulf %7, %23 : vector<1x128xf32>
    %25 = arith.mulf %15, %24 : vector<1x128xf32>
    %26 = arith.subf %8, %25 : vector<1x128xf32>
    %27 = vector.broadcast %24 : vector<1x128xf32> to vector<16x128xf32>
    %28 = arith.mulf %4, %27 : vector<16x128xf32>
    %29 = vector.broadcast %26 : vector<1x128xf32> to vector<16x128xf32>
    %30 = arith.addf %28, %29 : vector<16x128xf32>
    %c1 = arith.constant 1 : index
    %c0_11 = arith.constant 0 : index
    %c0_12 = arith.constant 0 : index
    %31 = vector.load %arg2[%c1, %c0_11, %c0_12] : memref<16x128x128xf32, #tpu.memory_space<vmem>>, vector<1x128x128xf32>
    %32 = vector.shape_cast %31 : vector<1x128x128xf32> to vector<128x128xf32>
    %cst_13 = arith.constant dense<0.000000e+00> : vector<16x128xf32>
    %33 = tpu.matmul %30, %32, %cst_13 {dimension_numbers = #tpu.dot_dimension_numbers<[1], [0], [0], [1], [0, 0, 1, 1], [], []>} : vector<16x128xf32>, vector<128x128xf32>, vector<16x128xf32> -> vector<16x128xf32>
    %c1_14 = arith.constant 1 : index
    %c0_15 = arith.constant 0 : index
    %c0_16 = arith.constant 0 : index
    %34 = vector.load %arg3[%c1_14, %c0_15, %c0_16] : memref<16x2x128xf32, #tpu.memory_space<vmem>>, vector<1x2x128xf32>
    %35 = vector.shape_cast %34 : vector<1x2x128xf32> to vector<2x128xf32>
    %36 = vector.extract_strided_slice %35 {offsets = [0, 0], sizes = [1, 128], strides = [1, 1]} : vector<2x128xf32> to vector<1x128xf32>
    %37 = vector.extract_strided_slice %35 {offsets = [1, 0], sizes = [1, 128], strides = [1, 1]} : vector<2x128xf32> to vector<1x128xf32>
    %38 = arith.mulf %33, %33 : vector<16x128xf32>
    %39 = tpu.concatenate %33, %38 in 1 : vector<16x128xf32>, vector<16x128xf32> -> vector<16x256xf32>
    %cst_17 = arith.constant dense<0.000000e+00> : vector<256xf32>
    %40 = vector.multi_reduction <add>, %39, %cst_17 [0] : vector<16x256xf32> to vector<256xf32>
    %41 = vector.shape_cast %40 : vector<256xf32> to vector<1x256xf32>
    %cst_18 = arith.constant 1.600000e+01 : f32
    %42 = vector.broadcast %cst_18 : f32 to vector<1x256xf32>
    %43 = arith.divf %41, %42 : vector<1x256xf32>
    %44 = vector.extract_strided_slice %43 {offsets = [0, 0], sizes = [1, 128], strides = [1, 1]} : vector<1x256xf32> to vector<1x128xf32>
    %45 = vector.extract_strided_slice %43 {offsets = [0, 128], sizes = [1, 128], strides = [1, 1]} : vector<1x256xf32> to vector<1x128xf32>
    %46 = arith.mulf %44, %44 : vector<1x128xf32>
    %47 = arith.subf %45, %46 : vector<1x128xf32>
    %cst_19 = arith.constant 0.000000e+00 : f32
    %48 = vector.broadcast %cst_19 : f32 to vector<1x128xf32>
    %49 = arith.maximumf %47, %48 : vector<1x128xf32>
    %cst_20 = arith.constant 9.99999974E-6 : f32
    %50 = vector.broadcast %cst_20 : f32 to vector<1x128xf32>
    %51 = arith.addf %49, %50 : vector<1x128xf32>
    %52 = math.rsqrt %51 : vector<1x128xf32>
    %53 = arith.mulf %36, %52 : vector<1x128xf32>
    %54 = arith.mulf %44, %53 : vector<1x128xf32>
    %55 = arith.subf %37, %54 : vector<1x128xf32>
    %56 = vector.broadcast %53 : vector<1x128xf32> to vector<16x128xf32>
    %57 = arith.mulf %33, %56 : vector<16x128xf32>
    %58 = vector.broadcast %55 : vector<1x128xf32> to vector<16x128xf32>
    %59 = arith.addf %57, %58 : vector<16x128xf32>
    %c2 = arith.constant 2 : index
    %c0_21 = arith.constant 0 : index
    %c0_22 = arith.constant 0 : index
    %60 = vector.load %arg2[%c2, %c0_21, %c0_22] : memref<16x128x128xf32, #tpu.memory_space<vmem>>, vector<1x128x128xf32>
    %61 = vector.shape_cast %60 : vector<1x128x128xf32> to vector<128x128xf32>
    %cst_23 = arith.constant dense<0.000000e+00> : vector<16x128xf32>
    %62 = tpu.matmul %59, %61, %cst_23 {dimension_numbers = #tpu.dot_dimension_numbers<[1], [0], [0], [1], [0, 0, 1, 1], [], []>} : vector<16x128xf32>, vector<128x128xf32>, vector<16x128xf32> -> vector<16x128xf32>
    %c2_24 = arith.constant 2 : index
    %c0_25 = arith.constant 0 : index
    %c0_26 = arith.constant 0 : index
    %63 = vector.load %arg3[%c2_24, %c0_25, %c0_26] : memref<16x2x128xf32, #tpu.memory_space<vmem>>, vector<1x2x128xf32>
    %64 = vector.shape_cast %63 : vector<1x2x128xf32> to vector<2x128xf32>
    %65 = vector.extract_strided_slice %64 {offsets = [0, 0], sizes = [1, 128], strides = [1, 1]} : vector<2x128xf32> to vector<1x128xf32>
    %66 = vector.extract_strided_slice %64 {offsets = [1, 0], sizes = [1, 128], strides = [1, 1]} : vector<2x128xf32> to vector<1x128xf32>
    %67 = arith.mulf %62, %62 : vector<16x128xf32>
    %68 = tpu.concatenate %62, %67 in 1 : vector<16x128xf32>, vector<16x128xf32> -> vector<16x256xf32>
    %cst_27 = arith.constant dense<0.000000e+00> : vector<256xf32>
    %69 = vector.multi_reduction <add>, %68, %cst_27 [0] : vector<16x256xf32> to vector<256xf32>
    %70 = vector.shape_cast %69 : vector<256xf32> to vector<1x256xf32>
    %cst_28 = arith.constant 1.600000e+01 : f32
    %71 = vector.broadcast %cst_28 : f32 to vector<1x256xf32>
    %72 = arith.divf %70, %71 : vector<1x256xf32>
    %73 = vector.extract_strided_slice %72 {offsets = [0, 0], sizes = [1, 128], strides = [1, 1]} : vector<1x256xf32> to vector<1x128xf32>
    %74 = vector.extract_strided_slice %72 {offsets = [0, 128], sizes = [1, 128], strides = [1, 1]} : vector<1x256xf32> to vector<1x128xf32>
    %75 = arith.mulf %73, %73 : vector<1x128xf32>
    %76 = arith.subf %74, %75 : vector<1x128xf32>
    %cst_29 = arith.constant 0.000000e+00 : f32
    %77 = vector.broadcast %cst_29 : f32 to vector<1x128xf32>
    %78 = arith.maximumf %76, %77 : vector<1x128xf32>
    %cst_30 = arith.constant 9.99999974E-6 : f32
    %79 = vector.broadcast %cst_30 : f32 to vector<1x128xf32>
    %80 = arith.addf %78, %79 : vector<1x128xf32>
    %81 = math.rsqrt %80 : vector<1x128xf32>
    %82 = arith.mulf %65, %81 : vector<1x128xf32>
    %83 = arith.mulf %73, %82 : vector<1x128xf32>
    %84 = arith.subf %66, %83 : vector<1x128xf32>
    %85 = vector.broadcast %82 : vector<1x128xf32> to vector<16x128xf32>
    %86 = arith.mulf %62, %85 : vector<16x128xf32>
    %87 = vector.broadcast %84 : vector<1x128xf32> to vector<16x128xf32>
    %88 = arith.addf %86, %87 : vector<16x128xf32>
    %c3 = arith.constant 3 : index
    %c0_31 = arith.constant 0 : index
    %c0_32 = arith.constant 0 : index
    %89 = vector.load %arg2[%c3, %c0_31, %c0_32] : memref<16x128x128xf32, #tpu.memory_space<vmem>>, vector<1x128x128xf32>
    %90 = vector.shape_cast %89 : vector<1x128x128xf32> to vector<128x128xf32>
    %cst_33 = arith.constant dense<0.000000e+00> : vector<16x128xf32>
    %91 = tpu.matmul %88, %90, %cst_33 {dimension_numbers = #tpu.dot_dimension_numbers<[1], [0], [0], [1], [0, 0, 1, 1], [], []>} : vector<16x128xf32>, vector<128x128xf32>, vector<16x128xf32> -> vector<16x128xf32>
    %c3_34 = arith.constant 3 : index
    %c0_35 = arith.constant 0 : index
    %c0_36 = arith.constant 0 : index
    %92 = vector.load %arg3[%c3_34, %c0_35, %c0_36] : memref<16x2x128xf32, #tpu.memory_space<vmem>>, vector<1x2x128xf32>
    %93 = vector.shape_cast %92 : vector<1x2x128xf32> to vector<2x128xf32>
    %94 = vector.extract_strided_slice %93 {offsets = [0, 0], sizes = [1, 128], strides = [1, 1]} : vector<2x128xf32> to vector<1x128xf32>
    %95 = vector.extract_strided_slice %93 {offsets = [1, 0], sizes = [1, 128], strides = [1, 1]} : vector<2x128xf32> to vector<1x128xf32>
    %96 = arith.mulf %91, %91 : vector<16x128xf32>
    %97 = tpu.concatenate %91, %96 in 1 : vector<16x128xf32>, vector<16x128xf32> -> vector<16x256xf32>
    %cst_37 = arith.constant dense<0.000000e+00> : vector<256xf32>
    %98 = vector.multi_reduction <add>, %97, %cst_37 [0] : vector<16x256xf32> to vector<256xf32>
    %99 = vector.shape_cast %98 : vector<256xf32> to vector<1x256xf32>
    %cst_38 = arith.constant 1.600000e+01 : f32
    %100 = vector.broadcast %cst_38 : f32 to vector<1x256xf32>
    %101 = arith.divf %99, %100 : vector<1x256xf32>
    %102 = vector.extract_strided_slice %101 {offsets = [0, 0], sizes = [1, 128], strides = [1, 1]} : vector<1x256xf32> to vector<1x128xf32>
    %103 = vector.extract_strided_slice %101 {offsets = [0, 128], sizes = [1, 128], strides = [1, 1]} : vector<1x256xf32> to vector<1x128xf32>
    %104 = arith.mulf %102, %102 : vector<1x128xf32>
    %105 = arith.subf %103, %104 : vector<1x128xf32>
    %cst_39 = arith.constant 0.000000e+00 : f32
    %106 = vector.broadcast %cst_39 : f32 to vector<1x128xf32>
    %107 = arith.maximumf %105, %106 : vector<1x128xf32>
    %cst_40 = arith.constant 9.99999974E-6 : f32
    %108 = vector.broadcast %cst_40 : f32 to vector<1x128xf32>
    %109 = arith.addf %107, %108 : vector<1x128xf32>
    %110 = math.rsqrt %109 : vector<1x128xf32>
    %111 = arith.mulf %94, %110 : vector<1x128xf32>
    %112 = arith.mulf %102, %111 : vector<1x128xf32>
    %113 = arith.subf %95, %112 : vector<1x128xf32>
    %114 = vector.broadcast %111 : vector<1x128xf32> to vector<16x128xf32>
    %115 = arith.mulf %91, %114 : vector<16x128xf32>
    %116 = vector.broadcast %113 : vector<1x128xf32> to vector<16x128xf32>
    %117 = arith.addf %115, %116 : vector<16x128xf32>
    %c4 = arith.constant 4 : index
    %c0_41 = arith.constant 0 : index
    %c0_42 = arith.constant 0 : index
    %118 = vector.load %arg2[%c4, %c0_41, %c0_42] : memref<16x128x128xf32, #tpu.memory_space<vmem>>, vector<1x128x128xf32>
    %119 = vector.shape_cast %118 : vector<1x128x128xf32> to vector<128x128xf32>
    %cst_43 = arith.constant dense<0.000000e+00> : vector<16x128xf32>
    %120 = tpu.matmul %117, %119, %cst_43 {dimension_numbers = #tpu.dot_dimension_numbers<[1], [0], [0], [1], [0, 0, 1, 1], [], []>} : vector<16x128xf32>, vector<128x128xf32>, vector<16x128xf32> -> vector<16x128xf32>
    %c4_44 = arith.constant 4 : index
    %c0_45 = arith.constant 0 : index
    %c0_46 = arith.constant 0 : index
    %121 = vector.load %arg3[%c4_44, %c0_45, %c0_46] : memref<16x2x128xf32, #tpu.memory_space<vmem>>, vector<1x2x128xf32>
    %122 = vector.shape_cast %121 : vector<1x2x128xf32> to vector<2x128xf32>
    %123 = vector.extract_strided_slice %122 {offsets = [0, 0], sizes = [1, 128], strides = [1, 1]} : vector<2x128xf32> to vector<1x128xf32>
    %124 = vector.extract_strided_slice %122 {offsets = [1, 0], sizes = [1, 128], strides = [1, 1]} : vector<2x128xf32> to vector<1x128xf32>
    %125 = arith.mulf %120, %120 : vector<16x128xf32>
    %126 = tpu.concatenate %120, %125 in 1 : vector<16x128xf32>, vector<16x128xf32> -> vector<16x256xf32>
    %cst_47 = arith.constant dense<0.000000e+00> : vector<256xf32>
    %127 = vector.multi_reduction <add>, %126, %cst_47 [0] : vector<16x256xf32> to vector<256xf32>
    %128 = vector.shape_cast %127 : vector<256xf32> to vector<1x256xf32>
    %cst_48 = arith.constant 1.600000e+01 : f32
    %129 = vector.broadcast %cst_48 : f32 to vector<1x256xf32>
    %130 = arith.divf %128, %129 : vector<1x256xf32>
    %131 = vector.extract_strided_slice %130 {offsets = [0, 0], sizes = [1, 128], strides = [1, 1]} : vector<1x256xf32> to vector<1x128xf32>
    %132 = vector.extract_strided_slice %130 {offsets = [0, 128], sizes = [1, 128], strides = [1, 1]} : vector<1x256xf32> to vector<1x128xf32>
    %133 = arith.mulf %131, %131 : vector<1x128xf32>
    %134 = arith.subf %132, %133 : vector<1x128xf32>
    %cst_49 = arith.constant 0.000000e+00 : f32
    %135 = vector.broadcast %cst_49 : f32 to vector<1x128xf32>
    %136 = arith.maximumf %134, %135 : vector<1x128xf32>
    %cst_50 = arith.constant 9.99999974E-6 : f32
    %137 = vector.broadcast %cst_50 : f32 to vector<1x128xf32>
    %138 = arith.addf %136, %137 : vector<1x128xf32>
    %139 = math.rsqrt %138 : vector<1x128xf32>
    %140 = arith.mulf %123, %139 : vector<1x128xf32>
    %141 = arith.mulf %131, %140 : vector<1x128xf32>
    %142 = arith.subf %124, %141 : vector<1x128xf32>
    %143 = vector.broadcast %140 : vector<1x128xf32> to vector<16x128xf32>
    %144 = arith.mulf %120, %143 : vector<16x128xf32>
    %145 = vector.broadcast %142 : vector<1x128xf32> to vector<16x128xf32>
    %146 = arith.addf %144, %145 : vector<16x128xf32>
    %c5 = arith.constant 5 : index
    %c0_51 = arith.constant 0 : index
    %c0_52 = arith.constant 0 : index
    %147 = vector.load %arg2[%c5, %c0_51, %c0_52] : memref<16x128x128xf32, #tpu.memory_space<vmem>>, vector<1x128x128xf32>
    %148 = vector.shape_cast %147 : vector<1x128x128xf32> to vector<128x128xf32>
    %cst_53 = arith.constant dense<0.000000e+00> : vector<16x128xf32>
    %149 = tpu.matmul %146, %148, %cst_53 {dimension_numbers = #tpu.dot_dimension_numbers<[1], [0], [0], [1], [0, 0, 1, 1], [], []>} : vector<16x128xf32>, vector<128x128xf32>, vector<16x128xf32> -> vector<16x128xf32>
    %c5_54 = arith.constant 5 : index
    %c0_55 = arith.constant 0 : index
    %c0_56 = arith.constant 0 : index
    %150 = vector.load %arg3[%c5_54, %c0_55, %c0_56] : memref<16x2x128xf32, #tpu.memory_space<vmem>>, vector<1x2x128xf32>
    %151 = vector.shape_cast %150 : vector<1x2x128xf32> to vector<2x128xf32>
    %152 = vector.extract_strided_slice %151 {offsets = [0, 0], sizes = [1, 128], strides = [1, 1]} : vector<2x128xf32> to vector<1x128xf32>
    %153 = vector.extract_strided_slice %151 {offsets = [1, 0], sizes = [1, 128], strides = [1, 1]} : vector<2x128xf32> to vector<1x128xf32>
    %154 = arith.mulf %149, %149 : vector<16x128xf32>
    %155 = tpu.concatenate %149, %154 in 1 : vector<16x128xf32>, vector<16x128xf32> -> vector<16x256xf32>
    %cst_57 = arith.constant dense<0.000000e+00> : vector<256xf32>
    %156 = vector.multi_reduction <add>, %155, %cst_57 [0] : vector<16x256xf32> to vector<256xf32>
    %157 = vector.shape_cast %156 : vector<256xf32> to vector<1x256xf32>
    %cst_58 = arith.constant 1.600000e+01 : f32
    %158 = vector.broadcast %cst_58 : f32 to vector<1x256xf32>
    %159 = arith.divf %157, %158 : vector<1x256xf32>
    %160 = vector.extract_strided_slice %159 {offsets = [0, 0], sizes = [1, 128], strides = [1, 1]} : vector<1x256xf32> to vector<1x128xf32>
    %161 = vector.extract_strided_slice %159 {offsets = [0, 128], sizes = [1, 128], strides = [1, 1]} : vector<1x256xf32> to vector<1x128xf32>
    %162 = arith.mulf %160, %160 : vector<1x128xf32>
    %163 = arith.subf %161, %162 : vector<1x128xf32>
    %cst_59 = arith.constant 0.000000e+00 : f32
    %164 = vector.broadcast %cst_59 : f32 to vector<1x128xf32>
    %165 = arith.maximumf %163, %164 : vector<1x128xf32>
    %cst_60 = arith.constant 9.99999974E-6 : f32
    %166 = vector.broadcast %cst_60 : f32 to vector<1x128xf32>
    %167 = arith.addf %165, %166 : vector<1x128xf32>
    %168 = math.rsqrt %167 : vector<1x128xf32>
    %169 = arith.mulf %152, %168 : vector<1x128xf32>
    %170 = arith.mulf %160, %169 : vector<1x128xf32>
    %171 = arith.subf %153, %170 : vector<1x128xf32>
    %172 = vector.broadcast %169 : vector<1x128xf32> to vector<16x128xf32>
    %173 = arith.mulf %149, %172 : vector<16x128xf32>
    %174 = vector.broadcast %171 : vector<1x128xf32> to vector<16x128xf32>
    %175 = arith.addf %173, %174 : vector<16x128xf32>
    %c6 = arith.constant 6 : index
    %c0_61 = arith.constant 0 : index
    %c0_62 = arith.constant 0 : index
    %176 = vector.load %arg2[%c6, %c0_61, %c0_62] : memref<16x128x128xf32, #tpu.memory_space<vmem>>, vector<1x128x128xf32>
    %177 = vector.shape_cast %176 : vector<1x128x128xf32> to vector<128x128xf32>
    %cst_63 = arith.constant dense<0.000000e+00> : vector<16x128xf32>
    %178 = tpu.matmul %175, %177, %cst_63 {dimension_numbers = #tpu.dot_dimension_numbers<[1], [0], [0], [1], [0, 0, 1, 1], [], []>} : vector<16x128xf32>, vector<128x128xf32>, vector<16x128xf32> -> vector<16x128xf32>
    %c6_64 = arith.constant 6 : index
    %c0_65 = arith.constant 0 : index
    %c0_66 = arith.constant 0 : index
    %179 = vector.load %arg3[%c6_64, %c0_65, %c0_66] : memref<16x2x128xf32, #tpu.memory_space<vmem>>, vector<1x2x128xf32>
    %180 = vector.shape_cast %179 : vector<1x2x128xf32> to vector<2x128xf32>
    %181 = vector.extract_strided_slice %180 {offsets = [0, 0], sizes = [1, 128], strides = [1, 1]} : vector<2x128xf32> to vector<1x128xf32>
    %182 = vector.extract_strided_slice %180 {offsets = [1, 0], sizes = [1, 128], strides = [1, 1]} : vector<2x128xf32> to vector<1x128xf32>
    %183 = arith.mulf %178, %178 : vector<16x128xf32>
    %184 = tpu.concatenate %178, %183 in 1 : vector<16x128xf32>, vector<16x128xf32> -> vector<16x256xf32>
    %cst_67 = arith.constant dense<0.000000e+00> : vector<256xf32>
    %185 = vector.multi_reduction <add>, %184, %cst_67 [0] : vector<16x256xf32> to vector<256xf32>
    %186 = vector.shape_cast %185 : vector<256xf32> to vector<1x256xf32>
    %cst_68 = arith.constant 1.600000e+01 : f32
    %187 = vector.broadcast %cst_68 : f32 to vector<1x256xf32>
    %188 = arith.divf %186, %187 : vector<1x256xf32>
    %189 = vector.extract_strided_slice %188 {offsets = [0, 0], sizes = [1, 128], strides = [1, 1]} : vector<1x256xf32> to vector<1x128xf32>
    %190 = vector.extract_strided_slice %188 {offsets = [0, 128], sizes = [1, 128], strides = [1, 1]} : vector<1x256xf32> to vector<1x128xf32>
    %191 = arith.mulf %189, %189 : vector<1x128xf32>
    %192 = arith.subf %190, %191 : vector<1x128xf32>
    %cst_69 = arith.constant 0.000000e+00 : f32
    %193 = vector.broadcast %cst_69 : f32 to vector<1x128xf32>
    %194 = arith.maximumf %192, %193 : vector<1x128xf32>
    %cst_70 = arith.constant 9.99999974E-6 : f32
    %195 = vector.broadcast %cst_70 : f32 to vector<1x128xf32>
    %196 = arith.addf %194, %195 : vector<1x128xf32>
    %197 = math.rsqrt %196 : vector<1x128xf32>
    %198 = arith.mulf %181, %197 : vector<1x128xf32>
    %199 = arith.mulf %189, %198 : vector<1x128xf32>
    %200 = arith.subf %182, %199 : vector<1x128xf32>
    %201 = vector.broadcast %198 : vector<1x128xf32> to vector<16x128xf32>
    %202 = arith.mulf %178, %201 : vector<16x128xf32>
    %203 = vector.broadcast %200 : vector<1x128xf32> to vector<16x128xf32>
    %204 = arith.addf %202, %203 : vector<16x128xf32>
    %cst_71 = arith.constant 0.000000e+00 : f32
    %205 = vector.broadcast %cst_71 : f32 to vector<16x128xf32>
    %206 = arith.maximumf %204, %205 : vector<16x128xf32>
    %c15 = arith.constant 15 : index
    %c0_72 = arith.constant 0 : index
    %c0_73 = arith.constant 0 : index
    %207 = vector.load %arg3[%c15, %c0_72, %c0_73] : memref<16x2x128xf32, #tpu.memory_space<vmem>>, vector<1x2x128xf32>
    %208 = vector.shape_cast %207 : vector<1x2x128xf32> to vector<2x128xf32>
    %c7 = arith.constant 7 : index
    %c0_74 = arith.constant 0 : index
    %c0_75 = arith.constant 0 : index
    %209 = vector.load %arg2[%c7, %c0_74, %c0_75] : memref<16x128x128xf32, #tpu.memory_space<vmem>>, vector<1x128x128xf32>
    %210 = vector.shape_cast %209 : vector<1x128x128xf32> to vector<128x128xf32>
    %cst_76 = arith.constant dense<0.000000e+00> : vector<16x128xf32>
    %211 = tpu.matmul %206, %210, %cst_76 {dimension_numbers = #tpu.dot_dimension_numbers<[1], [0], [0], [1], [0, 0, 1, 1], [], []>} : vector<16x128xf32>, vector<128x128xf32>, vector<16x128xf32> -> vector<16x128xf32>
    %212 = vector.extract_strided_slice %208 {offsets = [0, 0], sizes = [1, 128], strides = [1, 1]} : vector<2x128xf32> to vector<1x128xf32>
    %213 = vector.broadcast %212 : vector<1x128xf32> to vector<16x128xf32>
    %214 = arith.addf %211, %213 : vector<16x128xf32>
    %c1_77 = arith.constant 1 : index
    %c0_78 = arith.constant 0 : index
    %c0_79 = arith.constant 0 : index
    %215 = vector.load %arg4[%c1_77, %c0_78, %c0_79] : memref<2x16x128xf32, #tpu.memory_space<vmem>>, vector<1x16x128xf32>
    %216 = vector.shape_cast %215 : vector<1x16x128xf32> to vector<16x128xf32>
    %217 = vector.shape_cast %214 : vector<16x128xf32> to vector<1x16x128xf32>
    tpu.vector_store %arg4[%c1_77, %c0_78, %c0_79], %217 {strides = array<i32>} : memref<2x16x128xf32, #tpu.memory_space<vmem>>, vector<1x16x128xf32>,
    %c0_80 = arith.constant 0 : index
    %c0_81 = arith.constant 0 : index
    %218 = vector.load %arg1[%c0_80, %c0_81] : memref<16x128xf32, #tpu.memory_space<vmem>>, vector<16x128xf32>
    %cst_82 = arith.constant 5.000000e-01 : f32
    %219 = vector.broadcast %cst_82 : f32 to vector<16x128xf32>
    %220 = arith.mulf %219, %214 : vector<16x128xf32>
    %221 = math.exp %220 : vector<16x128xf32>
    %222 = arith.mulf %218, %221 : vector<16x128xf32>
    %c3_i32 = arith.constant 3 : i32
    %223 = vector.broadcast %c3_i32 : i32 to vector<16x128xi32>
    %224 = arith.cmpi slt, %0, %223 : vector<16x128xi32>
    %cst_83 = arith.constant 0.000000e+00 : f32
    %225 = vector.broadcast %cst_83 : f32 to vector<16x128xf32>
    %226 = arith.select %224, %214, %225 : vector<16x128xi1>, vector<16x128xf32>
    %227 = arith.addf %226, %222 : vector<16x128xf32>
    %c8 = arith.constant 8 : index
    %c0_84 = arith.constant 0 : index
    %c0_85 = arith.constant 0 : index
    %228 = vector.load %arg2[%c8, %c0_84, %c0_85] : memref<16x128x128xf32, #tpu.memory_space<vmem>>, vector<1x128x128xf32>
    %229 = vector.shape_cast %228 : vector<1x128x128xf32> to vector<128x128xf32>
    %cst_86 = arith.constant dense<0.000000e+00> : vector<16x128xf32>
    %230 = tpu.matmul %227, %229, %cst_86 {dimension_numbers = #tpu.dot_dimension_numbers<[1], [0], [0], [1], [0, 0, 1, 1], [], []>} : vector<16x128xf32>, vector<128x128xf32>, vector<16x128xf32> -> vector<16x128xf32>
    %c7_87 = arith.constant 7 : index
    %c0_88 = arith.constant 0 : index
    %c0_89 = arith.constant 0 : index
    %231 = vector.load %arg3[%c7_87, %c0_88, %c0_89] : memref<16x2x128xf32, #tpu.memory_space<vmem>>, vector<1x2x128xf32>
    %232 = vector.shape_cast %231 : vector<1x2x128xf32> to vector<2x128xf32>
    %233 = vector.extract_strided_slice %232 {offsets = [0, 0], sizes = [1, 128], strides = [1, 1]} : vector<2x128xf32> to vector<1x128xf32>
    %234 = vector.extract_strided_slice %232 {offsets = [1, 0], sizes = [1, 128], strides = [1, 1]} : vector<2x128xf32> to vector<1x128xf32>
    %235 = arith.mulf %230, %230 : vector<16x128xf32>
    %236 = tpu.concatenate %230, %235 in 1 : vector<16x128xf32>, vector<16x128xf32> -> vector<16x256xf32>
    %cst_90 = arith.constant dense<0.000000e+00> : vector<256xf32>
    %237 = vector.multi_reduction <add>, %236, %cst_90 [0] : vector<16x256xf32> to vector<256xf32>
    %238 = vector.shape_cast %237 : vector<256xf32> to vector<1x256xf32>
    %cst_91 = arith.constant 1.600000e+01 : f32
    %239 = vector.broadcast %cst_91 : f32 to vector<1x256xf32>
    %240 = arith.divf %238, %239 : vector<1x256xf32>
    %241 = vector.extract_strided_slice %240 {offsets = [0, 0], sizes = [1, 128], strides = [1, 1]} : vector<1x256xf32> to vector<1x128xf32>
    %242 = vector.extract_strided_slice %240 {offsets = [0, 128], sizes = [1, 128], strides = [1, 1]} : vector<1x256xf32> to vector<1x128xf32>
    %243 = arith.mulf %241, %241 : vector<1x128xf32>
    %244 = arith.subf %242, %243 : vector<1x128xf32>
    %cst_92 = arith.constant 0.000000e+00 : f32
    %245 = vector.broadcast %cst_92 : f32 to vector<1x128xf32>
    %246 = arith.maximumf %244, %245 : vector<1x128xf32>
    %cst_93 = arith.constant 9.99999974E-6 : f32
    %247 = vector.broadcast %cst_93 : f32 to vector<1x128xf32>
    %248 = arith.addf %246, %247 : vector<1x128xf32>
    %249 = math.rsqrt %248 : vector<1x128xf32>
    %250 = arith.mulf %233, %249 : vector<1x128xf32>
    %251 = arith.mulf %241, %250 : vector<1x128xf32>
    %252 = arith.subf %234, %251 : vector<1x128xf32>
    %253 = vector.broadcast %250 : vector<1x128xf32> to vector<16x128xf32>
    %254 = arith.mulf %230, %253 : vector<16x128xf32>
    %255 = vector.broadcast %252 : vector<1x128xf32> to vector<16x128xf32>
    %256 = arith.addf %254, %255 : vector<16x128xf32>
    %cst_94 = arith.constant 0.000000e+00 : f32
    %257 = vector.broadcast %cst_94 : f32 to vector<16x128xf32>
    %258 = arith.maximumf %256, %257 : vector<16x128xf32>
    %c9 = arith.constant 9 : index
    %c0_95 = arith.constant 0 : index
    %c0_96 = arith.constant 0 : index
    %259 = vector.load %arg2[%c9, %c0_95, %c0_96] : memref<16x128x128xf32, #tpu.memory_space<vmem>>, vector<1x128x128xf32>
    %260 = vector.shape_cast %259 : vector<1x128x128xf32> to vector<128x128xf32>
    %cst_97 = arith.constant dense<0.000000e+00> : vector<16x128xf32>
    %261 = tpu.matmul %258, %260, %cst_97 {dimension_numbers = #tpu.dot_dimension_numbers<[1], [0], [0], [1], [0, 0, 1, 1], [], []>} : vector<16x128xf32>, vector<128x128xf32>, vector<16x128xf32> -> vector<16x128xf32>
    %c8_98 = arith.constant 8 : index
    %c0_99 = arith.constant 0 : index
    %c0_100 = arith.constant 0 : index
    %262 = vector.load %arg3[%c8_98, %c0_99, %c0_100] : memref<16x2x128xf32, #tpu.memory_space<vmem>>, vector<1x2x128xf32>
    %263 = vector.shape_cast %262 : vector<1x2x128xf32> to vector<2x128xf32>
    %264 = vector.extract_strided_slice %263 {offsets = [0, 0], sizes = [1, 128], strides = [1, 1]} : vector<2x128xf32> to vector<1x128xf32>
    %265 = vector.extract_strided_slice %263 {offsets = [1, 0], sizes = [1, 128], strides = [1, 1]} : vector<2x128xf32> to vector<1x128xf32>
    %266 = arith.mulf %261, %261 : vector<16x128xf32>
    %267 = tpu.concatenate %261, %266 in 1 : vector<16x128xf32>, vector<16x128xf32> -> vector<16x256xf32>
    %cst_101 = arith.constant dense<0.000000e+00> : vector<256xf32>
    %268 = vector.multi_reduction <add>, %267, %cst_101 [0] : vector<16x256xf32> to vector<256xf32>
    %269 = vector.shape_cast %268 : vector<256xf32> to vector<1x256xf32>
    %cst_102 = arith.constant 1.600000e+01 : f32
    %270 = vector.broadcast %cst_102 : f32 to vector<1x256xf32>
    %271 = arith.divf %269, %270 : vector<1x256xf32>
    %272 = vector.extract_strided_slice %271 {offsets = [0, 0], sizes = [1, 128], strides = [1, 1]} : vector<1x256xf32> to vector<1x128xf32>
    %273 = vector.extract_strided_slice %271 {offsets = [0, 128], sizes = [1, 128], strides = [1, 1]} : vector<1x256xf32> to vector<1x128xf32>
    %274 = arith.mulf %272, %272 : vector<1x128xf32>
    %275 = arith.subf %273, %274 : vector<1x128xf32>
    %cst_103 = arith.constant 0.000000e+00 : f32
    %276 = vector.broadcast %cst_103 : f32 to vector<1x128xf32>
    %277 = arith.maximumf %275, %276 : vector<1x128xf32>
    %cst_104 = arith.constant 9.99999974E-6 : f32
    %278 = vector.broadcast %cst_104 : f32 to vector<1x128xf32>
    %279 = arith.addf %277, %278 : vector<1x128xf32>
    %280 = math.rsqrt %279 : vector<1x128xf32>
    %281 = arith.mulf %264, %280 : vector<1x128xf32>
    %282 = arith.mulf %272, %281 : vector<1x128xf32>
    %283 = arith.subf %265, %282 : vector<1x128xf32>
    %284 = vector.broadcast %281 : vector<1x128xf32> to vector<16x128xf32>
    %285 = arith.mulf %261, %284 : vector<16x128xf32>
    %286 = vector.broadcast %283 : vector<1x128xf32> to vector<16x128xf32>
    %287 = arith.addf %285, %286 : vector<16x128xf32>
    %cst_105 = arith.constant 0.000000e+00 : f32
    %288 = vector.broadcast %cst_105 : f32 to vector<16x128xf32>
    %289 = arith.maximumf %287, %288 : vector<16x128xf32>
    %c10 = arith.constant 10 : index
    %c0_106 = arith.constant 0 : index
    %c0_107 = arith.constant 0 : index
    %290 = vector.load %arg2[%c10, %c0_106, %c0_107] : memref<16x128x128xf32, #tpu.memory_space<vmem>>, vector<1x128x128xf32>
    %291 = vector.shape_cast %290 : vector<1x128x128xf32> to vector<128x128xf32>
    %cst_108 = arith.constant dense<0.000000e+00> : vector<16x128xf32>
    %292 = tpu.matmul %289, %291, %cst_108 {dimension_numbers = #tpu.dot_dimension_numbers<[1], [0], [0], [1], [0, 0, 1, 1], [], []>} : vector<16x128xf32>, vector<128x128xf32>, vector<16x128xf32> -> vector<16x128xf32>
    %c9_109 = arith.constant 9 : index
    %c0_110 = arith.constant 0 : index
    %c0_111 = arith.constant 0 : index
    %293 = vector.load %arg3[%c9_109, %c0_110, %c0_111] : memref<16x2x128xf32, #tpu.memory_space<vmem>>, vector<1x2x128xf32>
    %294 = vector.shape_cast %293 : vector<1x2x128xf32> to vector<2x128xf32>
    %295 = vector.extract_strided_slice %294 {offsets = [0, 0], sizes = [1, 128], strides = [1, 1]} : vector<2x128xf32> to vector<1x128xf32>
    %296 = vector.extract_strided_slice %294 {offsets = [1, 0], sizes = [1, 128], strides = [1, 1]} : vector<2x128xf32> to vector<1x128xf32>
    %297 = arith.mulf %292, %292 : vector<16x128xf32>
    %298 = tpu.concatenate %292, %297 in 1 : vector<16x128xf32>, vector<16x128xf32> -> vector<16x256xf32>
    %cst_112 = arith.constant dense<0.000000e+00> : vector<256xf32>
    %299 = vector.multi_reduction <add>, %298, %cst_112 [0] : vector<16x256xf32> to vector<256xf32>
    %300 = vector.shape_cast %299 : vector<256xf32> to vector<1x256xf32>
    %cst_113 = arith.constant 1.600000e+01 : f32
    %301 = vector.broadcast %cst_113 : f32 to vector<1x256xf32>
    %302 = arith.divf %300, %301 : vector<1x256xf32>
    %303 = vector.extract_strided_slice %302 {offsets = [0, 0], sizes = [1, 128], strides = [1, 1]} : vector<1x256xf32> to vector<1x128xf32>
    %304 = vector.extract_strided_slice %302 {offsets = [0, 128], sizes = [1, 128], strides = [1, 1]} : vector<1x256xf32> to vector<1x128xf32>
    %305 = arith.mulf %303, %303 : vector<1x128xf32>
    %306 = arith.subf %304, %305 : vector<1x128xf32>
    %cst_114 = arith.constant 0.000000e+00 : f32
    %307 = vector.broadcast %cst_114 : f32 to vector<1x128xf32>
    %308 = arith.maximumf %306, %307 : vector<1x128xf32>
    %cst_115 = arith.constant 9.99999974E-6 : f32
    %309 = vector.broadcast %cst_115 : f32 to vector<1x128xf32>
    %310 = arith.addf %308, %309 : vector<1x128xf32>
    %311 = math.rsqrt %310 : vector<1x128xf32>
    %312 = arith.mulf %295, %311 : vector<1x128xf32>
    %313 = arith.mulf %303, %312 : vector<1x128xf32>
    %314 = arith.subf %296, %313 : vector<1x128xf32>
    %315 = vector.broadcast %312 : vector<1x128xf32> to vector<16x128xf32>
    %316 = arith.mulf %292, %315 : vector<16x128xf32>
    %317 = vector.broadcast %314 : vector<1x128xf32> to vector<16x128xf32>
    %318 = arith.addf %316, %317 : vector<16x128xf32>
    %c11 = arith.constant 11 : index
    %c0_116 = arith.constant 0 : index
    %c0_117 = arith.constant 0 : index
    %319 = vector.load %arg2[%c11, %c0_116, %c0_117] : memref<16x128x128xf32, #tpu.memory_space<vmem>>, vector<1x128x128xf32>
    %320 = vector.shape_cast %319 : vector<1x128x128xf32> to vector<128x128xf32>
    %cst_118 = arith.constant dense<0.000000e+00> : vector<16x128xf32>
    %321 = tpu.matmul %318, %320, %cst_118 {dimension_numbers = #tpu.dot_dimension_numbers<[1], [0], [0], [1], [0, 0, 1, 1], [], []>} : vector<16x128xf32>, vector<128x128xf32>, vector<16x128xf32> -> vector<16x128xf32>
    %c10_119 = arith.constant 10 : index
    %c0_120 = arith.constant 0 : index
    %c0_121 = arith.constant 0 : index
    %322 = vector.load %arg3[%c10_119, %c0_120, %c0_121] : memref<16x2x128xf32, #tpu.memory_space<vmem>>, vector<1x2x128xf32>
    %323 = vector.shape_cast %322 : vector<1x2x128xf32> to vector<2x128xf32>
    %324 = vector.extract_strided_slice %323 {offsets = [0, 0], sizes = [1, 128], strides = [1, 1]} : vector<2x128xf32> to vector<1x128xf32>
    %325 = vector.extract_strided_slice %323 {offsets = [1, 0], sizes = [1, 128], strides = [1, 1]} : vector<2x128xf32> to vector<1x128xf32>
    %326 = arith.mulf %321, %321 : vector<16x128xf32>
    %327 = tpu.concatenate %321, %326 in 1 : vector<16x128xf32>, vector<16x128xf32> -> vector<16x256xf32>
    %cst_122 = arith.constant dense<0.000000e+00> : vector<256xf32>
    %328 = vector.multi_reduction <add>, %327, %cst_122 [0] : vector<16x256xf32> to vector<256xf32>
    %329 = vector.shape_cast %328 : vector<256xf32> to vector<1x256xf32>
    %cst_123 = arith.constant 1.600000e+01 : f32
    %330 = vector.broadcast %cst_123 : f32 to vector<1x256xf32>
    %331 = arith.divf %329, %330 : vector<1x256xf32>
    %332 = vector.extract_strided_slice %331 {offsets = [0, 0], sizes = [1, 128], strides = [1, 1]} : vector<1x256xf32> to vector<1x128xf32>
    %333 = vector.extract_strided_slice %331 {offsets = [0, 128], sizes = [1, 128], strides = [1, 1]} : vector<1x256xf32> to vector<1x128xf32>
    %334 = arith.mulf %332, %332 : vector<1x128xf32>
    %335 = arith.subf %333, %334 : vector<1x128xf32>
    %cst_124 = arith.constant 0.000000e+00 : f32
    %336 = vector.broadcast %cst_124 : f32 to vector<1x128xf32>
    %337 = arith.maximumf %335, %336 : vector<1x128xf32>
    %cst_125 = arith.constant 9.99999974E-6 : f32
    %338 = vector.broadcast %cst_125 : f32 to vector<1x128xf32>
    %339 = arith.addf %337, %338 : vector<1x128xf32>
    %340 = math.rsqrt %339 : vector<1x128xf32>
    %341 = arith.mulf %324, %340 : vector<1x128xf32>
    %342 = arith.mulf %332, %341 : vector<1x128xf32>
    %343 = arith.subf %325, %342 : vector<1x128xf32>
    %344 = vector.broadcast %341 : vector<1x128xf32> to vector<16x128xf32>
    %345 = arith.mulf %321, %344 : vector<16x128xf32>
    %346 = vector.broadcast %343 : vector<1x128xf32> to vector<16x128xf32>
    %347 = arith.addf %345, %346 : vector<16x128xf32>
    %c12 = arith.constant 12 : index
    %c0_126 = arith.constant 0 : index
    %c0_127 = arith.constant 0 : index
    %348 = vector.load %arg2[%c12, %c0_126, %c0_127] : memref<16x128x128xf32, #tpu.memory_space<vmem>>, vector<1x128x128xf32>
    %349 = vector.shape_cast %348 : vector<1x128x128xf32> to vector<128x128xf32>
    %cst_128 = arith.constant dense<0.000000e+00> : vector<16x128xf32>
    %350 = tpu.matmul %347, %349, %cst_128 {dimension_numbers = #tpu.dot_dimension_numbers<[1], [0], [0], [1], [0, 0, 1, 1], [], []>} : vector<16x128xf32>, vector<128x128xf32>, vector<16x128xf32> -> vector<16x128xf32>
    %c11_129 = arith.constant 11 : index
    %c0_130 = arith.constant 0 : index
    %c0_131 = arith.constant 0 : index
    %351 = vector.load %arg3[%c11_129, %c0_130, %c0_131] : memref<16x2x128xf32, #tpu.memory_space<vmem>>, vector<1x2x128xf32>
    %352 = vector.shape_cast %351 : vector<1x2x128xf32> to vector<2x128xf32>
    %353 = vector.extract_strided_slice %352 {offsets = [0, 0], sizes = [1, 128], strides = [1, 1]} : vector<2x128xf32> to vector<1x128xf32>
    %354 = vector.extract_strided_slice %352 {offsets = [1, 0], sizes = [1, 128], strides = [1, 1]} : vector<2x128xf32> to vector<1x128xf32>
    %355 = arith.mulf %350, %350 : vector<16x128xf32>
    %356 = tpu.concatenate %350, %355 in 1 : vector<16x128xf32>, vector<16x128xf32> -> vector<16x256xf32>
    %cst_132 = arith.constant dense<0.000000e+00> : vector<256xf32>
    %357 = vector.multi_reduction <add>, %356, %cst_132 [0] : vector<16x256xf32> to vector<256xf32>
    %358 = vector.shape_cast %357 : vector<256xf32> to vector<1x256xf32>
    %cst_133 = arith.constant 1.600000e+01 : f32
    %359 = vector.broadcast %cst_133 : f32 to vector<1x256xf32>
    %360 = arith.divf %358, %359 : vector<1x256xf32>
    %361 = vector.extract_strided_slice %360 {offsets = [0, 0], sizes = [1, 128], strides = [1, 1]} : vector<1x256xf32> to vector<1x128xf32>
    %362 = vector.extract_strided_slice %360 {offsets = [0, 128], sizes = [1, 128], strides = [1, 1]} : vector<1x256xf32> to vector<1x128xf32>
    %363 = arith.mulf %361, %361 : vector<1x128xf32>
    %364 = arith.subf %362, %363 : vector<1x128xf32>
    %cst_134 = arith.constant 0.000000e+00 : f32
    %365 = vector.broadcast %cst_134 : f32 to vector<1x128xf32>
    %366 = arith.maximumf %364, %365 : vector<1x128xf32>
    %cst_135 = arith.constant 9.99999974E-6 : f32
    %367 = vector.broadcast %cst_135 : f32 to vector<1x128xf32>
    %368 = arith.addf %366, %367 : vector<1x128xf32>
    %369 = math.rsqrt %368 : vector<1x128xf32>
    %370 = arith.mulf %353, %369 : vector<1x128xf32>
    %371 = arith.mulf %361, %370 : vector<1x128xf32>
    %372 = arith.subf %354, %371 : vector<1x128xf32>
    %373 = vector.broadcast %370 : vector<1x128xf32> to vector<16x128xf32>
    %374 = arith.mulf %350, %373 : vector<16x128xf32>
    %375 = vector.broadcast %372 : vector<1x128xf32> to vector<16x128xf32>
    %376 = arith.addf %374, %375 : vector<16x128xf32>
    %c13 = arith.constant 13 : index
    %c0_136 = arith.constant 0 : index
    %c0_137 = arith.constant 0 : index
    %377 = vector.load %arg2[%c13, %c0_136, %c0_137] : memref<16x128x128xf32, #tpu.memory_space<vmem>>, vector<1x128x128xf32>
    %378 = vector.shape_cast %377 : vector<1x128x128xf32> to vector<128x128xf32>
    %cst_138 = arith.constant dense<0.000000e+00> : vector<16x128xf32>
    %379 = tpu.matmul %376, %378, %cst_138 {dimension_numbers = #tpu.dot_dimension_numbers<[1], [0], [0], [1], [0, 0, 1, 1], [], []>} : vector<16x128xf32>, vector<128x128xf32>, vector<16x128xf32> -> vector<16x128xf32>
    %c12_139 = arith.constant 12 : index
    %c0_140 = arith.constant 0 : index
    %c0_141 = arith.constant 0 : index
    %380 = vector.load %arg3[%c12_139, %c0_140, %c0_141] : memref<16x2x128xf32, #tpu.memory_space<vmem>>, vector<1x2x128xf32>
    %381 = vector.shape_cast %380 : vector<1x2x128xf32> to vector<2x128xf32>
    %382 = vector.extract_strided_slice %381 {offsets = [0, 0], sizes = [1, 128], strides = [1, 1]} : vector<2x128xf32> to vector<1x128xf32>
    %383 = vector.extract_strided_slice %381 {offsets = [1, 0], sizes = [1, 128], strides = [1, 1]} : vector<2x128xf32> to vector<1x128xf32>
    %384 = arith.mulf %379, %379 : vector<16x128xf32>
    %385 = tpu.concatenate %379, %384 in 1 : vector<16x128xf32>, vector<16x128xf32> -> vector<16x256xf32>
    %cst_142 = arith.constant dense<0.000000e+00> : vector<256xf32>
    %386 = vector.multi_reduction <add>, %385, %cst_142 [0] : vector<16x256xf32> to vector<256xf32>
    %387 = vector.shape_cast %386 : vector<256xf32> to vector<1x256xf32>
    %cst_143 = arith.constant 1.600000e+01 : f32
    %388 = vector.broadcast %cst_143 : f32 to vector<1x256xf32>
    %389 = arith.divf %387, %388 : vector<1x256xf32>
    %390 = vector.extract_strided_slice %389 {offsets = [0, 0], sizes = [1, 128], strides = [1, 1]} : vector<1x256xf32> to vector<1x128xf32>
    %391 = vector.extract_strided_slice %389 {offsets = [0, 128], sizes = [1, 128], strides = [1, 1]} : vector<1x256xf32> to vector<1x128xf32>
    %392 = arith.mulf %390, %390 : vector<1x128xf32>
    %393 = arith.subf %391, %392 : vector<1x128xf32>
    %cst_144 = arith.constant 0.000000e+00 : f32
    %394 = vector.broadcast %cst_144 : f32 to vector<1x128xf32>
    %395 = arith.maximumf %393, %394 : vector<1x128xf32>
    %cst_145 = arith.constant 9.99999974E-6 : f32
    %396 = vector.broadcast %cst_145 : f32 to vector<1x128xf32>
    %397 = arith.addf %395, %396 : vector<1x128xf32>
    %398 = math.rsqrt %397 : vector<1x128xf32>
    %399 = arith.mulf %382, %398 : vector<1x128xf32>
    %400 = arith.mulf %390, %399 : vector<1x128xf32>
    %401 = arith.subf %383, %400 : vector<1x128xf32>
    %402 = vector.broadcast %399 : vector<1x128xf32> to vector<16x128xf32>
    %403 = arith.mulf %379, %402 : vector<16x128xf32>
    %404 = vector.broadcast %401 : vector<1x128xf32> to vector<16x128xf32>
    %405 = arith.addf %403, %404 : vector<16x128xf32>
    %c14 = arith.constant 14 : index
    %c0_146 = arith.constant 0 : index
    %c0_147 = arith.constant 0 : index
    %406 = vector.load %arg2[%c14, %c0_146, %c0_147] : memref<16x128x128xf32, #tpu.memory_space<vmem>>, vector<1x128x128xf32>
    %407 = vector.shape_cast %406 : vector<1x128x128xf32> to vector<128x128xf32>
    %cst_148 = arith.constant dense<0.000000e+00> : vector<16x128xf32>
    %408 = tpu.matmul %405, %407, %cst_148 {dimension_numbers = #tpu.dot_dimension_numbers<[1], [0], [0], [1], [0, 0, 1, 1], [], []>} : vector<16x128xf32>, vector<128x128xf32>, vector<16x128xf32> -> vector<16x128xf32>
    %c13_149 = arith.constant 13 : index
    %c0_150 = arith.constant 0 : index
    %c0_151 = arith.constant 0 : index
    %409 = vector.load %arg3[%c13_149, %c0_150, %c0_151] : memref<16x2x128xf32, #tpu.memory_space<vmem>>, vector<1x2x128xf32>
    %410 = vector.shape_cast %409 : vector<1x2x128xf32> to vector<2x128xf32>
    %411 = vector.extract_strided_slice %410 {offsets = [0, 0], sizes = [1, 128], strides = [1, 1]} : vector<2x128xf32> to vector<1x128xf32>
    %412 = vector.extract_strided_slice %410 {offsets = [1, 0], sizes = [1, 128], strides = [1, 1]} : vector<2x128xf32> to vector<1x128xf32>
    %413 = arith.mulf %408, %408 : vector<16x128xf32>
    %414 = tpu.concatenate %408, %413 in 1 : vector<16x128xf32>, vector<16x128xf32> -> vector<16x256xf32>
    %cst_152 = arith.constant dense<0.000000e+00> : vector<256xf32>
    %415 = vector.multi_reduction <add>, %414, %cst_152 [0] : vector<16x256xf32> to vector<256xf32>
    %416 = vector.shape_cast %415 : vector<256xf32> to vector<1x256xf32>
    %cst_153 = arith.constant 1.600000e+01 : f32
    %417 = vector.broadcast %cst_153 : f32 to vector<1x256xf32>
    %418 = arith.divf %416, %417 : vector<1x256xf32>
    %419 = vector.extract_strided_slice %418 {offsets = [0, 0], sizes = [1, 128], strides = [1, 1]} : vector<1x256xf32> to vector<1x128xf32>
    %420 = vector.extract_strided_slice %418 {offsets = [0, 128], sizes = [1, 128], strides = [1, 1]} : vector<1x256xf32> to vector<1x128xf32>
    %421 = arith.mulf %419, %419 : vector<1x128xf32>
    %422 = arith.subf %420, %421 : vector<1x128xf32>
    %cst_154 = arith.constant 0.000000e+00 : f32
    %423 = vector.broadcast %cst_154 : f32 to vector<1x128xf32>
    %424 = arith.maximumf %422, %423 : vector<1x128xf32>
    %cst_155 = arith.constant 9.99999974E-6 : f32
    %425 = vector.broadcast %cst_155 : f32 to vector<1x128xf32>
    %426 = arith.addf %424, %425 : vector<1x128xf32>
    %427 = math.rsqrt %426 : vector<1x128xf32>
    %428 = arith.mulf %411, %427 : vector<1x128xf32>
    %429 = arith.mulf %419, %428 : vector<1x128xf32>
    %430 = arith.subf %412, %429 : vector<1x128xf32>
    %431 = vector.broadcast %428 : vector<1x128xf32> to vector<16x128xf32>
    %432 = arith.mulf %408, %431 : vector<16x128xf32>
    %433 = vector.broadcast %430 : vector<1x128xf32> to vector<16x128xf32>
    %434 = arith.addf %432, %433 : vector<16x128xf32>
    %c15_156 = arith.constant 15 : index
    %c0_157 = arith.constant 0 : index
    %c0_158 = arith.constant 0 : index
    %435 = vector.load %arg2[%c15_156, %c0_157, %c0_158] : memref<16x128x128xf32, #tpu.memory_space<vmem>>, vector<1x128x128xf32>
    %436 = vector.shape_cast %435 : vector<1x128x128xf32> to vector<128x128xf32>
    %cst_159 = arith.constant dense<0.000000e+00> : vector<16x128xf32>
    %437 = tpu.matmul %434, %436, %cst_159 {dimension_numbers = #tpu.dot_dimension_numbers<[1], [0], [0], [1], [0, 0, 1, 1], [], []>} : vector<16x128xf32>, vector<128x128xf32>, vector<16x128xf32> -> vector<16x128xf32>
    %c14_160 = arith.constant 14 : index
    %c0_161 = arith.constant 0 : index
    %c0_162 = arith.constant 0 : index
    %438 = vector.load %arg3[%c14_160, %c0_161, %c0_162] : memref<16x2x128xf32, #tpu.memory_space<vmem>>, vector<1x2x128xf32>
    %439 = vector.shape_cast %438 : vector<1x2x128xf32> to vector<2x128xf32>
    %440 = vector.extract_strided_slice %439 {offsets = [0, 0], sizes = [1, 128], strides = [1, 1]} : vector<2x128xf32> to vector<1x128xf32>
    %441 = vector.extract_strided_slice %439 {offsets = [1, 0], sizes = [1, 128], strides = [1, 1]} : vector<2x128xf32> to vector<1x128xf32>
    %442 = arith.mulf %437, %437 : vector<16x128xf32>
    %443 = tpu.concatenate %437, %442 in 1 : vector<16x128xf32>, vector<16x128xf32> -> vector<16x256xf32>
    %cst_163 = arith.constant dense<0.000000e+00> : vector<256xf32>
    %444 = vector.multi_reduction <add>, %443, %cst_163 [0] : vector<16x256xf32> to vector<256xf32>
    %445 = vector.shape_cast %444 : vector<256xf32> to vector<1x256xf32>
    %cst_164 = arith.constant 1.600000e+01 : f32
    %446 = vector.broadcast %cst_164 : f32 to vector<1x256xf32>
    %447 = arith.divf %445, %446 : vector<1x256xf32>
    %448 = vector.extract_strided_slice %447 {offsets = [0, 0], sizes = [1, 128], strides = [1, 1]} : vector<1x256xf32> to vector<1x128xf32>
    %449 = vector.extract_strided_slice %447 {offsets = [0, 128], sizes = [1, 128], strides = [1, 1]} : vector<1x256xf32> to vector<1x128xf32>
    %450 = arith.mulf %448, %448 : vector<1x128xf32>
    %451 = arith.subf %449, %450 : vector<1x128xf32>
    %cst_165 = arith.constant 0.000000e+00 : f32
    %452 = vector.broadcast %cst_165 : f32 to vector<1x128xf32>
    %453 = arith.maximumf %451, %452 : vector<1x128xf32>
    %cst_166 = arith.constant 9.99999974E-6 : f32
    %454 = vector.broadcast %cst_166 : f32 to vector<1x128xf32>
    %455 = arith.addf %453, %454 : vector<1x128xf32>
    %456 = math.rsqrt %455 : vector<1x128xf32>
    %457 = arith.mulf %440, %456 : vector<1x128xf32>
    %458 = arith.mulf %448, %457 : vector<1x128xf32>
    %459 = arith.subf %441, %458 : vector<1x128xf32>
    %460 = vector.broadcast %457 : vector<1x128xf32> to vector<16x128xf32>
    %461 = arith.mulf %437, %460 : vector<16x128xf32>
    %462 = vector.broadcast %459 : vector<1x128xf32> to vector<16x128xf32>
    %463 = arith.addf %461, %462 : vector<16x128xf32>
    %c0_167 = arith.constant 0 : index
    %c0_168 = arith.constant 0 : index
    %c0_169 = arith.constant 0 : index
    %464 = vector.load %arg4[%c0_167, %c0_168, %c0_169] : memref<2x16x128xf32, #tpu.memory_space<vmem>>, vector<1x16x128xf32>
    %465 = vector.shape_cast %464 : vector<1x16x128xf32> to vector<16x128xf32>
    %466 = vector.shape_cast %463 : vector<16x128xf32> to vector<1x16x128xf32>
    tpu.vector_store %arg4[%c0_167, %c0_168, %c0_169], %466 {strides = array<i32>} : memref<2x16x128xf32, #tpu.memory_space<vmem>>, vector<1x16x128xf32>,
    return
  }
}

</mosaic_0001>

<llo_original>
// kernel: tpu_custom_call.1
$region0: #{tpu_custom_call.1}
  #allocation0 [shape = 'u32[]', space=smem, size = 0x4, offset = 0x4, fixed_abs, tag = 'smem constant byte address 0x4 - core index']
  #allocation1 [shape = 'u32[144,128]{1,0:T(1,128)}', space=vmem, size = 0x12000, scoped, tag = 'internal scratch']
  %s0 = inlined_call_operand.hbm [shape: f32[16,128], index: 0, kind: input, shape index: {}]
  %s1 = inlined_call_operand.hbm [shape: f32[16,128], index: 1, kind: input, shape index: {}]
  %s2 = inlined_call_operand.hbm [shape: f32[16,128,128], index: 2, kind: input, shape index: {}]
  %s3 = inlined_call_operand.hbm [shape: f32[16,2,128], index: 3, kind: input, shape index: {}]
  %s4 = inlined_call_operand.hbm [shape: f32[2,16,128], index: 4, kind: output, shape index: {}]
  %s5 = sld [smem:[#allocation0]]
  $region42: #{tpu_custom_call.1} parent=0
    _
  %s7 = ssub.s32 1, %s5
  %s8 = scalar_select 0, %s7, %s5
  $region1: #{tpu_custom_call.1} parent=0
    #allocation2 [shape = 'u8[8192]{0}', space=vmem, size = 0x2000, scoped, tag = 'input window, operand 0, single buffered']
    #allocation3 [shape = 's32[1]{0}', space=sflag, size = 0x4, scoped, tag = 'scoped memory for tpu_custom_call.1']
    #allocation4 [shape = 's32[1]{0}', space=sflag, size = 0x4, scoped, tag = 'scoped memory for tpu_custom_call.1']
    #allocation5 [shape = 'u8[8192]{0}', space=vmem, size = 0x2000, scoped, tag = 'input window, operand 1, single buffered']
    #allocation6 [shape = 's32[1]{0}', space=sflag, size = 0x4, scoped, tag = 'scoped memory for tpu_custom_call.1']
    #allocation7 [shape = 'u8[1048576]{0}', space=vmem, size = 0x100000, scoped, tag = 'input window, operand 2, single buffered']
    #allocation8 [shape = 'u8[16384]{0}', space=vmem, size = 0x4000, scoped, tag = 'input window, operand 3, single buffered']
    #allocation9 [shape = 's32[1]{0}', space=sflag, size = 0x4, scoped, tag = 'scoped memory for tpu_custom_call.1']
    #allocation10 [shape = 'u8[16384]{0}', space=vmem, size = 0x4000, scoped, tag = 'output window, operand 0, single buffered']
    %9 = vsyncpa [#allocation3], 0
    %10 = vsyncpa [#allocation6], 0
    %11 = vsyncpa [#allocation9], 0
    %12 = vsyncpa [#allocation4], 0
    // Predicated region
    $region2: #{tpu_custom_call.1} parent=1 // pred_check
      _
    $region3: #{tpu_custom_call.1} parent=1 // pred_check_branch
      %14 = sbr.rel (0) target = $region5
    $region4: #{tpu_custom_call.1} parent=1 // pred_region
      %s16 = ssub.s32 256, 256
      %17 = vsyncadd [#allocation3], %s16
      %s18 = sshll.u32 [#allocation2], 4
      %s19 = int_to_ptr.vmem [resolvable:$true] %s18
      %24 = dma.hbm_to_vmem [thread:$0]  %s0, 256, %s19, [#allocation3], 128, 128, 8
    $region5: #{tpu_custom_call.1} parent=1 // pred_fallthru
      _
    // Predicated region
    $region6: #{tpu_custom_call.1} parent=1 // pred_check
      _
    $region7: #{tpu_custom_call.1} parent=1 // pred_check_branch
      %26 = sbr.rel (0) target = $region9
    $region8: #{tpu_custom_call.1} parent=1 // pred_region
      %s28 = ssub.s32 256, 256
      %29 = vsyncadd [#allocation6], %s28
      %s30 = sshll.u32 [#allocation5], 4
      %s31 = int_to_ptr.vmem [resolvable:$true] %s30
      %36 = dma.hbm_to_vmem [thread:$0]  %s1, 256, %s31, [#allocation6], 128, 128, 8
    $region9: #{tpu_custom_call.1} parent=1 // pred_fallthru
      _
    // Predicated region
    $region10: #{tpu_custom_call.1} parent=1 // pred_check
      _
    $region11: #{tpu_custom_call.1} parent=1 // pred_check_branch
      %38 = sbr.rel (0) target = $region13
    $region12: #{tpu_custom_call.1} parent=1 // pred_region
      %s40 = ssub.s32 32768, 32768
      %41 = vsyncadd [#allocation6], %s40
      %s42 = sshll.u32 [#allocation7], 4
      %s43 = int_to_ptr.vmem [resolvable:$true] %s42
      %48 = dma.hbm_to_vmem [thread:$0]  %s2, 32768, %s43, [#allocation6], 128, 128, 8
    $region13: #{tpu_custom_call.1} parent=1 // pred_fallthru
      _
    // Predicated region
    $region14: #{tpu_custom_call.1} parent=1 // pred_check
      _
    $region15: #{tpu_custom_call.1} parent=1 // pred_check_branch
      %50 = sbr.rel (0) target = $region17
    $region16: #{tpu_custom_call.1} parent=1 // pred_region
      %s52 = ssub.s32 512, 512
      %53 = vsyncadd [#allocation9], %s52
      %s54 = sshll.u32 [#allocation8], 4
      %s55 = int_to_ptr.vmem [resolvable:$true] %s54
      %60 = dma.hbm_to_vmem [thread:$0]  %s3, 512, %s55, [#allocation9], 32, 32, 2
    $region17: #{tpu_custom_call.1} parent=1 // pred_fallthru
      _
    // Predicated region
    $region18: #{tpu_custom_call.1} parent=1 // pred_check
      _
    $region19: #{tpu_custom_call.1} parent=1 // pred_check_branch
      %62 = sbr.rel (0) target = $region21
    $region20: #{tpu_custom_call.1} parent=1 // pred_region
      %63 = dma.done [#allocation3], 256
    $region21: #{tpu_custom_call.1} parent=1 // pred_fallthru
      _
    // Predicated region
    $region22: #{tpu_custom_call.1} parent=1 // pred_check
      _
    $region23: #{tpu_custom_call.1} parent=1 // pred_check_branch
      %65 = sbr.rel (0) target = $region25
    $region24: #{tpu_custom_call.1} parent=1 // pred_region
      %66 = dma.done [#allocation6], 256
    $region25: #{tpu_custom_call.1} parent=1 // pred_fallthru
      _
    // Predicated region
    $region26: #{tpu_custom_call.1} parent=1 // pred_check
      _
    $region27: #{tpu_custom_call.1} parent=1 // pred_check_branch
      %68 = sbr.rel (0) target = $region29
    $region28: #{tpu_custom_call.1} parent=1 // pred_region
      %69 = dma.done [#allocation6], 32768
    $region29: #{tpu_custom_call.1} parent=1 // pred_fallthru
      _
    // Predicated region
    $region30: #{tpu_custom_call.1} parent=1 // pred_check
      _
    $region31: #{tpu_custom_call.1} parent=1 // pred_check_branch
      %71 = sbr.rel (0) target = $region33
    $region32: #{tpu_custom_call.1} parent=1 // pred_region
      %72 = dma.done [#allocation9], 512
    $region33: #{tpu_custom_call.1} parent=1 // pred_fallthru
      _
    %v73 = vlaneseq
    %v74 = vand.u32 %v73, 127
    %v75 = vld [vmem:[#allocation2] sm:$0xff]
    %v76 = vld [vmem:[#allocation2 + $0x8] sm:$0xff]
    %v77 = vld [vmem:[#allocation7] sm:$0xff]
    %v78 = vld [vmem:[#allocation7 + $0x8] sm:$0xff]
    %v79 = vld [vmem:[#allocation7 + $0x10] sm:$0xff]
    %v80 = vld [vmem:[#allocation7 + $0x18] sm:$0xff]
    %v81 = vld [vmem:[#allocation7 + $0x20] sm:$0xff]
    %v82 = vld [vmem:[#allocation7 + $0x28] sm:$0xff]
    %v83 = vld [vmem:[#allocation7 + $0x30] sm:$0xff]
    %v84 = vld [vmem:[#allocation7 + $0x38] sm:$0xff]
    %v85 = vld [vmem:[#allocation7 + $0x40] sm:$0xff]
    %v86 = vld [vmem:[#allocation7 + $0x48] sm:$0xff]
    %v87 = vld [vmem:[#allocation7 + $0x50] sm:$0xff]
    %v88 = vld [vmem:[#allocation7 + $0x58] sm:$0xff]
    %v89 = vld [vmem:[#allocation7 + $0x60] sm:$0xff]
    %v90 = vld [vmem:[#allocation7 + $0x68] sm:$0xff]
    %v91 = vld [vmem:[#allocation7 + $0x70] sm:$0xff]
    %v92 = vld [vmem:[#allocation7 + $0x78] sm:$0xff]
    %93 = vmatprep.subr.mxu0 0.0
    %94 = vmatpush1.msra.mxu0 %v92
    %95 = vmatprep.subr.mxu0 0.0
    %96 = vmatpush1.msra.mxu0 %v91
    %97 = vmatprep.subr.mxu0 0.0
    %98 = vmatpush1.msra.mxu0 %v90
    %99 = vmatprep.subr.mxu0 0.0
    %100 = vmatpush1.msra.mxu0 %v89
    %101 = vmatprep.subr.mxu0 0.0
    %102 = vmatpush1.msra.mxu0 %v88
    %103 = vmatprep.subr.mxu0 0.0
    %104 = vmatpush1.msra.mxu0 %v87
    %105 = vmatprep.subr.mxu0 0.0
    %106 = vmatpush1.msra.mxu0 %v86
    %107 = vmatprep.subr.mxu0 0.0
    %108 = vmatpush1.msra.mxu0 %v85
    %109 = vmatprep.subr.mxu0 0.0
    %110 = vmatpush1.msra.mxu0 %v84
    %111 = vmatprep.subr.mxu0 0.0
    %112 = vmatpush1.msra.mxu0 %v83
    %113 = vmatprep.subr.mxu0 0.0
    %114 = vmatpush1.msra.mxu0 %v82
    %115 = vmatprep.subr.mxu0 0.0
    %116 = vmatpush1.msra.mxu0 %v81
    %117 = vmatprep.subr.mxu0 0.0
    %118 = vmatpush1.msra.mxu0 %v80
    %119 = vmatprep.subr.mxu0 0.0
    %120 = vmatpush1.msra.mxu0 %v79
    %121 = vmatprep.subr.mxu0 0.0
    %122 = vmatpush1.msra.mxu0 %v78
    %123 = vmatprep.subr.mxu0 0.0
    %124 = vmatpush1.msra.mxu0 %v77
    %125 = vmatprep.subr.mxu0 0.0
    %126 = vmatpush2.msra.mxu0 0.0
    %127 = vmatprep.subr.mxu0 0.0
    %128 = vmatpush2.msra.mxu0 0.0
    %129 = vmatprep.subr.mxu0 0.0
    %130 = vmatpush2.msra.mxu0 0.0
    %131 = vmatprep.subr.mxu0 0.0
    %132 = vmatpush2.msra.mxu0 0.0
    %133 = vmatprep.subr.mxu0 0.0
    %134 = vmatpush2.msra.mxu0 0.0
    %135 = vmatprep.subr.mxu0 0.0
    %136 = vmatpush2.msra.mxu0 0.0
    %137 = vmatprep.subr.mxu0 0.0
    %138 = vmatpush2.msra.mxu0 0.0
    %139 = vmatprep.subr.mxu0 0.0
    %140 = vmatpush2.msra.mxu0 0.0
    %141 = vmatprep.subr.mxu0 0.0
    %142 = vmatpush2.msra.mxu0 0.0
    %143 = vmatprep.subr.mxu0 0.0
    %144 = vmatpush2.msra.mxu0 0.0
    %145 = vmatprep.subr.mxu0 0.0
    %146 = vmatpush2.msra.mxu0 0.0
    %147 = vmatprep.subr.mxu0 0.0
    %148 = vmatpush2.msra.mxu0 0.0
    %149 = vmatprep.subr.mxu0 0.0
    %150 = vmatpush2.msra.mxu0 0.0
    %151 = vmatprep.subr.mxu0 0.0
    %152 = vmatpush2.msra.mxu0 0.0
    %153 = vmatprep.subr.mxu0 0.0
    %154 = vmatpush2.msra.mxu0 0.0
    %155 = vmatprep.subr.mxu0 0.0
    %156 = vmatpush2.msra.mxu0 0.0
    %157 = vmatprep.mubr.f32.mxu0 0.0
    %158 = vmatmul.mubr.f32.gmra.mxu0 %v75
    %v159 = vpop.f32.mrf.mxu0
    %v160 = vadd.f32 0.0, %v159
    %v161 = vpop.f32.mrf.mxu0
    %162 = vmatprep.mubr.f32.mxu0 0.0
    %163 = vmatmul.mubr.f32.gmra.mxu0 %v76
    %v164 = vpop.f32.mrf.mxu0
    %v165 = vadd.f32 0.0, %v164
    %v166 = vpop.f32.mrf.mxu0
    %167 = vdwg.mxu0
    %v168 = vld [vmem:[#allocation8] sm:$0x3]
    %v169 = vmul.f32 %v160, %v160
    %v170 = vmul.f32 %v165, %v165
    %v171 = vadd.f32 %v160, %v165
    %v172 = vrot.slane %v171, 4
    %v173 = vadd.f32 %v171, %v172
    %v174 = vrot.slane %v173, 2
    %v175 = vadd.f32 %v173, %v174
    %v176 = vrot.slane %v175, 1
    %v177 = vadd.f32 %v175, %v176
    %v178 = vadd.f32 %v169, %v170
    %v179 = vrot.slane %v178, 4
    %v180 = vadd.f32 %v178, %v179
    %v181 = vrot.slane %v180, 2
    %v182 = vadd.f32 %v180, %v181
    %v183 = vrot.slane %v182, 1
    %v184 = vadd.f32 %v182, %v183
    %v185 = vrcp.pop 16.0
    %v186 = vmul.f32 %v177, %v185
    %v187 = vmul.f32 %v184, %v185
    %v188 = vmul.f32 %v186, %v186
    %v189 = vsub.f32 %v187, %v188
    %v190 = vmax.f32 %v189, 0.0
    %v191 = vadd.f32 %v190, 1e-05
    %v192 = vrsqrt.pop %v191
    %v193 = vmul.f32 %v168, %v192
    %v194 = vmul.f32 %v186, %v193
    %v196 = vrot.slane %v194, 7
    %v198 = vsub.f32 %v168, %v196
    %v199 = vlaneseq
    %v200 = vshrl.u32 %v199, 7
    %v201 = vsub.s32 0, %v200
    %v202 = vrot.slane %v193, %v201
    %v203 = vmul.f32 %v160, %v202
    %v204 = vmul.f32 %v165, %v202
    %v205 = vlaneseq
    %v206 = vshrl.u32 %v205, 7
    %v207 = vsub.s32 1, %v206
    %v208 = vrot.slane %v198, %v207
    %v209 = vadd.f32 %v203, %v208
    %v210 = vadd.f32 %v204, %v208
    %s211 = scalar_lea.vmem [#allocation7], 128
    %v212 = vld [vmem:[%s211] sm:$0xff]
    %v213 = vld [vmem:[%s211 + $0x8] sm:$0xff]
    %v214 = vld [vmem:[%s211 + $0x10] sm:$0xff]
    %v215 = vld [vmem:[%s211 + $0x18] sm:$0xff]
    %v216 = vld [vmem:[%s211 + $0x20] sm:$0xff]
    %v217 = vld [vmem:[%s211 + $0x28] sm:$0xff]
    %v218 = vld [vmem:[%s211 + $0x30] sm:$0xff]
    %v219 = vld [vmem:[%s211 + $0x38] sm:$0xff]
    %v220 = vld [vmem:[%s211 + $0x40] sm:$0xff]
    %v221 = vld [vmem:[%s211 + $0x48] sm:$0xff]
    %v222 = vld [vmem:[%s211 + $0x50] sm:$0xff]
    %v223 = vld [vmem:[%s211 + $0x58] sm:$0xff]
    %v224 = vld [vmem:[%s211 + $0x60] sm:$0xff]
    %v225 = vld [vmem:[%s211 + $0x68] sm:$0xff]
    %v226 = vld [vmem:[%s211 + $0x70] sm:$0xff]
    %v227 = vld [vmem:[%s211 + $0x78] sm:$0xff]
    %228 = vmatprep.subr.mxu0 0.0
    %229 = vmatpush1.msra.mxu0 %v227
    %230 = vmatprep.subr.mxu0 0.0
    %231 = vmatpush1.msra.mxu0 %v226
    %232 = vmatprep.subr.mxu0 0.0
    %233 = vmatpush1.msra.mxu0 %v225
    %234 = vmatprep.subr.mxu0 0.0
    %235 = vmatpush1.msra.mxu0 %v224
    %236 = vmatprep.subr.mxu0 0.0
    %237 = vmatpush1.msra.mxu0 %v223
    %238 = vmatprep.subr.mxu0 0.0
    %239 = vmatpush1.msra.mxu0 %v222
    %240 = vmatprep.subr.mxu0 0.0
    %241 = vmatpush1.msra.mxu0 %v221
    %242 = vmatprep.subr.mxu0 0.0
    %243 = vmatpush1.msra.mxu0 %v220
    %244 = vmatprep.subr.mxu0 0.0
    %245 = vmatpush1.msra.mxu0 %v219
    %246 = vmatprep.subr.mxu0 0.0
    %247 = vmatpush1.msra.mxu0 %v218
    %248 = vmatprep.subr.mxu0 0.0
    %249 = vmatpush1.msra.mxu0 %v217
    %250 = vmatprep.subr.mxu0 0.0
    %251 = vmatpush1.msra.mxu0 %v216
    %252 = vmatprep.subr.mxu0 0.0
    %253 = vmatpush1.msra.mxu0 %v215
    %254 = vmatprep.subr.mxu0 0.0
    %255 = vmatpush1.msra.mxu0 %v214
    %256 = vmatprep.subr.mxu0 0.0
    %257 = vmatpush1.msra.mxu0 %v213
    %258 = vmatprep.subr.mxu0 0.0
    %259 = vmatpush1.msra.mxu0 %v212
    %260 = vmatprep.subr.mxu0 0.0
    %261 = vmatpush2.msra.mxu0 0.0
    %262 = vmatprep.subr.mxu0 0.0
    %263 = vmatpush2.msra.mxu0 0.0
    %264 = vmatprep.subr.mxu0 0.0
    %265 = vmatpush2.msra.mxu0 0.0
    %266 = vmatprep.subr.mxu0 0.0
    %267 = vmatpush2.msra.mxu0 0.0
    %268 = vmatprep.subr.mxu0 0.0
    %269 = vmatpush2.msra.mxu0 0.0
    %270 = vmatprep.subr.mxu0 0.0
    %271 = vmatpush2.msra.mxu0 0.0
    %272 = vmatprep.subr.mxu0 0.0
    %273 = vmatpush2.msra.mxu0 0.0
    %274 = vmatprep.subr.mxu0 0.0
    %275 = vmatpush2.msra.mxu0 0.0
    %276 = vmatprep.subr.mxu0 0.0
    %277 = vmatpush2.msra.mxu0 0.0
    %278 = vmatprep.subr.mxu0 0.0
    %279 = vmatpush2.msra.mxu0 0.0
    %280 = vmatprep.subr.mxu0 0.0
    %281 = vmatpush2.msra.mxu0 0.0
    %282 = vmatprep.subr.mxu0 0.0
    %283 = vmatpush2.msra.mxu0 0.0
    %284 = vmatprep.subr.mxu0 0.0
    %285 = vmatpush2.msra.mxu0 0.0
    %286 = vmatprep.subr.mxu0 0.0
    %287 = vmatpush2.msra.mxu0 0.0
    %288 = vmatprep.subr.mxu0 0.0
    %289 = vmatpush2.msra.mxu0 0.0
    %290 = vmatprep.subr.mxu0 0.0
    %291 = vmatpush2.msra.mxu0 0.0
    %292 = vmatprep.mubr.f32.mxu0 0.0
    %293 = vmatmul.mubr.f32.gmra.mxu0 %v209
    %v294 = vpop.f32.mrf.mxu0
    %v295 = vadd.f32 0.0, %v294
    %v296 = vpop.f32.mrf.mxu0
    %297 = vmatprep.mubr.f32.mxu0 0.0
    %298 = vmatmul.mubr.f32.gmra.mxu0 %v210
    %v299 = vpop.f32.mrf.mxu0
    %v300 = vadd.f32 0.0, %v299
    %v301 = vpop.f32.mrf.mxu0
    %302 = vdwg.mxu0
    %s303 = scalar_lea.vmem [#allocation8], 2
    %v304 = vld [vmem:[%s303] sm:$0x3]
    %v305 = vmul.f32 %v295, %v295
    %v306 = vmul.f32 %v300, %v300
    %v307 = vadd.f32 %v295, %v300
    %v308 = vrot.slane %v307, 4
    %v309 = vadd.f32 %v307, %v308
    %v310 = vrot.slane %v309, 2
    %v311 = vadd.f32 %v309, %v310
    %v312 = vrot.slane %v311, 1
    %v313 = vadd.f32 %v311, %v312
    %v314 = vadd.f32 %v305, %v306
    %v315 = vrot.slane %v314, 4
    %v316 = vadd.f32 %v314, %v315
    %v317 = vrot.slane %v316, 2
    %v318 = vadd.f32 %v316, %v317
    %v319 = vrot.slane %v318, 1
    %v320 = vadd.f32 %v318, %v319
    %v321 = vmul.f32 %v313, %v185
    %v322 = vmul.f32 %v320, %v185
    %v323 = vmul.f32 %v321, %v321
    %v324 = vsub.f32 %v322, %v323
    %v325 = vmax.f32 %v324, 0.0
    %v326 = vadd.f32 %v325, 1e-05
    %v327 = vrsqrt.pop %v326
    %v328 = vmul.f32 %v304, %v327
    %v329 = vmul.f32 %v321, %v328
    %v331 = vrot.slane %v329, 7
    %v333 = vsub.f32 %v304, %v331
    %v334 = vlaneseq
    %v335 = vshrl.u32 %v334, 7
    %v336 = vsub.s32 0, %v335
    %v337 = vrot.slane %v328, %v336
    %v338 = vmul.f32 %v295, %v337
    %v339 = vmul.f32 %v300, %v337
    %v340 = vlaneseq
    %v341 = vshrl.u32 %v340, 7
    %v342 = vsub.s32 1, %v341
    %v343 = vrot.slane %v333, %v342
    %v344 = vadd.f32 %v338, %v343
    %v345 = vadd.f32 %v339, %v343
    %s346 = scalar_lea.vmem [#allocation7], 256
    %v347 = vld [vmem:[%s346] sm:$0xff]
    %v348 = vld [vmem:[%s346 + $0x8] sm:$0xff]
    %v349 = vld [vmem:[%s346 + $0x10] sm:$0xff]
    %v350 = vld [vmem:[%s346 + $0x18] sm:$0xff]
    %v351 = vld [vmem:[%s346 + $0x20] sm:$0xff]
    %v352 = vld [vmem:[%s346 + $0x28] sm:$0xff]
    %v353 = vld [vmem:[%s346 + $0x30] sm:$0xff]
    %v354 = vld [vmem:[%s346 + $0x38] sm:$0xff]
    %v355 = vld [vmem:[%s346 + $0x40] sm:$0xff]
    %v356 = vld [vmem:[%s346 + $0x48] sm:$0xff]
    %v357 = vld [vmem:[%s346 + $0x50] sm:$0xff]
    %v358 = vld [vmem:[%s346 + $0x58] sm:$0xff]
    %v359 = vld [vmem:[%s346 + $0x60] sm:$0xff]
    %v360 = vld [vmem:[%s346 + $0x68] sm:$0xff]
    %v361 = vld [vmem:[%s346 + $0x70] sm:$0xff]
    %v362 = vld [vmem:[%s346 + $0x78] sm:$0xff]
    %363 = vmatprep.subr.mxu0 0.0
    %364 = vmatpush1.msra.mxu0 %v362
    %365 = vmatprep.subr.mxu0 0.0
    %366 = vmatpush1.msra.mxu0 %v361
    %367 = vmatprep.subr.mxu0 0.0
    %368 = vmatpush1.msra.mxu0 %v360
    %369 = vmatprep.subr.mxu0 0.0
    %370 = vmatpush1.msra.mxu0 %v359
    %371 = vmatprep.subr.mxu0 0.0
    %372 = vmatpush1.msra.mxu0 %v358
    %373 = vmatprep.subr.mxu0 0.0
    %374 = vmatpush1.msra.mxu0 %v357
    %375 = vmatprep.subr.mxu0 0.0
    %376 = vmatpush1.msra.mxu0 %v356
    %377 = vmatprep.subr.mxu0 0.0
    %378 = vmatpush1.msra.mxu0 %v355
    %379 = vmatprep.subr.mxu0 0.0
    %380 = vmatpush1.msra.mxu0 %v354
    %381 = vmatprep.subr.mxu0 0.0
    %382 = vmatpush1.msra.mxu0 %v353
    %383 = vmatprep.subr.mxu0 0.0
    %384 = vmatpush1.msra.mxu0 %v352
    %385 = vmatprep.subr.mxu0 0.0
    %386 = vmatpush1.msra.mxu0 %v351
    %387 = vmatprep.subr.mxu0 0.0
    %388 = vmatpush1.msra.mxu0 %v350
    %389 = vmatprep.subr.mxu0 0.0
    %390 = vmatpush1.msra.mxu0 %v349
    %391 = vmatprep.subr.mxu0 0.0
    %392 = vmatpush1.msra.mxu0 %v348
    %393 = vmatprep.subr.mxu0 0.0
    %394 = vmatpush1.msra.mxu0 %v347
    %395 = vmatprep.subr.mxu0 0.0
    %396 = vmatpush2.msra.mxu0 0.0
    %397 = vmatprep.subr.mxu0 0.0
    %398 = vmatpush2.msra.mxu0 0.0
    %399 = vmatprep.subr.mxu0 0.0
    %400 = vmatpush2.msra.mxu0 0.0
    %401 = vmatprep.subr.mxu0 0.0
    %402 = vmatpush2.msra.mxu0 0.0
    %403 = vmatprep.subr.mxu0 0.0
    %404 = vmatpush2.msra.mxu0 0.0
    %405 = vmatprep.subr.mxu0 0.0
    %406 = vmatpush2.msra.mxu0 0.0
    %407 = vmatprep.subr.mxu0 0.0
    %408 = vmatpush2.msra.mxu0 0.0
    %409 = vmatprep.subr.mxu0 0.0
    %410 = vmatpush2.msra.mxu0 0.0
    %411 = vmatprep.subr.mxu0 0.0
    %412 = vmatpush2.msra.mxu0 0.0
    %413 = vmatprep.subr.mxu0 0.0
    %414 = vmatpush2.msra.mxu0 0.0
    %415 = vmatprep.subr.mxu0 0.0
    %416 = vmatpush2.msra.mxu0 0.0
    %417 = vmatprep.subr.mxu0 0.0
    %418 = vmatpush2.msra.mxu0 0.0
    %419 = vmatprep.subr.mxu0 0.0
    %420 = vmatpush2.msra.mxu0 0.0
    %421 = vmatprep.subr.mxu0 0.0
    %422 = vmatpush2.msra.mxu0 0.0
    %423 = vmatprep.subr.mxu0 0.0
    %424 = vmatpush2.msra.mxu0 0.0
    %425 = vmatprep.subr.mxu0 0.0
    %426 = vmatpush2.msra.mxu0 0.0
    %427 = vmatprep.mubr.f32.mxu0 0.0
    %428 = vmatmul.mubr.f32.gmra.mxu0 %v344
    %v429 = vpop.f32.mrf.mxu0
    %v430 = vadd.f32 0.0, %v429
    %v431 = vpop.f32.mrf.mxu0
    %432 = vmatprep.mubr.f32.mxu0 0.0
    %433 = vmatmul.mubr.f32.gmra.mxu0 %v345
    %v434 = vpop.f32.mrf.mxu0
    %v435 = vadd.f32 0.0, %v434
    %v436 = vpop.f32.mrf.mxu0
    %437 = vdwg.mxu0
    %s438 = scalar_lea.vmem [#allocation8], 4
    %v439 = vld [vmem:[%s438] sm:$0x3]
    %v440 = vmul.f32 %v430, %v430
    %v441 = vmul.f32 %v435, %v435
    %v442 = vadd.f32 %v430, %v435
    %v443 = vrot.slane %v442, 4
    %v444 = vadd.f32 %v442, %v443
    %v445 = vrot.slane %v444, 2
    %v446 = vadd.f32 %v444, %v445
    %v447 = vrot.slane %v446, 1
    %v448 = vadd.f32 %v446, %v447
    %v449 = vadd.f32 %v440, %v441
    %v450 = vrot.slane %v449, 4
    %v451 = vadd.f32 %v449, %v450
    %v452 = vrot.slane %v451, 2
    %v453 = vadd.f32 %v451, %v452
    %v454 = vrot.slane %v453, 1
    %v455 = vadd.f32 %v453, %v454
    %v456 = vmul.f32 %v448, %v185
    %v457 = vmul.f32 %v455, %v185
    %v458 = vmul.f32 %v456, %v456
    %v459 = vsub.f32 %v457, %v458
    %v460 = vmax.f32 %v459, 0.0
    %v461 = vadd.f32 %v460, 1e-05
    %v462 = vrsqrt.pop %v461
    %v463 = vmul.f32 %v439, %v462
    %v464 = vmul.f32 %v456, %v463
    %v466 = vrot.slane %v464, 7
    %v468 = vsub.f32 %v439, %v466
    %v469 = vlaneseq
    %v470 = vshrl.u32 %v469, 7
    %v471 = vsub.s32 0, %v470
    %v472 = vrot.slane %v463, %v471
    %v473 = vmul.f32 %v430, %v472
    %v474 = vmul.f32 %v435, %v472
    %v475 = vlaneseq
    %v476 = vshrl.u32 %v475, 7
    %v477 = vsub.s32 1, %v476
    %v478 = vrot.slane %v468, %v477
    %v479 = vadd.f32 %v473, %v478
    %v480 = vadd.f32 %v474, %v478
    %s481 = scalar_lea.vmem [#allocation7], 384
    %v482 = vld [vmem:[%s481] sm:$0xff]
    %v483 = vld [vmem:[%s481 + $0x8] sm:$0xff]
    %v484 = vld [vmem:[%s481 + $0x10] sm:$0xff]
    %v485 = vld [vmem:[%s481 + $0x18] sm:$0xff]
    %v486 = vld [vmem:[%s481 + $0x20] sm:$0xff]
    %v487 = vld [vmem:[%s481 + $0x28] sm:$0xff]
    %v488 = vld [vmem:[%s481 + $0x30] sm:$0xff]
    %v489 = vld [vmem:[%s481 + $0x38] sm:$0xff]
    %v490 = vld [vmem:[%s481 + $0x40] sm:$0xff]
    %v491 = vld [vmem:[%s481 + $0x48] sm:$0xff]
    %v492 = vld [vmem:[%s481 + $0x50] sm:$0xff]
    %v493 = vld [vmem:[%s481 + $0x58] sm:$0xff]
    %v494 = vld [vmem:[%s481 + $0x60] sm:$0xff]
    %v495 = vld [vmem:[%s481 + $0x68] sm:$0xff]
    %v496 = vld [vmem:[%s481 + $0x70] sm:$0xff]
    %v497 = vld [vmem:[%s481 + $0x78] sm:$0xff]
    %498 = vmatprep.subr.mxu0 0.0
    %499 = vmatpush1.msra.mxu0 %v497
    %500 = vmatprep.subr.mxu0 0.0
    %501 = vmatpush1.msra.mxu0 %v496
    %502 = vmatprep.subr.mxu0 0.0
    %503 = vmatpush1.msra.mxu0 %v495
    %504 = vmatprep.subr.mxu0 0.0
    %505 = vmatpush1.msra.mxu0 %v494
    %506 = vmatprep.subr.mxu0 0.0
    %507 = vmatpush1.msra.mxu0 %v493
    %508 = vmatprep.subr.mxu0 0.0
    %509 = vmatpush1.msra.mxu0 %v492
    %510 = vmatprep.subr.mxu0 0.0
    %511 = vmatpush1.msra.mxu0 %v491
    %512 = vmatprep.subr.mxu0 0.0
    %513 = vmatpush1.msra.mxu0 %v490
    %514 = vmatprep.subr.mxu0 0.0
    %515 = vmatpush1.msra.mxu0 %v489
    %516 = vmatprep.subr.mxu0 0.0
    %517 = vmatpush1.msra.mxu0 %v488
    %518 = vmatprep.subr.mxu0 0.0
    %519 = vmatpush1.msra.mxu0 %v487
    %520 = vmatprep.subr.mxu0 0.0
    %521 = vmatpush1.msra.mxu0 %v486
    %522 = vmatprep.subr.mxu0 0.0
    %523 = vmatpush1.msra.mxu0 %v485
    %524 = vmatprep.subr.mxu0 0.0
    %525 = vmatpush1.msra.mxu0 %v484
    %526 = vmatprep.subr.mxu0 0.0
    %527 = vmatpush1.msra.mxu0 %v483
    %528 = vmatprep.subr.mxu0 0.0
    %529 = vmatpush1.msra.mxu0 %v482
    %530 = vmatprep.subr.mxu0 0.0
    %531 = vmatpush2.msra.mxu0 0.0
    %532 = vmatprep.subr.mxu0 0.0
    %533 = vmatpush2.msra.mxu0 0.0
    %534 = vmatprep.subr.mxu0 0.0
    %535 = vmatpush2.msra.mxu0 0.0
    %536 = vmatprep.subr.mxu0 0.0
    %537 = vmatpush2.msra.mxu0 0.0
    %538 = vmatprep.subr.mxu0 0.0
    %539 = vmatpush2.msra.mxu0 0.0
    %540 = vmatprep.subr.mxu0 0.0
    %541 = vmatpush2.msra.mxu0 0.0
    %542 = vmatprep.subr.mxu0 0.0
    %543 = vmatpush2.msra.mxu0 0.0
    %544 = vmatprep.subr.mxu0 0.0
    %545 = vmatpush2.msra.mxu0 0.0
    %546 = vmatprep.subr.mxu0 0.0
    %547 = vmatpush2.msra.mxu0 0.0
    %548 = vmatprep.subr.mxu0 0.0
    %549 = vmatpush2.msra.mxu0 0.0
    %550 = vmatprep.subr.mxu0 0.0
    %551 = vmatpush2.msra.mxu0 0.0
    %552 = vmatprep.subr.mxu0 0.0
    %553 = vmatpush2.msra.mxu0 0.0
    %554 = vmatprep.subr.mxu0 0.0
    %555 = vmatpush2.msra.mxu0 0.0
    %556 = vmatprep.subr.mxu0 0.0
    %557 = vmatpush2.msra.mxu0 0.0
    %558 = vmatprep.subr.mxu0 0.0
    %559 = vmatpush2.msra.mxu0 0.0
    %560 = vmatprep.subr.mxu0 0.0
    %561 = vmatpush2.msra.mxu0 0.0
    %562 = vmatprep.mubr.f32.mxu0 0.0
    %563 = vmatmul.mubr.f32.gmra.mxu0 %v479
    %v564 = vpop.f32.mrf.mxu0
    %v565 = vadd.f32 0.0, %v564
    %v566 = vpop.f32.mrf.mxu0
    %567 = vmatprep.mubr.f32.mxu0 0.0
    %568 = vmatmul.mubr.f32.gmra.mxu0 %v480
    %v569 = vpop.f32.mrf.mxu0
    %v570 = vadd.f32 0.0, %v569
    %v571 = vpop.f32.mrf.mxu0
    %572 = vdwg.mxu0
    %s573 = scalar_lea.vmem [#allocation8], 6
    %v574 = vld [vmem:[%s573] sm:$0x3]
    %v575 = vmul.f32 %v565, %v565
    %v576 = vmul.f32 %v570, %v570
    %v577 = vadd.f32 %v565, %v570
    %v578 = vrot.slane %v577, 4
    %v579 = vadd.f32 %v577, %v578
    %v580 = vrot.slane %v579, 2
    %v581 = vadd.f32 %v579, %v580
    %v582 = vrot.slane %v581, 1
    %v583 = vadd.f32 %v581, %v582
    %v584 = vadd.f32 %v575, %v576
    %v585 = vrot.slane %v584, 4
    %v586 = vadd.f32 %v584, %v585
    %v587 = vrot.slane %v586, 2
    %v588 = vadd.f32 %v586, %v587
    %v589 = vrot.slane %v588, 1
    %v590 = vadd.f32 %v588, %v589
    %v591 = vmul.f32 %v583, %v185
    %v592 = vmul.f32 %v590, %v185
    %v593 = vmul.f32 %v591, %v591
    %v594 = vsub.f32 %v592, %v593
    %v595 = vmax.f32 %v594, 0.0
    %v596 = vadd.f32 %v595, 1e-05
    %v597 = vrsqrt.pop %v596
    %v598 = vmul.f32 %v574, %v597
    %v599 = vmul.f32 %v591, %v598
    %v601 = vrot.slane %v599, 7
    %v603 = vsub.f32 %v574, %v601
    %v604 = vlaneseq
    %v605 = vshrl.u32 %v604, 7
    %v606 = vsub.s32 0, %v605
    %v607 = vrot.slane %v598, %v606
    %v608 = vmul.f32 %v565, %v607
    %v609 = vmul.f32 %v570, %v607
    %v610 = vlaneseq
    %v611 = vshrl.u32 %v610, 7
    %v612 = vsub.s32 1, %v611
    %v613 = vrot.slane %v603, %v612
    %v614 = vadd.f32 %v608, %v613
    %v615 = vadd.f32 %v609, %v613
    %s616 = scalar_lea.vmem [#allocation7], 512
    %v617 = vld [vmem:[%s616] sm:$0xff]
    %v618 = vld [vmem:[%s616 + $0x8] sm:$0xff]
    %v619 = vld [vmem:[%s616 + $0x10] sm:$0xff]
    %v620 = vld [vmem:[%s616 + $0x18] sm:$0xff]
    %v621 = vld [vmem:[%s616 + $0x20] sm:$0xff]
    %v622 = vld [vmem:[%s616 + $0x28] sm:$0xff]
    %v623 = vld [vmem:[%s616 + $0x30] sm:$0xff]
    %v624 = vld [vmem:[%s616 + $0x38] sm:$0xff]
    %v625 = vld [vmem:[%s616 + $0x40] sm:$0xff]
    %v626 = vld [vmem:[%s616 + $0x48] sm:$0xff]
    %v627 = vld [vmem:[%s616 + $0x50] sm:$0xff]
    %v628 = vld [vmem:[%s616 + $0x58] sm:$0xff]
    %v629 = vld [vmem:[%s616 + $0x60] sm:$0xff]
    %v630 = vld [vmem:[%s616 + $0x68] sm:$0xff]
    %v631 = vld [vmem:[%s616 + $0x70] sm:$0xff]
    %v632 = vld [vmem:[%s616 + $0x78] sm:$0xff]
    %633 = vmatprep.subr.mxu0 0.0
    %634 = vmatpush1.msra.mxu0 %v632
    %635 = vmatprep.subr.mxu0 0.0
    %636 = vmatpush1.msra.mxu0 %v631
    %637 = vmatprep.subr.mxu0 0.0
    %638 = vmatpush1.msra.mxu0 %v630
    %639 = vmatprep.subr.mxu0 0.0
    %640 = vmatpush1.msra.mxu0 %v629
    %641 = vmatprep.subr.mxu0 0.0
    %642 = vmatpush1.msra.mxu0 %v628
    %643 = vmatprep.subr.mxu0 0.0
    %644 = vmatpush1.msra.mxu0 %v627
    %645 = vmatprep.subr.mxu0 0.0
    %646 = vmatpush1.msra.mxu0 %v626
    %647 = vmatprep.subr.mxu0 0.0
    %648 = vmatpush1.msra.mxu0 %v625
    %649 = vmatprep.subr.mxu0 0.0
    %650 = vmatpush1.msra.mxu0 %v624
    %651 = vmatprep.subr.mxu0 0.0
    %652 = vmatpush1.msra.mxu0 %v623
    %653 = vmatprep.subr.mxu0 0.0
    %654 = vmatpush1.msra.mxu0 %v622
    %655 = vmatprep.subr.mxu0 0.0
    %656 = vmatpush1.msra.mxu0 %v621
    %657 = vmatprep.subr.mxu0 0.0
    %658 = vmatpush1.msra.mxu0 %v620
    %659 = vmatprep.subr.mxu0 0.0
    %660 = vmatpush1.msra.mxu0 %v619
    %661 = vmatprep.subr.mxu0 0.0
    %662 = vmatpush1.msra.mxu0 %v618
    %663 = vmatprep.subr.mxu0 0.0
    %664 = vmatpush1.msra.mxu0 %v617
    %665 = vmatprep.subr.mxu0 0.0
    %666 = vmatpush2.msra.mxu0 0.0
    %667 = vmatprep.subr.mxu0 0.0
    %668 = vmatpush2.msra.mxu0 0.0
    %669 = vmatprep.subr.mxu0 0.0
    %670 = vmatpush2.msra.mxu0 0.0
    %671 = vmatprep.subr.mxu0 0.0
    %672 = vmatpush2.msra.mxu0 0.0
    %673 = vmatprep.subr.mxu0 0.0
    %674 = vmatpush2.msra.mxu0 0.0
    %675 = vmatprep.subr.mxu0 0.0
    %676 = vmatpush2.msra.mxu0 0.0
    %677 = vmatprep.subr.mxu0 0.0
    %678 = vmatpush2.msra.mxu0 0.0
    %679 = vmatprep.subr.mxu0 0.0
    %680 = vmatpush2.msra.mxu0 0.0
    %681 = vmatprep.subr.mxu0 0.0
    %682 = vmatpush2.msra.mxu0 0.0
    %683 = vmatprep.subr.mxu0 0.0
    %684 = vmatpush2.msra.mxu0 0.0
    %685 = vmatprep.subr.mxu0 0.0
    %686 = vmatpush2.msra.mxu0 0.0
    %687 = vmatprep.subr.mxu0 0.0
    %688 = vmatpush2.msra.mxu0 0.0
    %689 = vmatprep.subr.mxu0 0.0
    %690 = vmatpush2.msra.mxu0 0.0
    %691 = vmatprep.subr.mxu0 0.0
    %692 = vmatpush2.msra.mxu0 0.0
    %693 = vmatprep.subr.mxu0 0.0
    %694 = vmatpush2.msra.mxu0 0.0
    %695 = vmatprep.subr.mxu0 0.0
    %696 = vmatpush2.msra.mxu0 0.0
    %697 = vmatprep.mubr.f32.mxu0 0.0
    %698 = vmatmul.mubr.f32.gmra.mxu0 %v614
    %v699 = vpop.f32.mrf.mxu0
    %v700 = vadd.f32 0.0, %v699
    %v701 = vpop.f32.mrf.mxu0
    %702 = vmatprep.mubr.f32.mxu0 0.0
    %703 = vmatmul.mubr.f32.gmra.mxu0 %v615
    %v704 = vpop.f32.mrf.mxu0
    %v705 = vadd.f32 0.0, %v704
    %v706 = vpop.f32.mrf.mxu0
    %707 = vdwg.mxu0
    %s708 = scalar_lea.vmem [#allocation8], 8
    %v709 = vld [vmem:[%s708] sm:$0x3]
    %v710 = vmul.f32 %v700, %v700
    %v711 = vmul.f32 %v705, %v705
    %v712 = vadd.f32 %v700, %v705
    %v713 = vrot.slane %v712, 4
    %v714 = vadd.f32 %v712, %v713
    %v715 = vrot.slane %v714, 2
    %v716 = vadd.f32 %v714, %v715
    %v717 = vrot.slane %v716, 1
    %v718 = vadd.f32 %v716, %v717
    %v719 = vadd.f32 %v710, %v711
    %v720 = vrot.slane %v719, 4
    %v721 = vadd.f32 %v719, %v720
    %v722 = vrot.slane %v721, 2
    %v723 = vadd.f32 %v721, %v722
    %v724 = vrot.slane %v723, 1
    %v725 = vadd.f32 %v723, %v724
    %v726 = vmul.f32 %v718, %v185
    %v727 = vmul.f32 %v725, %v185
    %v728 = vmul.f32 %v726, %v726
    %v729 = vsub.f32 %v727, %v728
    %v730 = vmax.f32 %v729, 0.0
    %v731 = vadd.f32 %v730, 1e-05
    %v732 = vrsqrt.pop %v731
    %v733 = vmul.f32 %v709, %v732
    %v734 = vmul.f32 %v726, %v733
    %v736 = vrot.slane %v734, 7
    %v738 = vsub.f32 %v709, %v736
    %v739 = vlaneseq
    %v740 = vshrl.u32 %v739, 7
    %v741 = vsub.s32 0, %v740
    %v742 = vrot.slane %v733, %v741
    %v743 = vmul.f32 %v700, %v742
    %v744 = vmul.f32 %v705, %v742
    %v745 = vlaneseq
    %v746 = vshrl.u32 %v745, 7
    %v747 = vsub.s32 1, %v746
    %v748 = vrot.slane %v738, %v747
    %v749 = vadd.f32 %v743, %v748
    %v750 = vadd.f32 %v744, %v748
    %s751 = scalar_lea.vmem [#allocation7], 640
    %v752 = vld [vmem:[%s751] sm:$0xff]
    %v753 = vld [vmem:[%s751 + $0x8] sm:$0xff]
    %v754 = vld [vmem:[%s751 + $0x10] sm:$0xff]
    %v755 = vld [vmem:[%s751 + $0x18] sm:$0xff]
    %v756 = vld [vmem:[%s751 + $0x20] sm:$0xff]
    %v757 = vld [vmem:[%s751 + $0x28] sm:$0xff]
    %v758 = vld [vmem:[%s751 + $0x30] sm:$0xff]
    %v759 = vld [vmem:[%s751 + $0x38] sm:$0xff]
    %v760 = vld [vmem:[%s751 + $0x40] sm:$0xff]
    %v761 = vld [vmem:[%s751 + $0x48] sm:$0xff]
    %v762 = vld [vmem:[%s751 + $0x50] sm:$0xff]
    %v763 = vld [vmem:[%s751 + $0x58] sm:$0xff]
    %v764 = vld [vmem:[%s751 + $0x60] sm:$0xff]
    %v765 = vld [vmem:[%s751 + $0x68] sm:$0xff]
    %v766 = vld [vmem:[%s751 + $0x70] sm:$0xff]
    %v767 = vld [vmem:[%s751 + $0x78] sm:$0xff]
    %768 = vmatprep.subr.mxu0 0.0
    %769 = vmatpush1.msra.mxu0 %v767
    %770 = vmatprep.subr.mxu0 0.0
    %771 = vmatpush1.msra.mxu0 %v766
    %772 = vmatprep.subr.mxu0 0.0
    %773 = vmatpush1.msra.mxu0 %v765
    %774 = vmatprep.subr.mxu0 0.0
    %775 = vmatpush1.msra.mxu0 %v764
    %776 = vmatprep.subr.mxu0 0.0
    %777 = vmatpush1.msra.mxu0 %v763
    %778 = vmatprep.subr.mxu0 0.0
    %779 = vmatpush1.msra.mxu0 %v762
    %780 = vmatprep.subr.mxu0 0.0
    %781 = vmatpush1.msra.mxu0 %v761
    %782 = vmatprep.subr.mxu0 0.0
    %783 = vmatpush1.msra.mxu0 %v760
    %784 = vmatprep.subr.mxu0 0.0
    %785 = vmatpush1.msra.mxu0 %v759
    %786 = vmatprep.subr.mxu0 0.0
    %787 = vmatpush1.msra.mxu0 %v758
    %788 = vmatprep.subr.mxu0 0.0
    %789 = vmatpush1.msra.mxu0 %v757
    %790 = vmatprep.subr.mxu0 0.0
    %791 = vmatpush1.msra.mxu0 %v756
    %792 = vmatprep.subr.mxu0 0.0
    %793 = vmatpush1.msra.mxu0 %v755
    %794 = vmatprep.subr.mxu0 0.0
    %795 = vmatpush1.msra.mxu0 %v754
    %796 = vmatprep.subr.mxu0 0.0
    %797 = vmatpush1.msra.mxu0 %v753
    %798 = vmatprep.subr.mxu0 0.0
    %799 = vmatpush1.msra.mxu0 %v752
    %800 = vmatprep.subr.mxu0 0.0
    %801 = vmatpush2.msra.mxu0 0.0
    %802 = vmatprep.subr.mxu0 0.0
    %803 = vmatpush2.msra.mxu0 0.0
    %804 = vmatprep.subr.mxu0 0.0
    %805 = vmatpush2.msra.mxu0 0.0
    %806 = vmatprep.subr.mxu0 0.0
    %807 = vmatpush2.msra.mxu0 0.0
    %808 = vmatprep.subr.mxu0 0.0
    %809 = vmatpush2.msra.mxu0 0.0
    %810 = vmatprep.subr.mxu0 0.0
    %811 = vmatpush2.msra.mxu0 0.0
    %812 = vmatprep.subr.mxu0 0.0
    %813 = vmatpush2.msra.mxu0 0.0
    %814 = vmatprep.subr.mxu0 0.0
    %815 = vmatpush2.msra.mxu0 0.0
    %816 = vmatprep.subr.mxu0 0.0
    %817 = vmatpush2.msra.mxu0 0.0
    %818 = vmatprep.subr.mxu0 0.0
    %819 = vmatpush2.msra.mxu0 0.0
    %820 = vmatprep.subr.mxu0 0.0
    %821 = vmatpush2.msra.mxu0 0.0
    %822 = vmatprep.subr.mxu0 0.0
    %823 = vmatpush2.msra.mxu0 0.0
    %824 = vmatprep.subr.mxu0 0.0
    %825 = vmatpush2.msra.mxu0 0.0
    %826 = vmatprep.subr.mxu0 0.0
    %827 = vmatpush2.msra.mxu0 0.0
    %828 = vmatprep.subr.mxu0 0.0
    %829 = vmatpush2.msra.mxu0 0.0
    %830 = vmatprep.subr.mxu0 0.0
    %831 = vmatpush2.msra.mxu0 0.0
    %832 = vmatprep.mubr.f32.mxu0 0.0
    %833 = vmatmul.mubr.f32.gmra.mxu0 %v749
    %v834 = vpop.f32.mrf.mxu0
    %v835 = vadd.f32 0.0, %v834
    %v836 = vpop.f32.mrf.mxu0
    %837 = vmatprep.mubr.f32.mxu0 0.0
    %838 = vmatmul.mubr.f32.gmra.mxu0 %v750
    %v839 = vpop.f32.mrf.mxu0
    %v840 = vadd.f32 0.0, %v839
    %v841 = vpop.f32.mrf.mxu0
    %842 = vdwg.mxu0
    %s843 = scalar_lea.vmem [#allocation8], 10
    %v844 = vld [vmem:[%s843] sm:$0x3]
    %v845 = vmul.f32 %v835, %v835
    %v846 = vmul.f32 %v840, %v840
    %v847 = vadd.f32 %v835, %v840
    %v848 = vrot.slane %v847, 4
    %v849 = vadd.f32 %v847, %v848
    %v850 = vrot.slane %v849, 2
    %v851 = vadd.f32 %v849, %v850
    %v852 = vrot.slane %v851, 1
    %v853 = vadd.f32 %v851, %v852
    %v854 = vadd.f32 %v845, %v846
    %v855 = vrot.slane %v854, 4
    %v856 = vadd.f32 %v854, %v855
    %v857 = vrot.slane %v856, 2
    %v858 = vadd.f32 %v856, %v857
    %v859 = vrot.slane %v858, 1
    %v860 = vadd.f32 %v858, %v859
    %v861 = vmul.f32 %v853, %v185
    %v862 = vmul.f32 %v860, %v185
    %v863 = vmul.f32 %v861, %v861
    %v864 = vsub.f32 %v862, %v863
    %v865 = vmax.f32 %v864, 0.0
    %v866 = vadd.f32 %v865, 1e-05
    %v867 = vrsqrt.pop %v866
    %v868 = vmul.f32 %v844, %v867
    %v869 = vmul.f32 %v861, %v868
    %v871 = vrot.slane %v869, 7
    %v873 = vsub.f32 %v844, %v871
    %v874 = vlaneseq
    %v875 = vshrl.u32 %v874, 7
    %v876 = vsub.s32 0, %v875
    %v877 = vrot.slane %v868, %v876
    %v878 = vmul.f32 %v835, %v877
    %v879 = vmul.f32 %v840, %v877
    %v880 = vlaneseq
    %v881 = vshrl.u32 %v880, 7
    %v882 = vsub.s32 1, %v881
    %v883 = vrot.slane %v873, %v882
    %v884 = vadd.f32 %v878, %v883
    %v885 = vadd.f32 %v879, %v883
    %s886 = scalar_lea.vmem [#allocation7], 768
    %v887 = vld [vmem:[%s886] sm:$0xff]
    %v888 = vld [vmem:[%s886 + $0x8] sm:$0xff]
    %v889 = vld [vmem:[%s886 + $0x10] sm:$0xff]
    %v890 = vld [vmem:[%s886 + $0x18] sm:$0xff]
    %v891 = vld [vmem:[%s886 + $0x20] sm:$0xff]
    %v892 = vld [vmem:[%s886 + $0x28] sm:$0xff]
    %v893 = vld [vmem:[%s886 + $0x30] sm:$0xff]
    %v894 = vld [vmem:[%s886 + $0x38] sm:$0xff]
    %v895 = vld [vmem:[%s886 + $0x40] sm:$0xff]
    %v896 = vld [vmem:[%s886 + $0x48] sm:$0xff]
    %v897 = vld [vmem:[%s886 + $0x50] sm:$0xff]
    %v898 = vld [vmem:[%s886 + $0x58] sm:$0xff]
    %v899 = vld [vmem:[%s886 + $0x60] sm:$0xff]
    %v900 = vld [vmem:[%s886 + $0x68] sm:$0xff]
    %v901 = vld [vmem:[%s886 + $0x70] sm:$0xff]
    %v902 = vld [vmem:[%s886 + $0x78] sm:$0xff]
    %903 = vmatprep.subr.mxu0 0.0
    %904 = vmatpush1.msra.mxu0 %v902
    %905 = vmatprep.subr.mxu0 0.0
    %906 = vmatpush1.msra.mxu0 %v901
    %907 = vmatprep.subr.mxu0 0.0
    %908 = vmatpush1.msra.mxu0 %v900
    %909 = vmatprep.subr.mxu0 0.0
    %910 = vmatpush1.msra.mxu0 %v899
    %911 = vmatprep.subr.mxu0 0.0
    %912 = vmatpush1.msra.mxu0 %v898
    %913 = vmatprep.subr.mxu0 0.0
    %914 = vmatpush1.msra.mxu0 %v897
    %915 = vmatprep.subr.mxu0 0.0
    %916 = vmatpush1.msra.mxu0 %v896
    %917 = vmatprep.subr.mxu0 0.0
    %918 = vmatpush1.msra.mxu0 %v895
    %919 = vmatprep.subr.mxu0 0.0
    %920 = vmatpush1.msra.mxu0 %v894
    %921 = vmatprep.subr.mxu0 0.0
    %922 = vmatpush1.msra.mxu0 %v893
    %923 = vmatprep.subr.mxu0 0.0
    %924 = vmatpush1.msra.mxu0 %v892
    %925 = vmatprep.subr.mxu0 0.0
    %926 = vmatpush1.msra.mxu0 %v891
    %927 = vmatprep.subr.mxu0 0.0
    %928 = vmatpush1.msra.mxu0 %v890
    %929 = vmatprep.subr.mxu0 0.0
    %930 = vmatpush1.msra.mxu0 %v889
    %931 = vmatprep.subr.mxu0 0.0
    %932 = vmatpush1.msra.mxu0 %v888
    %933 = vmatprep.subr.mxu0 0.0
    %934 = vmatpush1.msra.mxu0 %v887
    %935 = vmatprep.subr.mxu0 0.0
    %936 = vmatpush2.msra.mxu0 0.0
    %937 = vmatprep.subr.mxu0 0.0
    %938 = vmatpush2.msra.mxu0 0.0
    %939 = vmatprep.subr.mxu0 0.0
    %940 = vmatpush2.msra.mxu0 0.0
    %941 = vmatprep.subr.mxu0 0.0
    %942 = vmatpush2.msra.mxu0 0.0
    %943 = vmatprep.subr.mxu0 0.0
    %944 = vmatpush2.msra.mxu0 0.0
    %945 = vmatprep.subr.mxu0 0.0
    %946 = vmatpush2.msra.mxu0 0.0
    %947 = vmatprep.subr.mxu0 0.0
    %948 = vmatpush2.msra.mxu0 0.0
    %949 = vmatprep.subr.mxu0 0.0
    %950 = vmatpush2.msra.mxu0 0.0
    %951 = vmatprep.subr.mxu0 0.0
    %952 = vmatpush2.msra.mxu0 0.0
    %953 = vmatprep.subr.mxu0 0.0
    %954 = vmatpush2.msra.mxu0 0.0
    %955 = vmatprep.subr.mxu0 0.0
    %956 = vmatpush2.msra.mxu0 0.0
    %957 = vmatprep.subr.mxu0 0.0
    %958 = vmatpush2.msra.mxu0 0.0
    %959 = vmatprep.subr.mxu0 0.0
    %960 = vmatpush2.msra.mxu0 0.0
    %961 = vmatprep.subr.mxu0 0.0
    %962 = vmatpush2.msra.mxu0 0.0
    %963 = vmatprep.subr.mxu0 0.0
    %964 = vmatpush2.msra.mxu0 0.0
    %965 = vmatprep.subr.mxu0 0.0
    %966 = vmatpush2.msra.mxu0 0.0
    %967 = vmatprep.mubr.f32.mxu0 0.0
    %968 = vmatmul.mubr.f32.gmra.mxu0 %v884
    %v969 = vpop.f32.mrf.mxu0
    %v970 = vadd.f32 0.0, %v969
    %v971 = vpop.f32.mrf.mxu0
    %972 = vmatprep.mubr.f32.mxu0 0.0
    %973 = vmatmul.mubr.f32.gmra.mxu0 %v885
    %v974 = vpop.f32.mrf.mxu0
    %v975 = vadd.f32 0.0, %v974
    %v976 = vpop.f32.mrf.mxu0
    %977 = vdwg.mxu0
    %s978 = scalar_lea.vmem [#allocation8], 12
    %v979 = vld [vmem:[%s978] sm:$0x3]
    %v980 = vmul.f32 %v970, %v970
    %v981 = vmul.f32 %v975, %v975
    %v982 = vadd.f32 %v970, %v975
    %v983 = vrot.slane %v982, 4
    %v984 = vadd.f32 %v982, %v983
    %v985 = vrot.slane %v984, 2
    %v986 = vadd.f32 %v984, %v985
    %v987 = vrot.slane %v986, 1
    %v988 = vadd.f32 %v986, %v987
    %v989 = vadd.f32 %v980, %v981
    %v990 = vrot.slane %v989, 4
    %v991 = vadd.f32 %v989, %v990
    %v992 = vrot.slane %v991, 2
    %v993 = vadd.f32 %v991, %v992
    %v994 = vrot.slane %v993, 1
    %v995 = vadd.f32 %v993, %v994
    %v996 = vmul.f32 %v988, %v185
    %v997 = vmul.f32 %v995, %v185
    %v998 = vmul.f32 %v996, %v996
    %v999 = vsub.f32 %v997, %v998
    %v1000 = vmax.f32 %v999, 0.0
    %v1001 = vadd.f32 %v1000, 1e-05
    %v1002 = vrsqrt.pop %v1001
    %v1003 = vmul.f32 %v979, %v1002
    %v1004 = vmul.f32 %v996, %v1003
    %v1006 = vrot.slane %v1004, 7
    %v1008 = vsub.f32 %v979, %v1006
    %v1009 = vlaneseq
    %v1010 = vshrl.u32 %v1009, 7
    %v1011 = vsub.s32 0, %v1010
    %v1012 = vrot.slane %v1003, %v1011
    %v1013 = vmul.f32 %v970, %v1012
    %v1014 = vmul.f32 %v975, %v1012
    %v1015 = vlaneseq
    %v1016 = vshrl.u32 %v1015, 7
    %v1017 = vsub.s32 1, %v1016
    %v1018 = vrot.slane %v1008, %v1017
    %v1019 = vadd.f32 %v1013, %v1018
    %v1020 = vadd.f32 %v1014, %v1018
    %v1021 = vmax.f32 %v1019, 0.0
    %v1022 = vmax.f32 %v1020, 0.0
    %s1023 = scalar_lea.vmem [#allocation8], 30
    %v1024 = vld [vmem:[%s1023] sm:$0x3]
    %s1025 = scalar_lea.vmem [#allocation7], 896
    %v1026 = vld [vmem:[%s1025] sm:$0xff]
    %v1027 = vld [vmem:[%s1025 + $0x8] sm:$0xff]
    %v1028 = vld [vmem:[%s1025 + $0x10] sm:$0xff]
    %v1029 = vld [vmem:[%s1025 + $0x18] sm:$0xff]
    %v1030 = vld [vmem:[%s1025 + $0x20] sm:$0xff]
    %v1031 = vld [vmem:[%s1025 + $0x28] sm:$0xff]
    %v1032 = vld [vmem:[%s1025 + $0x30] sm:$0xff]
    %v1033 = vld [vmem:[%s1025 + $0x38] sm:$0xff]
    %v1034 = vld [vmem:[%s1025 + $0x40] sm:$0xff]
    %v1035 = vld [vmem:[%s1025 + $0x48] sm:$0xff]
    %v1036 = vld [vmem:[%s1025 + $0x50] sm:$0xff]
    %v1037 = vld [vmem:[%s1025 + $0x58] sm:$0xff]
    %v1038 = vld [vmem:[%s1025 + $0x60] sm:$0xff]
    %v1039 = vld [vmem:[%s1025 + $0x68] sm:$0xff]
    %v1040 = vld [vmem:[%s1025 + $0x70] sm:$0xff]
    %v1041 = vld [vmem:[%s1025 + $0x78] sm:$0xff]
    %v1042 = vlaneseq
    %v1043 = vshrl.u32 %v1042, 7
    %v1044 = vsub.s32 0, %v1043
    %v1045 = vrot.slane %v1024, %v1044
    %1046 = vmatprep.subr.mxu0 0.0
    %1047 = vmatpush1.msra.mxu0 %v1041
    %1048 = vmatprep.subr.mxu0 0.0
    %1049 = vmatpush1.msra.mxu0 %v1040
    %1050 = vmatprep.subr.mxu0 0.0
    %1051 = vmatpush1.msra.mxu0 %v1039
    %1052 = vmatprep.subr.mxu0 0.0
    %1053 = vmatpush1.msra.mxu0 %v1038
    %1054 = vmatprep.subr.mxu0 0.0
    %1055 = vmatpush1.msra.mxu0 %v1037
    %1056 = vmatprep.subr.mxu0 0.0
    %1057 = vmatpush1.msra.mxu0 %v1036
    %1058 = vmatprep.subr.mxu0 0.0
    %1059 = vmatpush1.msra.mxu0 %v1035
    %1060 = vmatprep.subr.mxu0 0.0
    %1061 = vmatpush1.msra.mxu0 %v1034
    %1062 = vmatprep.subr.mxu0 0.0
    %1063 = vmatpush1.msra.mxu0 %v1033
    %1064 = vmatprep.subr.mxu0 0.0
    %1065 = vmatpush1.msra.mxu0 %v1032
    %1066 = vmatprep.subr.mxu0 0.0
    %1067 = vmatpush1.msra.mxu0 %v1031
    %1068 = vmatprep.subr.mxu0 0.0
    %1069 = vmatpush1.msra.mxu0 %v1030
    %1070 = vmatprep.subr.mxu0 0.0
    %1071 = vmatpush1.msra.mxu0 %v1029
    %1072 = vmatprep.subr.mxu0 0.0
    %1073 = vmatpush1.msra.mxu0 %v1028
    %1074 = vmatprep.subr.mxu0 0.0
    %1075 = vmatpush1.msra.mxu0 %v1027
    %1076 = vmatprep.subr.mxu0 0.0
    %1077 = vmatpush1.msra.mxu0 %v1026
    %1078 = vmatprep.subr.mxu0 0.0
    %1079 = vmatpush2.msra.mxu0 0.0
    %1080 = vmatprep.subr.mxu0 0.0
    %1081 = vmatpush2.msra.mxu0 0.0
    %1082 = vmatprep.subr.mxu0 0.0
    %1083 = vmatpush2.msra.mxu0 0.0
    %1084 = vmatprep.subr.mxu0 0.0
    %1085 = vmatpush2.msra.mxu0 0.0
    %1086 = vmatprep.subr.mxu0 0.0
    %1087 = vmatpush2.msra.mxu0 0.0
    %1088 = vmatprep.subr.mxu0 0.0
    %1089 = vmatpush2.msra.mxu0 0.0
    %1090 = vmatprep.subr.mxu0 0.0
    %1091 = vmatpush2.msra.mxu0 0.0
    %1092 = vmatprep.subr.mxu0 0.0
    %1093 = vmatpush2.msra.mxu0 0.0
    %1094 = vmatprep.subr.mxu0 0.0
    %1095 = vmatpush2.msra.mxu0 0.0
    %1096 = vmatprep.subr.mxu0 0.0
    %1097 = vmatpush2.msra.mxu0 0.0
    %1098 = vmatprep.subr.mxu0 0.0
    %1099 = vmatpush2.msra.mxu0 0.0
    %1100 = vmatprep.subr.mxu0 0.0
    %1101 = vmatpush2.msra.mxu0 0.0
    %1102 = vmatprep.subr.mxu0 0.0
    %1103 = vmatpush2.msra.mxu0 0.0
    %1104 = vmatprep.subr.mxu0 0.0
    %1105 = vmatpush2.msra.mxu0 0.0
    %1106 = vmatprep.subr.mxu0 0.0
    %1107 = vmatpush2.msra.mxu0 0.0
    %1108 = vmatprep.subr.mxu0 0.0
    %1109 = vmatpush2.msra.mxu0 0.0
    %1110 = vmatprep.mubr.f32.mxu0 0.0
    %1111 = vmatmul.mubr.f32.gmra.mxu0 %v1021
    %v1112 = vpop.f32.mrf.mxu0
    %v1113 = vadd.f32 %v1045, %v1112
    %v1114 = vpop.f32.mrf.mxu0
    %1115 = vmatprep.mubr.f32.mxu0 0.0
    %1116 = vmatmul.mubr.f32.gmra.mxu0 %v1022
    %v1117 = vpop.f32.mrf.mxu0
    %v1118 = vadd.f32 %v1045, %v1117
    %v1119 = vpop.f32.mrf.mxu0
    %1120 = vdwg.mxu0
    %s1121 = scalar_lea.vmem [#allocation10], 16
    %1122 = vst [vmem:[%s1121] sm:$0xff] %v1113
    %1123 = vst [vmem:[%s1121 + $0x8] sm:$0xff] %v1118
    %v1124 = vld [vmem:[#allocation5] sm:$0xff]
    %v1125 = vld [vmem:[#allocation5 + $0x8] sm:$0xff]
    %v1126 = vmul.f32 %v1113, 0.5
    %v1127 = vmul.f32 %v1118, 0.5
    %v1128 = vmul.f32 %v1126, 1.442695
    %v1129 = vpow.pop %v1128
    %v1130 = vmul.f32 %v1127, 1.442695
    %v1131 = vpow.pop %v1130
    %v1132 = vmul.f32 %v1124, %v1129
    %v1133 = vmul.f32 %v1125, %v1131
    %vm1134 = vcmp.lt.s32.totalorder %v74, 3
    %v1135 = vsel %vm1134, %v1113, 0.0
    %v1136 = vsel %vm1134, %v1118, 0.0
    %v1137 = vadd.f32 %v1135, %v1132
    %v1138 = vadd.f32 %v1136, %v1133
    %s1139 = scalar_lea.vmem [#allocation7], 1024
    %v1140 = vld [vmem:[%s1139] sm:$0xff]
    %v1141 = vld [vmem:[%s1139 + $0x8] sm:$0xff]
    %v1142 = vld [vmem:[%s1139 + $0x10] sm:$0xff]
    %v1143 = vld [vmem:[%s1139 + $0x18] sm:$0xff]
    %v1144 = vld [vmem:[%s1139 + $0x20] sm:$0xff]
    %v1145 = vld [vmem:[%s1139 + $0x28] sm:$0xff]
    %v1146 = vld [vmem:[%s1139 + $0x30] sm:$0xff]
    %v1147 = vld [vmem:[%s1139 + $0x38] sm:$0xff]
    %v1148 = vld [vmem:[%s1139 + $0x40] sm:$0xff]
    %v1149 = vld [vmem:[%s1139 + $0x48] sm:$0xff]
    %v1150 = vld [vmem:[%s1139 + $0x50] sm:$0xff]
    %v1151 = vld [vmem:[%s1139 + $0x58] sm:$0xff]
    %v1152 = vld [vmem:[%s1139 + $0x60] sm:$0xff]
    %v1153 = vld [vmem:[%s1139 + $0x68] sm:$0xff]
    %v1154 = vld [vmem:[%s1139 + $0x70] sm:$0xff]
    %v1155 = vld [vmem:[%s1139 + $0x78] sm:$0xff]
    %1156 = vmatprep.subr.mxu0 0.0
    %1157 = vmatpush1.msra.mxu0 %v1155
    %1158 = vmatprep.subr.mxu0 0.0
    %1159 = vmatpush1.msra.mxu0 %v1154
    %1160 = vmatprep.subr.mxu0 0.0
    %1161 = vmatpush1.msra.mxu0 %v1153
    %1162 = vmatprep.subr.mxu0 0.0
    %1163 = vmatpush1.msra.mxu0 %v1152
    %1164 = vmatprep.subr.mxu0 0.0
    %1165 = vmatpush1.msra.mxu0 %v1151
    %1166 = vmatprep.subr.mxu0 0.0
    %1167 = vmatpush1.msra.mxu0 %v1150
    %1168 = vmatprep.subr.mxu0 0.0
    %1169 = vmatpush1.msra.mxu0 %v1149
    %1170 = vmatprep.subr.mxu0 0.0
    %1171 = vmatpush1.msra.mxu0 %v1148
    %1172 = vmatprep.subr.mxu0 0.0
    %1173 = vmatpush1.msra.mxu0 %v1147
    %1174 = vmatprep.subr.mxu0 0.0
    %1175 = vmatpush1.msra.mxu0 %v1146
    %1176 = vmatprep.subr.mxu0 0.0
    %1177 = vmatpush1.msra.mxu0 %v1145
    %1178 = vmatprep.subr.mxu0 0.0
    %1179 = vmatpush1.msra.mxu0 %v1144
    %1180 = vmatprep.subr.mxu0 0.0
    %1181 = vmatpush1.msra.mxu0 %v1143
    %1182 = vmatprep.subr.mxu0 0.0
    %1183 = vmatpush1.msra.mxu0 %v1142
    %1184 = vmatprep.subr.mxu0 0.0
    %1185 = vmatpush1.msra.mxu0 %v1141
    %1186 = vmatprep.subr.mxu0 0.0
    %1187 = vmatpush1.msra.mxu0 %v1140
    %1188 = vmatprep.subr.mxu0 0.0
    %1189 = vmatpush2.msra.mxu0 0.0
    %1190 = vmatprep.subr.mxu0 0.0
    %1191 = vmatpush2.msra.mxu0 0.0
    %1192 = vmatprep.subr.mxu0 0.0
    %1193 = vmatpush2.msra.mxu0 0.0
    %1194 = vmatprep.subr.mxu0 0.0
    %1195 = vmatpush2.msra.mxu0 0.0
    %1196 = vmatprep.subr.mxu0 0.0
    %1197 = vmatpush2.msra.mxu0 0.0
    %1198 = vmatprep.subr.mxu0 0.0
    %1199 = vmatpush2.msra.mxu0 0.0
    %1200 = vmatprep.subr.mxu0 0.0
    %1201 = vmatpush2.msra.mxu0 0.0
    %1202 = vmatprep.subr.mxu0 0.0
    %1203 = vmatpush2.msra.mxu0 0.0
    %1204 = vmatprep.subr.mxu0 0.0
    %1205 = vmatpush2.msra.mxu0 0.0
    %1206 = vmatprep.subr.mxu0 0.0
    %1207 = vmatpush2.msra.mxu0 0.0
    %1208 = vmatprep.subr.mxu0 0.0
    %1209 = vmatpush2.msra.mxu0 0.0
    %1210 = vmatprep.subr.mxu0 0.0
    %1211 = vmatpush2.msra.mxu0 0.0
    %1212 = vmatprep.subr.mxu0 0.0
    %1213 = vmatpush2.msra.mxu0 0.0
    %1214 = vmatprep.subr.mxu0 0.0
    %1215 = vmatpush2.msra.mxu0 0.0
    %1216 = vmatprep.subr.mxu0 0.0
    %1217 = vmatpush2.msra.mxu0 0.0
    %1218 = vmatprep.subr.mxu0 0.0
    %1219 = vmatpush2.msra.mxu0 0.0
    %1220 = vmatprep.mubr.f32.mxu0 0.0
    %1221 = vmatmul.mubr.f32.gmra.mxu0 %v1137
    %v1222 = vpop.f32.mrf.mxu0
    %v1223 = vadd.f32 0.0, %v1222
    %v1224 = vpop.f32.mrf.mxu0
    %1225 = vmatprep.mubr.f32.mxu0 0.0
    %1226 = vmatmul.mubr.f32.gmra.mxu0 %v1138
    %v1227 = vpop.f32.mrf.mxu0
    %v1228 = vadd.f32 0.0, %v1227
    %v1229 = vpop.f32.mrf.mxu0
    %1230 = vdwg.mxu0
    %s1231 = scalar_lea.vmem [#allocation8], 14
    %v1232 = vld [vmem:[%s1231] sm:$0x3]
    %v1233 = vmul.f32 %v1223, %v1223
    %v1234 = vmul.f32 %v1228, %v1228
    %v1235 = vadd.f32 %v1223, %v1228
    %v1236 = vrot.slane %v1235, 4
    %v1237 = vadd.f32 %v1235, %v1236
    %v1238 = vrot.slane %v1237, 2
    %v1239 = vadd.f32 %v1237, %v1238
    %v1240 = vrot.slane %v1239, 1
    %v1241 = vadd.f32 %v1239, %v1240
    %v1242 = vadd.f32 %v1233, %v1234
    %v1243 = vrot.slane %v1242, 4
    %v1244 = vadd.f32 %v1242, %v1243
    %v1245 = vrot.slane %v1244, 2
    %v1246 = vadd.f32 %v1244, %v1245
    %v1247 = vrot.slane %v1246, 1
    %v1248 = vadd.f32 %v1246, %v1247
    %v1249 = vmul.f32 %v1241, %v185
    %v1250 = vmul.f32 %v1248, %v185
    %v1251 = vmul.f32 %v1249, %v1249
    %v1252 = vsub.f32 %v1250, %v1251
    %v1253 = vmax.f32 %v1252, 0.0
    %v1254 = vadd.f32 %v1253, 1e-05
    %v1255 = vrsqrt.pop %v1254
    %v1256 = vmul.f32 %v1232, %v1255
    %v1257 = vmul.f32 %v1249, %v1256
    %v1259 = vrot.slane %v1257, 7
    %v1261 = vsub.f32 %v1232, %v1259
    %v1262 = vlaneseq
    %v1263 = vshrl.u32 %v1262, 7
    %v1264 = vsub.s32 0, %v1263
    %v1265 = vrot.slane %v1256, %v1264
    %v1266 = vmul.f32 %v1223, %v1265
    %v1267 = vmul.f32 %v1228, %v1265
    %v1268 = vlaneseq
    %v1269 = vshrl.u32 %v1268, 7
    %v1270 = vsub.s32 1, %v1269
    %v1271 = vrot.slane %v1261, %v1270
    %v1272 = vadd.f32 %v1266, %v1271
    %v1273 = vadd.f32 %v1267, %v1271
    %v1274 = vmax.f32 %v1272, 0.0
    %v1275 = vmax.f32 %v1273, 0.0
    %s1276 = scalar_lea.vmem [#allocation7], 1152
    %v1277 = vld [vmem:[%s1276] sm:$0xff]
    %v1278 = vld [vmem:[%s1276 + $0x8] sm:$0xff]
    %v1279 = vld [vmem:[%s1276 + $0x10] sm:$0xff]
    %v1280 = vld [vmem:[%s1276 + $0x18] sm:$0xff]
    %v1281 = vld [vmem:[%s1276 + $0x20] sm:$0xff]
    %v1282 = vld [vmem:[%s1276 + $0x28] sm:$0xff]
    %v1283 = vld [vmem:[%s1276 + $0x30] sm:$0xff]
    %v1284 = vld [vmem:[%s1276 + $0x38] sm:$0xff]
    %v1285 = vld [vmem:[%s1276 + $0x40] sm:$0xff]
    %v1286 = vld [vmem:[%s1276 + $0x48] sm:$0xff]
    %v1287 = vld [vmem:[%s1276 + $0x50] sm:$0xff]
    %v1288 = vld [vmem:[%s1276 + $0x58] sm:$0xff]
    %v1289 = vld [vmem:[%s1276 + $0x60] sm:$0xff]
    %v1290 = vld [vmem:[%s1276 + $0x68] sm:$0xff]
    %v1291 = vld [vmem:[%s1276 + $0x70] sm:$0xff]
    %v1292 = vld [vmem:[%s1276 + $0x78] sm:$0xff]
    %1293 = vmatprep.subr.mxu0 0.0
    %1294 = vmatpush1.msra.mxu0 %v1292
    %1295 = vmatprep.subr.mxu0 0.0
    %1296 = vmatpush1.msra.mxu0 %v1291
    %1297 = vmatprep.subr.mxu0 0.0
    %1298 = vmatpush1.msra.mxu0 %v1290
    %1299 = vmatprep.subr.mxu0 0.0
    %1300 = vmatpush1.msra.mxu0 %v1289
    %1301 = vmatprep.subr.mxu0 0.0
    %1302 = vmatpush1.msra.mxu0 %v1288
    %1303 = vmatprep.subr.mxu0 0.0
    %1304 = vmatpush1.msra.mxu0 %v1287
    %1305 = vmatprep.subr.mxu0 0.0
    %1306 = vmatpush1.msra.mxu0 %v1286
    %1307 = vmatprep.subr.mxu0 0.0
    %1308 = vmatpush1.msra.mxu0 %v1285
    %1309 = vmatprep.subr.mxu0 0.0
    %1310 = vmatpush1.msra.mxu0 %v1284
    %1311 = vmatprep.subr.mxu0 0.0
    %1312 = vmatpush1.msra.mxu0 %v1283
    %1313 = vmatprep.subr.mxu0 0.0
    %1314 = vmatpush1.msra.mxu0 %v1282
    %1315 = vmatprep.subr.mxu0 0.0
    %1316 = vmatpush1.msra.mxu0 %v1281
    %1317 = vmatprep.subr.mxu0 0.0
    %1318 = vmatpush1.msra.mxu0 %v1280
    %1319 = vmatprep.subr.mxu0 0.0
    %1320 = vmatpush1.msra.mxu0 %v1279
    %1321 = vmatprep.subr.mxu0 0.0
    %1322 = vmatpush1.msra.mxu0 %v1278
    %1323 = vmatprep.subr.mxu0 0.0
    %1324 = vmatpush1.msra.mxu0 %v1277
    %1325 = vmatprep.subr.mxu0 0.0
    %1326 = vmatpush2.msra.mxu0 0.0
    %1327 = vmatprep.subr.mxu0 0.0
    %1328 = vmatpush2.msra.mxu0 0.0
    %1329 = vmatprep.subr.mxu0 0.0
    %1330 = vmatpush2.msra.mxu0 0.0
    %1331 = vmatprep.subr.mxu0 0.0
    %1332 = vmatpush2.msra.mxu0 0.0
    %1333 = vmatprep.subr.mxu0 0.0
    %1334 = vmatpush2.msra.mxu0 0.0
    %1335 = vmatprep.subr.mxu0 0.0
    %1336 = vmatpush2.msra.mxu0 0.0
    %1337 = vmatprep.subr.mxu0 0.0
    %1338 = vmatpush2.msra.mxu0 0.0
    %1339 = vmatprep.subr.mxu0 0.0
    %1340 = vmatpush2.msra.mxu0 0.0
    %1341 = vmatprep.subr.mxu0 0.0
    %1342 = vmatpush2.msra.mxu0 0.0
    %1343 = vmatprep.subr.mxu0 0.0
    %1344 = vmatpush2.msra.mxu0 0.0
    %1345 = vmatprep.subr.mxu0 0.0
    %1346 = vmatpush2.msra.mxu0 0.0
    %1347 = vmatprep.subr.mxu0 0.0
    %1348 = vmatpush2.msra.mxu0 0.0
    %1349 = vmatprep.subr.mxu0 0.0
    %1350 = vmatpush2.msra.mxu0 0.0
    %1351 = vmatprep.subr.mxu0 0.0
    %1352 = vmatpush2.msra.mxu0 0.0
    %1353 = vmatprep.subr.mxu0 0.0
    %1354 = vmatpush2.msra.mxu0 0.0
    %1355 = vmatprep.subr.mxu0 0.0
    %1356 = vmatpush2.msra.mxu0 0.0
    %1357 = vmatprep.mubr.f32.mxu0 0.0
    %1358 = vmatmul.mubr.f32.gmra.mxu0 %v1274
    %v1359 = vpop.f32.mrf.mxu0
    %v1360 = vadd.f32 0.0, %v1359
    %v1361 = vpop.f32.mrf.mxu0
    %1362 = vmatprep.mubr.f32.mxu0 0.0
    %1363 = vmatmul.mubr.f32.gmra.mxu0 %v1275
    %v1364 = vpop.f32.mrf.mxu0
    %v1365 = vadd.f32 0.0, %v1364
    %v1366 = vpop.f32.mrf.mxu0
    %1367 = vdwg.mxu0
    %s1368 = scalar_lea.vmem [#allocation8], 16
    %v1369 = vld [vmem:[%s1368] sm:$0x3]
    %v1370 = vmul.f32 %v1360, %v1360
    %v1371 = vmul.f32 %v1365, %v1365
    %v1372 = vadd.f32 %v1360, %v1365
    %v1373 = vrot.slane %v1372, 4
    %v1374 = vadd.f32 %v1372, %v1373
    %v1375 = vrot.slane %v1374, 2
    %v1376 = vadd.f32 %v1374, %v1375
    %v1377 = vrot.slane %v1376, 1
    %v1378 = vadd.f32 %v1376, %v1377
    %v1379 = vadd.f32 %v1370, %v1371
    %v1380 = vrot.slane %v1379, 4
    %v1381 = vadd.f32 %v1379, %v1380
    %v1382 = vrot.slane %v1381, 2
    %v1383 = vadd.f32 %v1381, %v1382
    %v1384 = vrot.slane %v1383, 1
    %v1385 = vadd.f32 %v1383, %v1384
    %v1386 = vmul.f32 %v1378, %v185
    %v1387 = vmul.f32 %v1385, %v185
    %v1388 = vmul.f32 %v1386, %v1386
    %v1389 = vsub.f32 %v1387, %v1388
    %v1390 = vmax.f32 %v1389, 0.0
    %v1391 = vadd.f32 %v1390, 1e-05
    %v1392 = vrsqrt.pop %v1391
    %v1393 = vmul.f32 %v1369, %v1392
    %v1394 = vmul.f32 %v1386, %v1393
    %v1396 = vrot.slane %v1394, 7
    %v1398 = vsub.f32 %v1369, %v1396
    %v1399 = vlaneseq
    %v1400 = vshrl.u32 %v1399, 7
    %v1401 = vsub.s32 0, %v1400
    %v1402 = vrot.slane %v1393, %v1401
    %v1403 = vmul.f32 %v1360, %v1402
    %v1404 = vmul.f32 %v1365, %v1402
    %v1405 = vlaneseq
    %v1406 = vshrl.u32 %v1405, 7
    %v1407 = vsub.s32 1, %v1406
    %v1408 = vrot.slane %v1398, %v1407
    %v1409 = vadd.f32 %v1403, %v1408
    %v1410 = vadd.f32 %v1404, %v1408
    %v1411 = vmax.f32 %v1409, 0.0
    %v1412 = vmax.f32 %v1410, 0.0
    %s1413 = scalar_lea.vmem [#allocation7], 1280
    %v1414 = vld [vmem:[%s1413] sm:$0xff]
    %v1415 = vld [vmem:[%s1413 + $0x8] sm:$0xff]
    %v1416 = vld [vmem:[%s1413 + $0x10] sm:$0xff]
    %v1417 = vld [vmem:[%s1413 + $0x18] sm:$0xff]
    %v1418 = vld [vmem:[%s1413 + $0x20] sm:$0xff]
    %v1419 = vld [vmem:[%s1413 + $0x28] sm:$0xff]
    %v1420 = vld [vmem:[%s1413 + $0x30] sm:$0xff]
    %v1421 = vld [vmem:[%s1413 + $0x38] sm:$0xff]
    %v1422 = vld [vmem:[%s1413 + $0x40] sm:$0xff]
    %v1423 = vld [vmem:[%s1413 + $0x48] sm:$0xff]
    %v1424 = vld [vmem:[%s1413 + $0x50] sm:$0xff]
    %v1425 = vld [vmem:[%s1413 + $0x58] sm:$0xff]
    %v1426 = vld [vmem:[%s1413 + $0x60] sm:$0xff]
    %v1427 = vld [vmem:[%s1413 + $0x68] sm:$0xff]
    %v1428 = vld [vmem:[%s1413 + $0x70] sm:$0xff]
    %v1429 = vld [vmem:[%s1413 + $0x78] sm:$0xff]
    %1430 = vmatprep.subr.mxu0 0.0
    %1431 = vmatpush1.msra.mxu0 %v1429
    %1432 = vmatprep.subr.mxu0 0.0
    %1433 = vmatpush1.msra.mxu0 %v1428
    %1434 = vmatprep.subr.mxu0 0.0
    %1435 = vmatpush1.msra.mxu0 %v1427
    %1436 = vmatprep.subr.mxu0 0.0
    %1437 = vmatpush1.msra.mxu0 %v1426
    %1438 = vmatprep.subr.mxu0 0.0
    %1439 = vmatpush1.msra.mxu0 %v1425
    %1440 = vmatprep.subr.mxu0 0.0
    %1441 = vmatpush1.msra.mxu0 %v1424
    %1442 = vmatprep.subr.mxu0 0.0
    %1443 = vmatpush1.msra.mxu0 %v1423
    %1444 = vmatprep.subr.mxu0 0.0
    %1445 = vmatpush1.msra.mxu0 %v1422
    %1446 = vmatprep.subr.mxu0 0.0
    %1447 = vmatpush1.msra.mxu0 %v1421
    %1448 = vmatprep.subr.mxu0 0.0
    %1449 = vmatpush1.msra.mxu0 %v1420
    %1450 = vmatprep.subr.mxu0 0.0
    %1451 = vmatpush1.msra.mxu0 %v1419
    %1452 = vmatprep.subr.mxu0 0.0
    %1453 = vmatpush1.msra.mxu0 %v1418
    %1454 = vmatprep.subr.mxu0 0.0
    %1455 = vmatpush1.msra.mxu0 %v1417
    %1456 = vmatprep.subr.mxu0 0.0
    %1457 = vmatpush1.msra.mxu0 %v1416
    %1458 = vmatprep.subr.mxu0 0.0
    %1459 = vmatpush1.msra.mxu0 %v1415
    %1460 = vmatprep.subr.mxu0 0.0
    %1461 = vmatpush1.msra.mxu0 %v1414
    %1462 = vmatprep.subr.mxu0 0.0
    %1463 = vmatpush2.msra.mxu0 0.0
    %1464 = vmatprep.subr.mxu0 0.0
    %1465 = vmatpush2.msra.mxu0 0.0
    %1466 = vmatprep.subr.mxu0 0.0
    %1467 = vmatpush2.msra.mxu0 0.0
    %1468 = vmatprep.subr.mxu0 0.0
    %1469 = vmatpush2.msra.mxu0 0.0
    %1470 = vmatprep.subr.mxu0 0.0
    %1471 = vmatpush2.msra.mxu0 0.0
    %1472 = vmatprep.subr.mxu0 0.0
    %1473 = vmatpush2.msra.mxu0 0.0
    %1474 = vmatprep.subr.mxu0 0.0
    %1475 = vmatpush2.msra.mxu0 0.0
    %1476 = vmatprep.subr.mxu0 0.0
    %1477 = vmatpush2.msra.mxu0 0.0
    %1478 = vmatprep.subr.mxu0 0.0
    %1479 = vmatpush2.msra.mxu0 0.0
    %1480 = vmatprep.subr.mxu0 0.0
    %1481 = vmatpush2.msra.mxu0 0.0
    %1482 = vmatprep.subr.mxu0 0.0
    %1483 = vmatpush2.msra.mxu0 0.0
    %1484 = vmatprep.subr.mxu0 0.0
    %1485 = vmatpush2.msra.mxu0 0.0
    %1486 = vmatprep.subr.mxu0 0.0
    %1487 = vmatpush2.msra.mxu0 0.0
    %1488 = vmatprep.subr.mxu0 0.0
    %1489 = vmatpush2.msra.mxu0 0.0
    %1490 = vmatprep.subr.mxu0 0.0
    %1491 = vmatpush2.msra.mxu0 0.0
    %1492 = vmatprep.subr.mxu0 0.0
    %1493 = vmatpush2.msra.mxu0 0.0
    %1494 = vmatprep.mubr.f32.mxu0 0.0
    %1495 = vmatmul.mubr.f32.gmra.mxu0 %v1411
    %v1496 = vpop.f32.mrf.mxu0
    %v1497 = vadd.f32 0.0, %v1496
    %v1498 = vpop.f32.mrf.mxu0
    %1499 = vmatprep.mubr.f32.mxu0 0.0
    %1500 = vmatmul.mubr.f32.gmra.mxu0 %v1412
    %v1501 = vpop.f32.mrf.mxu0
    %v1502 = vadd.f32 0.0, %v1501
    %v1503 = vpop.f32.mrf.mxu0
    %1504 = vdwg.mxu0
    %s1505 = scalar_lea.vmem [#allocation8], 18
    %v1506 = vld [vmem:[%s1505] sm:$0x3]
    %v1507 = vmul.f32 %v1497, %v1497
    %v1508 = vmul.f32 %v1502, %v1502
    %v1509 = vadd.f32 %v1497, %v1502
    %v1510 = vrot.slane %v1509, 4
    %v1511 = vadd.f32 %v1509, %v1510
    %v1512 = vrot.slane %v1511, 2
    %v1513 = vadd.f32 %v1511, %v1512
    %v1514 = vrot.slane %v1513, 1
    %v1515 = vadd.f32 %v1513, %v1514
    %v1516 = vadd.f32 %v1507, %v1508
    %v1517 = vrot.slane %v1516, 4
    %v1518 = vadd.f32 %v1516, %v1517
    %v1519 = vrot.slane %v1518, 2
    %v1520 = vadd.f32 %v1518, %v1519
    %v1521 = vrot.slane %v1520, 1
    %v1522 = vadd.f32 %v1520, %v1521
    %v1523 = vmul.f32 %v1515, %v185
    %v1524 = vmul.f32 %v1522, %v185
    %v1525 = vmul.f32 %v1523, %v1523
    %v1526 = vsub.f32 %v1524, %v1525
    %v1527 = vmax.f32 %v1526, 0.0
    %v1528 = vadd.f32 %v1527, 1e-05
    %v1529 = vrsqrt.pop %v1528
    %v1530 = vmul.f32 %v1506, %v1529
    %v1531 = vmul.f32 %v1523, %v1530
    %v1533 = vrot.slane %v1531, 7
    %v1535 = vsub.f32 %v1506, %v1533
    %v1536 = vlaneseq
    %v1537 = vshrl.u32 %v1536, 7
    %v1538 = vsub.s32 0, %v1537
    %v1539 = vrot.slane %v1530, %v1538
    %v1540 = vmul.f32 %v1497, %v1539
    %v1541 = vmul.f32 %v1502, %v1539
    %v1542 = vlaneseq
    %v1543 = vshrl.u32 %v1542, 7
    %v1544 = vsub.s32 1, %v1543
    %v1545 = vrot.slane %v1535, %v1544
    %v1546 = vadd.f32 %v1540, %v1545
    %v1547 = vadd.f32 %v1541, %v1545
    %s1548 = scalar_lea.vmem [#allocation7], 1408
    %v1549 = vld [vmem:[%s1548] sm:$0xff]
    %v1550 = vld [vmem:[%s1548 + $0x8] sm:$0xff]
    %v1551 = vld [vmem:[%s1548 + $0x10] sm:$0xff]
    %v1552 = vld [vmem:[%s1548 + $0x18] sm:$0xff]
    %v1553 = vld [vmem:[%s1548 + $0x20] sm:$0xff]
    %v1554 = vld [vmem:[%s1548 + $0x28] sm:$0xff]
    %v1555 = vld [vmem:[%s1548 + $0x30] sm:$0xff]
    %v1556 = vld [vmem:[%s1548 + $0x38] sm:$0xff]
    %v1557 = vld [vmem:[%s1548 + $0x40] sm:$0xff]
    %v1558 = vld [vmem:[%s1548 + $0x48] sm:$0xff]
    %v1559 = vld [vmem:[%s1548 + $0x50] sm:$0xff]
    %v1560 = vld [vmem:[%s1548 + $0x58] sm:$0xff]
    %v1561 = vld [vmem:[%s1548 + $0x60] sm:$0xff]
    %v1562 = vld [vmem:[%s1548 + $0x68] sm:$0xff]
    %v1563 = vld [vmem:[%s1548 + $0x70] sm:$0xff]
    %v1564 = vld [vmem:[%s1548 + $0x78] sm:$0xff]
    %1565 = vmatprep.subr.mxu0 0.0
    %1566 = vmatpush1.msra.mxu0 %v1564
    %1567 = vmatprep.subr.mxu0 0.0
    %1568 = vmatpush1.msra.mxu0 %v1563
    %1569 = vmatprep.subr.mxu0 0.0
    %1570 = vmatpush1.msra.mxu0 %v1562
    %1571 = vmatprep.subr.mxu0 0.0
    %1572 = vmatpush1.msra.mxu0 %v1561
    %1573 = vmatprep.subr.mxu0 0.0
    %1574 = vmatpush1.msra.mxu0 %v1560
    %1575 = vmatprep.subr.mxu0 0.0
    %1576 = vmatpush1.msra.mxu0 %v1559
    %1577 = vmatprep.subr.mxu0 0.0
    %1578 = vmatpush1.msra.mxu0 %v1558
    %1579 = vmatprep.subr.mxu0 0.0
    %1580 = vmatpush1.msra.mxu0 %v1557
    %1581 = vmatprep.subr.mxu0 0.0
    %1582 = vmatpush1.msra.mxu0 %v1556
    %1583 = vmatprep.subr.mxu0 0.0
    %1584 = vmatpush1.msra.mxu0 %v1555
    %1585 = vmatprep.subr.mxu0 0.0
    %1586 = vmatpush1.msra.mxu0 %v1554
    %1587 = vmatprep.subr.mxu0 0.0
    %1588 = vmatpush1.msra.mxu0 %v1553
    %1589 = vmatprep.subr.mxu0 0.0
    %1590 = vmatpush1.msra.mxu0 %v1552
    %1591 = vmatprep.subr.mxu0 0.0
    %1592 = vmatpush1.msra.mxu0 %v1551
    %1593 = vmatprep.subr.mxu0 0.0
    %1594 = vmatpush1.msra.mxu0 %v1550
    %1595 = vmatprep.subr.mxu0 0.0
    %1596 = vmatpush1.msra.mxu0 %v1549
    %1597 = vmatprep.subr.mxu0 0.0
    %1598 = vmatpush2.msra.mxu0 0.0
    %1599 = vmatprep.subr.mxu0 0.0
    %1600 = vmatpush2.msra.mxu0 0.0
    %1601 = vmatprep.subr.mxu0 0.0
    %1602 = vmatpush2.msra.mxu0 0.0
    %1603 = vmatprep.subr.mxu0 0.0
    %1604 = vmatpush2.msra.mxu0 0.0
    %1605 = vmatprep.subr.mxu0 0.0
    %1606 = vmatpush2.msra.mxu0 0.0
    %1607 = vmatprep.subr.mxu0 0.0
    %1608 = vmatpush2.msra.mxu0 0.0
    %1609 = vmatprep.subr.mxu0 0.0
    %1610 = vmatpush2.msra.mxu0 0.0
    %1611 = vmatprep.subr.mxu0 0.0
    %1612 = vmatpush2.msra.mxu0 0.0
    %1613 = vmatprep.subr.mxu0 0.0
    %1614 = vmatpush2.msra.mxu0 0.0
    %1615 = vmatprep.subr.mxu0 0.0
    %1616 = vmatpush2.msra.mxu0 0.0
    %1617 = vmatprep.subr.mxu0 0.0
    %1618 = vmatpush2.msra.mxu0 0.0
    %1619 = vmatprep.subr.mxu0 0.0
    %1620 = vmatpush2.msra.mxu0 0.0
    %1621 = vmatprep.subr.mxu0 0.0
    %1622 = vmatpush2.msra.mxu0 0.0
    %1623 = vmatprep.subr.mxu0 0.0
    %1624 = vmatpush2.msra.mxu0 0.0
    %1625 = vmatprep.subr.mxu0 0.0
    %1626 = vmatpush2.msra.mxu0 0.0
    %1627 = vmatprep.subr.mxu0 0.0
    %1628 = vmatpush2.msra.mxu0 0.0
    %1629 = vmatprep.mubr.f32.mxu0 0.0
    %1630 = vmatmul.mubr.f32.gmra.mxu0 %v1546
    %v1631 = vpop.f32.mrf.mxu0
    %v1632 = vadd.f32 0.0, %v1631
    %v1633 = vpop.f32.mrf.mxu0
    %1634 = vmatprep.mubr.f32.mxu0 0.0
    %1635 = vmatmul.mubr.f32.gmra.mxu0 %v1547
    %v1636 = vpop.f32.mrf.mxu0
    %v1637 = vadd.f32 0.0, %v1636
    %v1638 = vpop.f32.mrf.mxu0
    %1639 = vdwg.mxu0
    %s1640 = scalar_lea.vmem [#allocation8], 20
    %v1641 = vld [vmem:[%s1640] sm:$0x3]
    %v1642 = vmul.f32 %v1632, %v1632
    %v1643 = vmul.f32 %v1637, %v1637
    %v1644 = vadd.f32 %v1632, %v1637
    %v1645 = vrot.slane %v1644, 4
    %v1646 = vadd.f32 %v1644, %v1645
    %v1647 = vrot.slane %v1646, 2
    %v1648 = vadd.f32 %v1646, %v1647
    %v1649 = vrot.slane %v1648, 1
    %v1650 = vadd.f32 %v1648, %v1649
    %v1651 = vadd.f32 %v1642, %v1643
    %v1652 = vrot.slane %v1651, 4
    %v1653 = vadd.f32 %v1651, %v1652
    %v1654 = vrot.slane %v1653, 2
    %v1655 = vadd.f32 %v1653, %v1654
    %v1656 = vrot.slane %v1655, 1
    %v1657 = vadd.f32 %v1655, %v1656
    %v1658 = vmul.f32 %v1650, %v185
    %v1659 = vmul.f32 %v1657, %v185
    %v1660 = vmul.f32 %v1658, %v1658
    %v1661 = vsub.f32 %v1659, %v1660
    %v1662 = vmax.f32 %v1661, 0.0
    %v1663 = vadd.f32 %v1662, 1e-05
    %v1664 = vrsqrt.pop %v1663
    %v1665 = vmul.f32 %v1641, %v1664
    %v1666 = vmul.f32 %v1658, %v1665
    %v1668 = vrot.slane %v1666, 7
    %v1670 = vsub.f32 %v1641, %v1668
    %v1671 = vlaneseq
    %v1672 = vshrl.u32 %v1671, 7
    %v1673 = vsub.s32 0, %v1672
    %v1674 = vrot.slane %v1665, %v1673
    %v1675 = vmul.f32 %v1632, %v1674
    %v1676 = vmul.f32 %v1637, %v1674
    %v1677 = vlaneseq
    %v1678 = vshrl.u32 %v1677, 7
    %v1679 = vsub.s32 1, %v1678
    %v1680 = vrot.slane %v1670, %v1679
    %v1681 = vadd.f32 %v1675, %v1680
    %v1682 = vadd.f32 %v1676, %v1680
    %s1683 = scalar_lea.vmem [#allocation7], 1536
    %v1684 = vld [vmem:[%s1683] sm:$0xff]
    %v1685 = vld [vmem:[%s1683 + $0x8] sm:$0xff]
    %v1686 = vld [vmem:[%s1683 + $0x10] sm:$0xff]
    %v1687 = vld [vmem:[%s1683 + $0x18] sm:$0xff]
    %v1688 = vld [vmem:[%s1683 + $0x20] sm:$0xff]
    %v1689 = vld [vmem:[%s1683 + $0x28] sm:$0xff]
    %v1690 = vld [vmem:[%s1683 + $0x30] sm:$0xff]
    %v1691 = vld [vmem:[%s1683 + $0x38] sm:$0xff]
    %v1692 = vld [vmem:[%s1683 + $0x40] sm:$0xff]
    %v1693 = vld [vmem:[%s1683 + $0x48] sm:$0xff]
    %v1694 = vld [vmem:[%s1683 + $0x50] sm:$0xff]
    %v1695 = vld [vmem:[%s1683 + $0x58] sm:$0xff]
    %v1696 = vld [vmem:[%s1683 + $0x60] sm:$0xff]
    %v1697 = vld [vmem:[%s1683 + $0x68] sm:$0xff]
    %v1698 = vld [vmem:[%s1683 + $0x70] sm:$0xff]
    %v1699 = vld [vmem:[%s1683 + $0x78] sm:$0xff]
    %1700 = vmatprep.subr.mxu0 0.0
    %1701 = vmatpush1.msra.mxu0 %v1699
    %1702 = vmatprep.subr.mxu0 0.0
    %1703 = vmatpush1.msra.mxu0 %v1698
    %1704 = vmatprep.subr.mxu0 0.0
    %1705 = vmatpush1.msra.mxu0 %v1697
    %1706 = vmatprep.subr.mxu0 0.0
    %1707 = vmatpush1.msra.mxu0 %v1696
    %1708 = vmatprep.subr.mxu0 0.0
    %1709 = vmatpush1.msra.mxu0 %v1695
    %1710 = vmatprep.subr.mxu0 0.0
    %1711 = vmatpush1.msra.mxu0 %v1694
    %1712 = vmatprep.subr.mxu0 0.0
    %1713 = vmatpush1.msra.mxu0 %v1693
    %1714 = vmatprep.subr.mxu0 0.0
    %1715 = vmatpush1.msra.mxu0 %v1692
    %1716 = vmatprep.subr.mxu0 0.0
    %1717 = vmatpush1.msra.mxu0 %v1691
    %1718 = vmatprep.subr.mxu0 0.0
    %1719 = vmatpush1.msra.mxu0 %v1690
    %1720 = vmatprep.subr.mxu0 0.0
    %1721 = vmatpush1.msra.mxu0 %v1689
    %1722 = vmatprep.subr.mxu0 0.0
    %1723 = vmatpush1.msra.mxu0 %v1688
    %1724 = vmatprep.subr.mxu0 0.0
    %1725 = vmatpush1.msra.mxu0 %v1687
    %1726 = vmatprep.subr.mxu0 0.0
    %1727 = vmatpush1.msra.mxu0 %v1686
    %1728 = vmatprep.subr.mxu0 0.0
    %1729 = vmatpush1.msra.mxu0 %v1685
    %1730 = vmatprep.subr.mxu0 0.0
    %1731 = vmatpush1.msra.mxu0 %v1684
    %1732 = vmatprep.subr.mxu0 0.0
    %1733 = vmatpush2.msra.mxu0 0.0
    %1734 = vmatprep.subr.mxu0 0.0
    %1735 = vmatpush2.msra.mxu0 0.0
    %1736 = vmatprep.subr.mxu0 0.0
    %1737 = vmatpush2.msra.mxu0 0.0
    %1738 = vmatprep.subr.mxu0 0.0
    %1739 = vmatpush2.msra.mxu0 0.0
    %1740 = vmatprep.subr.mxu0 0.0
    %1741 = vmatpush2.msra.mxu0 0.0
    %1742 = vmatprep.subr.mxu0 0.0
    %1743 = vmatpush2.msra.mxu0 0.0
    %1744 = vmatprep.subr.mxu0 0.0
    %1745 = vmatpush2.msra.mxu0 0.0
    %1746 = vmatprep.subr.mxu0 0.0
    %1747 = vmatpush2.msra.mxu0 0.0
    %1748 = vmatprep.subr.mxu0 0.0
    %1749 = vmatpush2.msra.mxu0 0.0
    %1750 = vmatprep.subr.mxu0 0.0
    %1751 = vmatpush2.msra.mxu0 0.0
    %1752 = vmatprep.subr.mxu0 0.0
    %1753 = vmatpush2.msra.mxu0 0.0
    %1754 = vmatprep.subr.mxu0 0.0
    %1755 = vmatpush2.msra.mxu0 0.0
    %1756 = vmatprep.subr.mxu0 0.0
    %1757 = vmatpush2.msra.mxu0 0.0
    %1758 = vmatprep.subr.mxu0 0.0
    %1759 = vmatpush2.msra.mxu0 0.0
    %1760 = vmatprep.subr.mxu0 0.0
    %1761 = vmatpush2.msra.mxu0 0.0
    %1762 = vmatprep.subr.mxu0 0.0
    %1763 = vmatpush2.msra.mxu0 0.0
    %1764 = vmatprep.mubr.f32.mxu0 0.0
    %1765 = vmatmul.mubr.f32.gmra.mxu0 %v1681
    %v1766 = vpop.f32.mrf.mxu0
    %v1767 = vadd.f32 0.0, %v1766
    %v1768 = vpop.f32.mrf.mxu0
    %1769 = vmatprep.mubr.f32.mxu0 0.0
    %1770 = vmatmul.mubr.f32.gmra.mxu0 %v1682
    %v1771 = vpop.f32.mrf.mxu0
    %v1772 = vadd.f32 0.0, %v1771
    %v1773 = vpop.f32.mrf.mxu0
    %1774 = vdwg.mxu0
    %s1775 = scalar_lea.vmem [#allocation8], 22
    %v1776 = vld [vmem:[%s1775] sm:$0x3]
    %v1777 = vmul.f32 %v1767, %v1767
    %v1778 = vmul.f32 %v1772, %v1772
    %v1779 = vadd.f32 %v1767, %v1772
    %v1780 = vrot.slane %v1779, 4
    %v1781 = vadd.f32 %v1779, %v1780
    %v1782 = vrot.slane %v1781, 2
    %v1783 = vadd.f32 %v1781, %v1782
    %v1784 = vrot.slane %v1783, 1
    %v1785 = vadd.f32 %v1783, %v1784
    %v1786 = vadd.f32 %v1777, %v1778
    %v1787 = vrot.slane %v1786, 4
    %v1788 = vadd.f32 %v1786, %v1787
    %v1789 = vrot.slane %v1788, 2
    %v1790 = vadd.f32 %v1788, %v1789
    %v1791 = vrot.slane %v1790, 1
    %v1792 = vadd.f32 %v1790, %v1791
    %v1793 = vmul.f32 %v1785, %v185
    %v1794 = vmul.f32 %v1792, %v185
    %v1795 = vmul.f32 %v1793, %v1793
    %v1796 = vsub.f32 %v1794, %v1795
    %v1797 = vmax.f32 %v1796, 0.0
    %v1798 = vadd.f32 %v1797, 1e-05
    %v1799 = vrsqrt.pop %v1798
    %v1800 = vmul.f32 %v1776, %v1799
    %v1801 = vmul.f32 %v1793, %v1800
    %v1803 = vrot.slane %v1801, 7
    %v1805 = vsub.f32 %v1776, %v1803
    %v1806 = vlaneseq
    %v1807 = vshrl.u32 %v1806, 7
    %v1808 = vsub.s32 0, %v1807
    %v1809 = vrot.slane %v1800, %v1808
    %v1810 = vmul.f32 %v1767, %v1809
    %v1811 = vmul.f32 %v1772, %v1809
    %v1812 = vlaneseq
    %v1813 = vshrl.u32 %v1812, 7
    %v1814 = vsub.s32 1, %v1813
    %v1815 = vrot.slane %v1805, %v1814
    %v1816 = vadd.f32 %v1810, %v1815
    %v1817 = vadd.f32 %v1811, %v1815
    %s1818 = scalar_lea.vmem [#allocation7], 1664
    %v1819 = vld [vmem:[%s1818] sm:$0xff]
    %v1820 = vld [vmem:[%s1818 + $0x8] sm:$0xff]
    %v1821 = vld [vmem:[%s1818 + $0x10] sm:$0xff]
    %v1822 = vld [vmem:[%s1818 + $0x18] sm:$0xff]
    %v1823 = vld [vmem:[%s1818 + $0x20] sm:$0xff]
    %v1824 = vld [vmem:[%s1818 + $0x28] sm:$0xff]
    %v1825 = vld [vmem:[%s1818 + $0x30] sm:$0xff]
    %v1826 = vld [vmem:[%s1818 + $0x38] sm:$0xff]
    %v1827 = vld [vmem:[%s1818 + $0x40] sm:$0xff]
    %v1828 = vld [vmem:[%s1818 + $0x48] sm:$0xff]
    %v1829 = vld [vmem:[%s1818 + $0x50] sm:$0xff]
    %v1830 = vld [vmem:[%s1818 + $0x58] sm:$0xff]
    %v1831 = vld [vmem:[%s1818 + $0x60] sm:$0xff]
    %v1832 = vld [vmem:[%s1818 + $0x68] sm:$0xff]
    %v1833 = vld [vmem:[%s1818 + $0x70] sm:$0xff]
    %v1834 = vld [vmem:[%s1818 + $0x78] sm:$0xff]
    %1835 = vmatprep.subr.mxu0 0.0
    %1836 = vmatpush1.msra.mxu0 %v1834
    %1837 = vmatprep.subr.mxu0 0.0
    %1838 = vmatpush1.msra.mxu0 %v1833
    %1839 = vmatprep.subr.mxu0 0.0
    %1840 = vmatpush1.msra.mxu0 %v1832
    %1841 = vmatprep.subr.mxu0 0.0
    %1842 = vmatpush1.msra.mxu0 %v1831
    %1843 = vmatprep.subr.mxu0 0.0
    %1844 = vmatpush1.msra.mxu0 %v1830
    %1845 = vmatprep.subr.mxu0 0.0
    %1846 = vmatpush1.msra.mxu0 %v1829
    %1847 = vmatprep.subr.mxu0 0.0
    %1848 = vmatpush1.msra.mxu0 %v1828
    %1849 = vmatprep.subr.mxu0 0.0
    %1850 = vmatpush1.msra.mxu0 %v1827
    %1851 = vmatprep.subr.mxu0 0.0
    %1852 = vmatpush1.msra.mxu0 %v1826
    %1853 = vmatprep.subr.mxu0 0.0
    %1854 = vmatpush1.msra.mxu0 %v1825
    %1855 = vmatprep.subr.mxu0 0.0
    %1856 = vmatpush1.msra.mxu0 %v1824
    %1857 = vmatprep.subr.mxu0 0.0
    %1858 = vmatpush1.msra.mxu0 %v1823
    %1859 = vmatprep.subr.mxu0 0.0
    %1860 = vmatpush1.msra.mxu0 %v1822
    %1861 = vmatprep.subr.mxu0 0.0
    %1862 = vmatpush1.msra.mxu0 %v1821
    %1863 = vmatprep.subr.mxu0 0.0
    %1864 = vmatpush1.msra.mxu0 %v1820
    %1865 = vmatprep.subr.mxu0 0.0
    %1866 = vmatpush1.msra.mxu0 %v1819
    %1867 = vmatprep.subr.mxu0 0.0
    %1868 = vmatpush2.msra.mxu0 0.0
    %1869 = vmatprep.subr.mxu0 0.0
    %1870 = vmatpush2.msra.mxu0 0.0
    %1871 = vmatprep.subr.mxu0 0.0
    %1872 = vmatpush2.msra.mxu0 0.0
    %1873 = vmatprep.subr.mxu0 0.0
    %1874 = vmatpush2.msra.mxu0 0.0
    %1875 = vmatprep.subr.mxu0 0.0
    %1876 = vmatpush2.msra.mxu0 0.0
    %1877 = vmatprep.subr.mxu0 0.0
    %1878 = vmatpush2.msra.mxu0 0.0
    %1879 = vmatprep.subr.mxu0 0.0
    %1880 = vmatpush2.msra.mxu0 0.0
    %1881 = vmatprep.subr.mxu0 0.0
    %1882 = vmatpush2.msra.mxu0 0.0
    %1883 = vmatprep.subr.mxu0 0.0
    %1884 = vmatpush2.msra.mxu0 0.0
    %1885 = vmatprep.subr.mxu0 0.0
    %1886 = vmatpush2.msra.mxu0 0.0
    %1887 = vmatprep.subr.mxu0 0.0
    %1888 = vmatpush2.msra.mxu0 0.0
    %1889 = vmatprep.subr.mxu0 0.0
    %1890 = vmatpush2.msra.mxu0 0.0
    %1891 = vmatprep.subr.mxu0 0.0
    %1892 = vmatpush2.msra.mxu0 0.0
    %1893 = vmatprep.subr.mxu0 0.0
    %1894 = vmatpush2.msra.mxu0 0.0
    %1895 = vmatprep.subr.mxu0 0.0
    %1896 = vmatpush2.msra.mxu0 0.0
    %1897 = vmatprep.subr.mxu0 0.0
    %1898 = vmatpush2.msra.mxu0 0.0
    %1899 = vmatprep.mubr.f32.mxu0 0.0
    %1900 = vmatmul.mubr.f32.gmra.mxu0 %v1816
    %v1901 = vpop.f32.mrf.mxu0
    %v1902 = vadd.f32 0.0, %v1901
    %v1903 = vpop.f32.mrf.mxu0
    %1904 = vmatprep.mubr.f32.mxu0 0.0
    %1905 = vmatmul.mubr.f32.gmra.mxu0 %v1817
    %v1906 = vpop.f32.mrf.mxu0
    %v1907 = vadd.f32 0.0, %v1906
    %v1908 = vpop.f32.mrf.mxu0
    %1909 = vdwg.mxu0
    %s1910 = scalar_lea.vmem [#allocation8], 24
    %v1911 = vld [vmem:[%s1910] sm:$0x3]
    %v1912 = vmul.f32 %v1902, %v1902
    %v1913 = vmul.f32 %v1907, %v1907
    %v1914 = vadd.f32 %v1902, %v1907
    %v1915 = vrot.slane %v1914, 4
    %v1916 = vadd.f32 %v1914, %v1915
    %v1917 = vrot.slane %v1916, 2
    %v1918 = vadd.f32 %v1916, %v1917
    %v1919 = vrot.slane %v1918, 1
    %v1920 = vadd.f32 %v1918, %v1919
    %v1921 = vadd.f32 %v1912, %v1913
    %v1922 = vrot.slane %v1921, 4
    %v1923 = vadd.f32 %v1921, %v1922
    %v1924 = vrot.slane %v1923, 2
    %v1925 = vadd.f32 %v1923, %v1924
    %v1926 = vrot.slane %v1925, 1
    %v1927 = vadd.f32 %v1925, %v1926
    %v1928 = vmul.f32 %v1920, %v185
    %v1929 = vmul.f32 %v1927, %v185
    %v1930 = vmul.f32 %v1928, %v1928
    %v1931 = vsub.f32 %v1929, %v1930
    %v1932 = vmax.f32 %v1931, 0.0
    %v1933 = vadd.f32 %v1932, 1e-05
    %v1934 = vrsqrt.pop %v1933
    %v1935 = vmul.f32 %v1911, %v1934
    %v1936 = vmul.f32 %v1928, %v1935
    %v1938 = vrot.slane %v1936, 7
    %v1940 = vsub.f32 %v1911, %v1938
    %v1941 = vlaneseq
    %v1942 = vshrl.u32 %v1941, 7
    %v1943 = vsub.s32 0, %v1942
    %v1944 = vrot.slane %v1935, %v1943
    %v1945 = vmul.f32 %v1902, %v1944
    %v1946 = vmul.f32 %v1907, %v1944
    %v1947 = vlaneseq
    %v1948 = vshrl.u32 %v1947, 7
    %v1949 = vsub.s32 1, %v1948
    %v1950 = vrot.slane %v1940, %v1949
    %v1951 = vadd.f32 %v1945, %v1950
    %v1952 = vadd.f32 %v1946, %v1950
    %s1953 = scalar_lea.vmem [#allocation7], 1792
    %v1954 = vld [vmem:[%s1953] sm:$0xff]
    %v1955 = vld [vmem:[%s1953 + $0x8] sm:$0xff]
    %v1956 = vld [vmem:[%s1953 + $0x10] sm:$0xff]
    %v1957 = vld [vmem:[%s1953 + $0x18] sm:$0xff]
    %v1958 = vld [vmem:[%s1953 + $0x20] sm:$0xff]
    %v1959 = vld [vmem:[%s1953 + $0x28] sm:$0xff]
    %v1960 = vld [vmem:[%s1953 + $0x30] sm:$0xff]
    %v1961 = vld [vmem:[%s1953 + $0x38] sm:$0xff]
    %v1962 = vld [vmem:[%s1953 + $0x40] sm:$0xff]
    %v1963 = vld [vmem:[%s1953 + $0x48] sm:$0xff]
    %v1964 = vld [vmem:[%s1953 + $0x50] sm:$0xff]
    %v1965 = vld [vmem:[%s1953 + $0x58] sm:$0xff]
    %v1966 = vld [vmem:[%s1953 + $0x60] sm:$0xff]
    %v1967 = vld [vmem:[%s1953 + $0x68] sm:$0xff]
    %v1968 = vld [vmem:[%s1953 + $0x70] sm:$0xff]
    %v1969 = vld [vmem:[%s1953 + $0x78] sm:$0xff]
    %1970 = vmatprep.subr.mxu0 0.0
    %1971 = vmatpush1.msra.mxu0 %v1969
    %1972 = vmatprep.subr.mxu0 0.0
    %1973 = vmatpush1.msra.mxu0 %v1968
    %1974 = vmatprep.subr.mxu0 0.0
    %1975 = vmatpush1.msra.mxu0 %v1967
    %1976 = vmatprep.subr.mxu0 0.0
    %1977 = vmatpush1.msra.mxu0 %v1966
    %1978 = vmatprep.subr.mxu0 0.0
    %1979 = vmatpush1.msra.mxu0 %v1965
    %1980 = vmatprep.subr.mxu0 0.0
    %1981 = vmatpush1.msra.mxu0 %v1964
    %1982 = vmatprep.subr.mxu0 0.0
    %1983 = vmatpush1.msra.mxu0 %v1963
    %1984 = vmatprep.subr.mxu0 0.0
    %1985 = vmatpush1.msra.mxu0 %v1962
    %1986 = vmatprep.subr.mxu0 0.0
    %1987 = vmatpush1.msra.mxu0 %v1961
    %1988 = vmatprep.subr.mxu0 0.0
    %1989 = vmatpush1.msra.mxu0 %v1960
    %1990 = vmatprep.subr.mxu0 0.0
    %1991 = vmatpush1.msra.mxu0 %v1959
    %1992 = vmatprep.subr.mxu0 0.0
    %1993 = vmatpush1.msra.mxu0 %v1958
    %1994 = vmatprep.subr.mxu0 0.0
    %1995 = vmatpush1.msra.mxu0 %v1957
    %1996 = vmatprep.subr.mxu0 0.0
    %1997 = vmatpush1.msra.mxu0 %v1956
    %1998 = vmatprep.subr.mxu0 0.0
    %1999 = vmatpush1.msra.mxu0 %v1955
    %2000 = vmatprep.subr.mxu0 0.0
    %2001 = vmatpush1.msra.mxu0 %v1954
    %2002 = vmatprep.subr.mxu0 0.0
    %2003 = vmatpush2.msra.mxu0 0.0
    %2004 = vmatprep.subr.mxu0 0.0
    %2005 = vmatpush2.msra.mxu0 0.0
    %2006 = vmatprep.subr.mxu0 0.0
    %2007 = vmatpush2.msra.mxu0 0.0
    %2008 = vmatprep.subr.mxu0 0.0
    %2009 = vmatpush2.msra.mxu0 0.0
    %2010 = vmatprep.subr.mxu0 0.0
    %2011 = vmatpush2.msra.mxu0 0.0
    %2012 = vmatprep.subr.mxu0 0.0
    %2013 = vmatpush2.msra.mxu0 0.0
    %2014 = vmatprep.subr.mxu0 0.0
    %2015 = vmatpush2.msra.mxu0 0.0
    %2016 = vmatprep.subr.mxu0 0.0
    %2017 = vmatpush2.msra.mxu0 0.0
    %2018 = vmatprep.subr.mxu0 0.0
    %2019 = vmatpush2.msra.mxu0 0.0
    %2020 = vmatprep.subr.mxu0 0.0
    %2021 = vmatpush2.msra.mxu0 0.0
    %2022 = vmatprep.subr.mxu0 0.0
    %2023 = vmatpush2.msra.mxu0 0.0
    %2024 = vmatprep.subr.mxu0 0.0
    %2025 = vmatpush2.msra.mxu0 0.0
    %2026 = vmatprep.subr.mxu0 0.0
    %2027 = vmatpush2.msra.mxu0 0.0
    %2028 = vmatprep.subr.mxu0 0.0
    %2029 = vmatpush2.msra.mxu0 0.0
    %2030 = vmatprep.subr.mxu0 0.0
    %2031 = vmatpush2.msra.mxu0 0.0
    %2032 = vmatprep.subr.mxu0 0.0
    %2033 = vmatpush2.msra.mxu0 0.0
    %2034 = vmatprep.mubr.f32.mxu0 0.0
    %2035 = vmatmul.mubr.f32.gmra.mxu0 %v1951
    %v2036 = vpop.f32.mrf.mxu0
    %v2037 = vadd.f32 0.0, %v2036
    %v2038 = vpop.f32.mrf.mxu0
    %2039 = vmatprep.mubr.f32.mxu0 0.0
    %2040 = vmatmul.mubr.f32.gmra.mxu0 %v1952
    %v2041 = vpop.f32.mrf.mxu0
    %v2042 = vadd.f32 0.0, %v2041
    %v2043 = vpop.f32.mrf.mxu0
    %2044 = vdwg.mxu0
    %s2045 = scalar_lea.vmem [#allocation8], 26
    %v2046 = vld [vmem:[%s2045] sm:$0x3]
    %v2047 = vmul.f32 %v2037, %v2037
    %v2048 = vmul.f32 %v2042, %v2042
    %v2049 = vadd.f32 %v2037, %v2042
    %v2050 = vrot.slane %v2049, 4
    %v2051 = vadd.f32 %v2049, %v2050
    %v2052 = vrot.slane %v2051, 2
    %v2053 = vadd.f32 %v2051, %v2052
    %v2054 = vrot.slane %v2053, 1
    %v2055 = vadd.f32 %v2053, %v2054
    %v2056 = vadd.f32 %v2047, %v2048
    %v2057 = vrot.slane %v2056, 4
    %v2058 = vadd.f32 %v2056, %v2057
    %v2059 = vrot.slane %v2058, 2
    %v2060 = vadd.f32 %v2058, %v2059
    %v2061 = vrot.slane %v2060, 1
    %v2062 = vadd.f32 %v2060, %v2061
    %v2063 = vmul.f32 %v2055, %v185
    %v2064 = vmul.f32 %v2062, %v185
    %v2065 = vmul.f32 %v2063, %v2063
    %v2066 = vsub.f32 %v2064, %v2065
    %v2067 = vmax.f32 %v2066, 0.0
    %v2068 = vadd.f32 %v2067, 1e-05
    %v2069 = vrsqrt.pop %v2068
    %v2070 = vmul.f32 %v2046, %v2069
    %v2071 = vmul.f32 %v2063, %v2070
    %v2073 = vrot.slane %v2071, 7
    %v2075 = vsub.f32 %v2046, %v2073
    %v2076 = vlaneseq
    %v2077 = vshrl.u32 %v2076, 7
    %v2078 = vsub.s32 0, %v2077
    %v2079 = vrot.slane %v2070, %v2078
    %v2080 = vmul.f32 %v2037, %v2079
    %v2081 = vmul.f32 %v2042, %v2079
    %v2082 = vlaneseq
    %v2083 = vshrl.u32 %v2082, 7
    %v2084 = vsub.s32 1, %v2083
    %v2085 = vrot.slane %v2075, %v2084
    %v2086 = vadd.f32 %v2080, %v2085
    %v2087 = vadd.f32 %v2081, %v2085
    %s2088 = scalar_lea.vmem [#allocation7], 1920
    %v2089 = vld [vmem:[%s2088] sm:$0xff]
    %v2090 = vld [vmem:[%s2088 + $0x8] sm:$0xff]
    %v2091 = vld [vmem:[%s2088 + $0x10] sm:$0xff]
    %v2092 = vld [vmem:[%s2088 + $0x18] sm:$0xff]
    %v2093 = vld [vmem:[%s2088 + $0x20] sm:$0xff]
    %v2094 = vld [vmem:[%s2088 + $0x28] sm:$0xff]
    %v2095 = vld [vmem:[%s2088 + $0x30] sm:$0xff]
    %v2096 = vld [vmem:[%s2088 + $0x38] sm:$0xff]
    %v2097 = vld [vmem:[%s2088 + $0x40] sm:$0xff]
    %v2098 = vld [vmem:[%s2088 + $0x48] sm:$0xff]
    %v2099 = vld [vmem:[%s2088 + $0x50] sm:$0xff]
    %v2100 = vld [vmem:[%s2088 + $0x58] sm:$0xff]
    %v2101 = vld [vmem:[%s2088 + $0x60] sm:$0xff]
    %v2102 = vld [vmem:[%s2088 + $0x68] sm:$0xff]
    %v2103 = vld [vmem:[%s2088 + $0x70] sm:$0xff]
    %v2104 = vld [vmem:[%s2088 + $0x78] sm:$0xff]
    %2105 = vmatprep.subr.mxu0 0.0
    %2106 = vmatpush1.msra.mxu0 %v2104
    %2107 = vmatprep.subr.mxu0 0.0
    %2108 = vmatpush1.msra.mxu0 %v2103
    %2109 = vmatprep.subr.mxu0 0.0
    %2110 = vmatpush1.msra.mxu0 %v2102
    %2111 = vmatprep.subr.mxu0 0.0
    %2112 = vmatpush1.msra.mxu0 %v2101
    %2113 = vmatprep.subr.mxu0 0.0
    %2114 = vmatpush1.msra.mxu0 %v2100
    %2115 = vmatprep.subr.mxu0 0.0
    %2116 = vmatpush1.msra.mxu0 %v2099
    %2117 = vmatprep.subr.mxu0 0.0
    %2118 = vmatpush1.msra.mxu0 %v2098
    %2119 = vmatprep.subr.mxu0 0.0
    %2120 = vmatpush1.msra.mxu0 %v2097
    %2121 = vmatprep.subr.mxu0 0.0
    %2122 = vmatpush1.msra.mxu0 %v2096
    %2123 = vmatprep.subr.mxu0 0.0
    %2124 = vmatpush1.msra.mxu0 %v2095
    %2125 = vmatprep.subr.mxu0 0.0
    %2126 = vmatpush1.msra.mxu0 %v2094
    %2127 = vmatprep.subr.mxu0 0.0
    %2128 = vmatpush1.msra.mxu0 %v2093
    %2129 = vmatprep.subr.mxu0 0.0
    %2130 = vmatpush1.msra.mxu0 %v2092
    %2131 = vmatprep.subr.mxu0 0.0
    %2132 = vmatpush1.msra.mxu0 %v2091
    %2133 = vmatprep.subr.mxu0 0.0
    %2134 = vmatpush1.msra.mxu0 %v2090
    %2135 = vmatprep.subr.mxu0 0.0
    %2136 = vmatpush1.msra.mxu0 %v2089
    %2137 = vmatprep.subr.mxu0 0.0
    %2138 = vmatpush2.msra.mxu0 0.0
    %2139 = vmatprep.subr.mxu0 0.0
    %2140 = vmatpush2.msra.mxu0 0.0
    %2141 = vmatprep.subr.mxu0 0.0
    %2142 = vmatpush2.msra.mxu0 0.0
    %2143 = vmatprep.subr.mxu0 0.0
    %2144 = vmatpush2.msra.mxu0 0.0
    %2145 = vmatprep.subr.mxu0 0.0
    %2146 = vmatpush2.msra.mxu0 0.0
    %2147 = vmatprep.subr.mxu0 0.0
    %2148 = vmatpush2.msra.mxu0 0.0
    %2149 = vmatprep.subr.mxu0 0.0
    %2150 = vmatpush2.msra.mxu0 0.0
    %2151 = vmatprep.subr.mxu0 0.0
    %2152 = vmatpush2.msra.mxu0 0.0
    %2153 = vmatprep.subr.mxu0 0.0
    %2154 = vmatpush2.msra.mxu0 0.0
    %2155 = vmatprep.subr.mxu0 0.0
    %2156 = vmatpush2.msra.mxu0 0.0
    %2157 = vmatprep.subr.mxu0 0.0
    %2158 = vmatpush2.msra.mxu0 0.0
    %2159 = vmatprep.subr.mxu0 0.0
    %2160 = vmatpush2.msra.mxu0 0.0
    %2161 = vmatprep.subr.mxu0 0.0
    %2162 = vmatpush2.msra.mxu0 0.0
    %2163 = vmatprep.subr.mxu0 0.0
    %2164 = vmatpush2.msra.mxu0 0.0
    %2165 = vmatprep.subr.mxu0 0.0
    %2166 = vmatpush2.msra.mxu0 0.0
    %2167 = vmatprep.subr.mxu0 0.0
    %2168 = vmatpush2.msra.mxu0 0.0
    %2169 = vmatprep.mubr.f32.mxu0 0.0
    %2170 = vmatmul.mubr.f32.gmra.mxu0 %v2086
    %v2171 = vpop.f32.mrf.mxu0
    %v2172 = vadd.f32 0.0, %v2171
    %v2173 = vpop.f32.mrf.mxu0
    %2174 = vmatprep.mubr.f32.mxu0 0.0
    %2175 = vmatmul.mubr.f32.gmra.mxu0 %v2087
    %v2176 = vpop.f32.mrf.mxu0
    %v2177 = vadd.f32 0.0, %v2176
    %v2178 = vpop.f32.mrf.mxu0
    %2179 = vdwg.mxu0
    %s2180 = scalar_lea.vmem [#allocation8], 28
    %v2181 = vld [vmem:[%s2180] sm:$0x3]
    %v2182 = vmul.f32 %v2172, %v2172
    %v2183 = vmul.f32 %v2177, %v2177
    %v2184 = vadd.f32 %v2172, %v2177
    %v2185 = vrot.slane %v2184, 4
    %v2186 = vadd.f32 %v2184, %v2185
    %v2187 = vrot.slane %v2186, 2
    %v2188 = vadd.f32 %v2186, %v2187
    %v2189 = vrot.slane %v2188, 1
    %v2190 = vadd.f32 %v2188, %v2189
    %v2191 = vadd.f32 %v2182, %v2183
    %v2192 = vrot.slane %v2191, 4
    %v2193 = vadd.f32 %v2191, %v2192
    %v2194 = vrot.slane %v2193, 2
    %v2195 = vadd.f32 %v2193, %v2194
    %v2196 = vrot.slane %v2195, 1
    %v2197 = vadd.f32 %v2195, %v2196
    %v2198 = vmul.f32 %v2190, %v185
    %v2199 = vmul.f32 %v2197, %v185
    %v2200 = vmul.f32 %v2198, %v2198
    %v2201 = vsub.f32 %v2199, %v2200
    %v2202 = vmax.f32 %v2201, 0.0
    %v2203 = vadd.f32 %v2202, 1e-05
    %v2204 = vrsqrt.pop %v2203
    %v2205 = vmul.f32 %v2181, %v2204
    %v2206 = vmul.f32 %v2198, %v2205
    %v2208 = vrot.slane %v2206, 7
    %v2210 = vsub.f32 %v2181, %v2208
    %v2211 = vlaneseq
    %v2212 = vshrl.u32 %v2211, 7
    %v2213 = vsub.s32 0, %v2212
    %v2214 = vrot.slane %v2205, %v2213
    %v2215 = vmul.f32 %v2172, %v2214
    %v2216 = vmul.f32 %v2177, %v2214
    %v2217 = vlaneseq
    %v2218 = vshrl.u32 %v2217, 7
    %v2219 = vsub.s32 1, %v2218
    %v2220 = vrot.slane %v2210, %v2219
    %v2221 = vadd.f32 %v2215, %v2220
    %v2222 = vadd.f32 %v2216, %v2220
    %2223 = vst [vmem:[#allocation10] sm:$0xff] %v2221
    %2224 = vst [vmem:[#allocation10 + $0x8] sm:$0xff] %v2222
    // Predicated region
    $region34: #{tpu_custom_call.1} parent=1 // pred_check
      _
    $region35: #{tpu_custom_call.1} parent=1 // pred_check_branch
      %2226 = sbr.rel (0) target = $region37
    $region36: #{tpu_custom_call.1} parent=1 // pred_region
      %s2228 = ssub.s32 512, 512
      %2229 = vsyncadd [#allocation4], %s2228
      %s2230 = sshll.u32 [#allocation10], 4
      %s2231 = int_to_ptr.vmem [resolvable:$true] %s2230
      %2236 = dma.vmem_to_hbm [thread:$0]  %s2231, 512, %s4, [#allocation4], 128, 128, 8
    $region37: #{tpu_custom_call.1} parent=1 // pred_fallthru
      _
    // Predicated region
    $region38: #{tpu_custom_call.1} parent=1 // pred_check
      _
    $region39: #{tpu_custom_call.1} parent=1 // pred_check_branch
      %2238 = sbr.rel (0) target = $region41
    $region40: #{tpu_custom_call.1} parent=1 // pred_region
      %2239 = dma.done [#allocation4], 512
    $region41: #{tpu_custom_call.1} parent=1 // pred_fallthru
      _
    %2240 = vsyncpa [#allocation3], 1
    %2241 = vsyncpa [#allocation6], 1
    %2242 = vsyncpa [#allocation9], 1
    %2243 = vsyncpa [#allocation4], 1

</llo_original>
